<compile_context>
chip_gen: v7x
topology: tpu7x:2x2x1
jax: 0.10.0
libtpu: 0.0.40
codegen_flags: <defaults>
</compile_context>

<pallas_src>
import functools

import jax
import jax.numpy as jnp
from jax import lax
from jax.experimental import pallas as pl
from jax.experimental.pallas import tpu as pltpu

LN_EPS = 1e-5


def _gelu_exact(x):
    # PyTorch nn.GELU() default: exact erf-based GELU (kept in f32).
    return 0.5 * x * (1.0 + lax.erf(x * 0.7071067811865476))


def _layernorm(x, gamma, beta):
    mu = jnp.mean(x, axis=-1, keepdims=True)
    xc = x - mu
    var = jnp.mean(xc * xc, axis=-1, keepdims=True)
    return xc * lax.rsqrt(var + LN_EPS) * gamma + beta


def mixer_kernel(x_ref,
                 g1_ref, be1_ref,           # LayerNorm1 gamma/beta       (1, D)  f32
                 w1_ref, b1_ref,            # token fc1: (Td, S) bf16, (Td, 1) f32
                 w2_ref, b2_ref,            # token fc2: (S, Td) bf16, (S, 1)  f32
                 g2_ref, be2_ref,           # LayerNorm2 gamma/beta       (1, D)  f32
                 w3_ref, b3_ref,            # channel fc1 (transposed): (D, Cd) bf16, (1, Cd) f32
                 w4_ref, b4_ref,            # channel fc2 (transposed): (Cd, D) bf16, (1, D)  f32
                 o_ref,
                 *, cd_chunks):
    bt, S, D = x_ref.shape
    Td = w1_ref.shape[0]
    Cd = w3_ref.shape[1]

    x = x_ref[...]                                        # (bt, S, D) f32

    # ---- token-mixing branch:  per batch  W2 @ gelu(W1 @ LN1(x) + b1) + b2 ---
    xn = _layernorm(x, g1_ref[...], be1_ref[...])         # (bt, S, D) f32

    if D % 128 == 0:
        # Fast path: fold the batch into the matmul N dimension (N = bt*D).
        # Relayouts only touch the leading dims (lane dim stays D), reshapes
        # are lane-aligned (D % 128 == 0).
        xn2d = jnp.swapaxes(xn, 0, 1).reshape(S, bt * D).astype(jnp.bfloat16)
        h = jnp.dot(w1_ref[...], xn2d,
                    preferred_element_type=jnp.float32)                # (Td, bt*D)
        h = _gelu_exact(h + b1_ref[...]).astype(jnp.bfloat16)          # bias per Td row
        u = jnp.dot(w2_ref[...], h,
                    preferred_element_type=jnp.float32) + b2_ref[...]  # (S, bt*D)
        u = jnp.swapaxes(u.reshape(S, bt, D), 0, 1)                    # (bt, S, D)
    else:
        # Lane-safe fallback for unaligned (tiny) D: batched einsum.
        xn_bf = xn.astype(jnp.bfloat16)
        w1b = jnp.broadcast_to(w1_ref[...][None], (bt, Td, S))
        h = jnp.einsum("bts,bsd->btd", w1b, xn_bf,
                       preferred_element_type=jnp.float32)
        h = _gelu_exact(h + b1_ref[...][None]).astype(jnp.bfloat16)
        w2b = jnp.broadcast_to(w2_ref[...][None], (bt, S, Td))
        u = jnp.einsum("bst,btd->bsd", w2b, h,
                       preferred_element_type=jnp.float32)
        u = u + b2_ref[...][None]

    y1 = x + u                                            # residual, f32

    # ---- channel-mixing branch on the flattened (bt*S, D) slab ---------------
    y2 = y1.reshape(bt * S, D)
    yn = _layernorm(y2, g2_ref[...], be2_ref[...]).astype(jnp.bfloat16)

    if cd_chunks == 1:
        h2 = jnp.dot(yn, w3_ref[...],
                     preferred_element_type=jnp.float32) + b3_ref[...]    # (bt*S, Cd)
        h2 = _gelu_exact(h2).astype(jnp.bfloat16)
        v = jnp.dot(h2, w4_ref[...], preferred_element_type=jnp.float32)  # (bt*S, D)
    else:
        # Tile Cd so only one (bt*S, tcd) hidden chunk is live at a time.
        tcd = Cd // cd_chunks

        def chunk(c, v):
            off = pl.multiple_of(c * tcd, 256)
            h2c = jnp.dot(yn, w3_ref[:, pl.ds(off, tcd)],
                          preferred_element_type=jnp.float32) + b3_ref[:, pl.ds(off, tcd)]
            h2c = _gelu_exact(h2c).astype(jnp.bfloat16)
            return v + jnp.dot(h2c, w4_ref[pl.ds(off, tcd), :],
                               preferred_element_type=jnp.float32)

        v = lax.fori_loop(0, cd_chunks, chunk,
                          jnp.zeros((bt * S, D), jnp.float32))

    v = v + b4_ref[...]
    o_ref[...] = (y2 + v).reshape(bt, S, D).astype(o_ref.dtype)


# --------------------------------------------------------------------------- #
# Wrapper: VMEM-budget-driven block sizing + pallas_call                       #
# --------------------------------------------------------------------------- #

def _tpu_vmem_capacity_bytes():
    try:
        return int(pltpu.get_tpu_info().vmem_capacity_bytes)
    except Exception:
        return 128 << 20


def _vmem_budget_bytes():
    cap = _tpu_vmem_capacity_bytes()
    if cap <= (64 << 20):            # v7x-class: 64 MiB per TensorCore
        budget = 52 << 20            # leave headroom for Mosaic internal scratch
    else:                            # v5e / v6e: 128 MiB
        budget = 100 << 20
    return max(16 << 20, min(budget, cap - (8 << 20)))


def _pick_cd_chunks(Cd, target=1024):
    """Split the channel hidden dim into 256-aligned chunks of width <= target."""
    c = 1
    while (Cd // c > target and (Cd // c) % 2 == 0 and (Cd // (2 * c)) % 256 == 0):
        c *= 2
    return c


def _vmem_estimate(bt, S, D, Td, Cd, tcd, weight_bufs):
    f32, bf16 = 4, 2
    weights = ((Td * S + S * Td + D * Cd + Cd * D) * bf16
               + (Td + S + Cd + 5 * D) * f32) * weight_bufs
    io = 2 * 2 * bt * S * D * f32                 # x & out blocks, double-buffered
    temps = (bt * S * D * 26                      # f32/bf16 (bt,S,D) slabs
             + bt * Td * D * 6                    # token hidden (f32 + bf16)
             + bt * S * tcd * 6)                  # channel hidden chunk (f32 + bf16)
    return weights + io + temps + (2 << 20)


def _pick_block_b(B, fits_fn, max_block=32):
    divisors = [d for d in range(1, B + 1) if B % d == 0 and d <= max_block]
    good = [d for d in divisors if fits_fn(d)] or [1]
    # Prefer an even number of grid steps: the batch axis is "parallel" and v7x
    # shards it across 2 TensorCores (no-op on single-TC v5e/v6e).
    even = [d for d in good if (B // d) % 2 == 0]
    return max(even or good)


def mixer_layer(x, params, *, block_b=None, matmul_dtype=jnp.bfloat16,
                single_buffer_weights=True):
    """x: (B, S, D) float32. params: dict of weights (see init_params)."""
    B, S, D = x.shape
    Td = params["token_w1"].shape[0]
    Cd = params["chan_w1t"].shape[1]

    cd_chunks = _pick_cd_chunks(Cd)
    assert Cd % cd_chunks == 0
    tcd = Cd // cd_chunks

    budget = _vmem_budget_bytes()
    weight_bufs = 1 if single_buffer_weights else 2
    if block_b is None:
        block_b = _pick_block_b(
            B, lambda bt: _vmem_estimate(bt, S, D, Td, Cd, tcd, weight_bufs) <= budget)
    assert B % block_b == 0, "batch must be divisible by block_b"
    grid_b = B // block_b

    wdt = matmul_dtype
    w1 = params["token_w1"].astype(wdt)
    w2 = params["token_w2"].astype(wdt)
    w3 = params["chan_w1t"].astype(wdt)
    w4 = params["chan_w2t"].astype(wdt)

    if single_buffer_weights:
        # Grid-invariant operands: fetched once, single-buffered.
        const2d = lambda shape: pl.BlockSpec(shape, lambda b: (0, 0),
                                             pipeline_mode=pl.Buffered(1))
    else:
        const2d = lambda shape: pl.BlockSpec(shape, lambda b: (0, 0))

    in_specs = [
        pl.BlockSpec((block_b, S, D), lambda b: (b, 0, 0)),   # x, block_b batch rows
        const2d((1, D)), const2d((1, D)),                     # LN1 gamma/beta
        const2d((Td, S)), const2d((Td, 1)),                   # token fc1
        const2d((S, Td)), const2d((S, 1)),                    # token fc2
        const2d((1, D)), const2d((1, D)),                     # LN2 gamma/beta
        const2d((D, Cd)), const2d((1, Cd)),                   # channel fc1 (transposed)
        const2d((Cd, D)), const2d((1, D)),                    # channel fc2 (transposed)
    ]

    flops = 4 * B * S * D * (Td + Cd)
    transcendentals = B * (Td * D + S * Cd)
    wbytes = jnp.dtype(wdt).itemsize
    bytes_accessed = (2 * B * S * D * 4
                      + (Td * S + S * Td + D * Cd + Cd * D) * wbytes
                      + (Td + S + Cd + 5 * D) * 4)

    kernel = functools.partial(mixer_kernel, cd_chunks=cd_chunks)

    return pl.pallas_call(
        kernel,
        out_shape=jax.ShapeDtypeStruct((B, S, D), x.dtype),
        grid=(grid_b,),
        in_specs=in_specs,
        out_specs=pl.BlockSpec((block_b, S, D), lambda b: (b, 0, 0)),
        compiler_params=pltpu.CompilerParams(
            dimension_semantics=("parallel",),
            vmem_limit_bytes=int(budget)),
        cost_estimate=pl.CostEstimate(
            flops=int(flops),
            transcendentals=int(transcendentals),
            bytes_accessed=int(bytes_accessed)),
    )(x,
      params["ln1_g"], params["ln1_b"],
      w1, params["token_b1"],
      w2, params["token_b2"],
      params["ln2_g"], params["ln2_b"],
      w3, params["chan_b1"],
      w4, params["chan_b2"])


def init_params(key, embedding_dim, sequence_len, mlp_ratio=(0.5, 4)):
    D, S = embedding_dim, sequence_len
    Td = int(D * mlp_ratio[0])
    Cd = int(D * mlp_ratio[1])
    ks = jax.random.split(key, 8)
    scale = 0.05
    p = {
        # LayerNorms (PyTorch default init: weight=1, bias=0)
        "ln1_g": jnp.ones((1, D), jnp.float32),
        "ln1_b": jnp.zeros((1, D), jnp.float32),
        "ln2_g": jnp.ones((1, D), jnp.float32),
        "ln2_b": jnp.zeros((1, D), jnp.float32),
        # token MLP: Linear(S, Td), Linear(Td, S)  (weights kept in torch layout)
        "token_w1": scale * jax.random.normal(ks[0], (Td, S), jnp.float32),
        "token_b1": scale * jax.random.normal(ks[1], (Td, 1), jnp.float32),
        "token_w2": scale * jax.random.normal(ks[2], (S, Td), jnp.float32),
        "token_b2": scale * jax.random.normal(ks[3], (S, 1), jnp.float32),
        # channel MLP: Linear(D, Cd), Linear(Cd, D)  (stored transposed: x @ W.T)
        "chan_w1t": scale * jax.random.normal(ks[4], (D, Cd), jnp.float32),
        "chan_b1": scale * jax.random.normal(ks[5], (1, Cd), jnp.float32),
        "chan_w2t": scale * jax.random.normal(ks[6], (Cd, D), jnp.float32),
        "chan_b2": scale * jax.random.normal(ks[7], (1, D), jnp.float32),
    }
    return p


def mixer_layer_reference(x, p):
    """Pure-JAX f32 reference matching the PyTorch forward exactly."""
    hp = jax.lax.Precision.HIGHEST
    ln = lambda z, g, b: (z - z.mean(-1, keepdims=True)) * lax.rsqrt(
        z.var(-1, keepdims=True) + LN_EPS) * g + b

    # token branch: LN1(x).transpose(1,2) -> (B, D, S)
    xn = ln(x, p["ln1_g"][0], p["ln1_b"][0])
    t = jnp.swapaxes(xn, 1, 2)
    h = _gelu_exact(jnp.einsum("bds,ts->bdt", t, p["token_w1"], precision=hp)
                    + p["token_b1"][:, 0])
    u = jnp.einsum("bdt,st->bds", h, p["token_w2"], precision=hp) + p["token_b2"][:, 0]
    y1 = x + jnp.swapaxes(u, 1, 2)

    # channel branch
    yn = ln(y1, p["ln2_g"][0], p["ln2_b"][0])
    h2 = _gelu_exact(jnp.einsum("bsd,dc->bsc", yn, p["chan_w1t"], precision=hp)
                     + p["chan_b1"])
    v = jnp.einsum("bsc,cd->bsd", h2, p["chan_w2t"], precision=hp) + p["chan_b2"]
    return y1 + v


if __name__ == "__main__":
    # Small but lane-aligned shapes (D % 128 == 0) so the fast token-branch
    # path is exercised: batch=4, seq=8, embed=128 -> Td=64, Cd=512.
    B, S, D = 4, 8, 128
    key = jax.random.PRNGKey(0)
    kx, kp = jax.random.split(key)
    x = jax.random.normal(kx, (B, S, D), jnp.float32)
    params = init_params(kp, embedding_dim=D, sequence_len=S)

    ref = mixer_layer_reference(x, params)

    def run(single_buffer):
        fn = jax.jit(lambda xx, pp: mixer_layer(xx, pp,
                                                single_buffer_weights=single_buffer))
        return jax.block_until_ready(fn(x, params))

    try:
        out = run(True)
    except Exception:
        # TODO(synk): pl.Buffered(1) single-buffering not supported on this jax
        # version; fall back to default double-buffered weights.
        out = run(False)

    assert out.shape == (B, S, D) and out.dtype == jnp.float32
    max_err = float(jnp.max(jnp.abs(out - ref)))
    # bf16 matmul operands with f32 accumulation -> slightly looser tolerance
    # than a pure-f32 kernel.
    assert jnp.allclose(out, ref, atol=2e-2, rtol=2e-2), max_err
    print("KERNEL_OK")
</pallas_src>

<mosaic_0001>
module attributes {stable_mosaic.version = 11 : i64} {
  func.func @mixer_kernel(%arg0: i32, %arg1: memref<2x8x128xf32, #tpu.memory_space<vmem>>, %arg2: memref<1x128xf32, #tpu.memory_space<vmem>>, %arg3: memref<1x128xf32, #tpu.memory_space<vmem>>, %arg4: memref<64x8xbf16, #tpu.memory_space<vmem>>, %arg5: memref<64x1xf32, #tpu.memory_space<vmem>>, %arg6: memref<8x64xbf16, #tpu.memory_space<vmem>>, %arg7: memref<8x1xf32, #tpu.memory_space<vmem>>, %arg8: memref<1x128xf32, #tpu.memory_space<vmem>>, %arg9: memref<1x128xf32, #tpu.memory_space<vmem>>, %arg10: memref<128x512xbf16, #tpu.memory_space<vmem>>, %arg11: memref<1x512xf32, #tpu.memory_space<vmem>>, %arg12: memref<512x128xbf16, #tpu.memory_space<vmem>>, %arg13: memref<1x128xf32, #tpu.memory_space<vmem>>, %arg14: memref<2x8x128xf32, #tpu.memory_space<vmem>>) attributes {dimension_semantics = [#tpu.dimension_semantics<parallel>], iteration_bounds = array<i64: 2>, scalar_prefetch = 0 : i64, scratch_operands = 0 : i64, tpu.core_type = #tpu.core_type<tc>, window_params = [{transform_indices = @transform_0, window_bounds = array<i64: 2, 8, 128>}, {pipeline_mode = #tpu.pipeline_mode<synchronous>, transform_indices = @transform_1, window_bounds = array<i64: 1, 128>}, {pipeline_mode = #tpu.pipeline_mode<synchronous>, transform_indices = @transform_2, window_bounds = array<i64: 1, 128>}, {pipeline_mode = #tpu.pipeline_mode<synchronous>, transform_indices = @transform_3, window_bounds = array<i64: 64, 8>}, {pipeline_mode = #tpu.pipeline_mode<synchronous>, transform_indices = @transform_4, window_bounds = array<i64: 64, 1>}, {pipeline_mode = #tpu.pipeline_mode<synchronous>, transform_indices = @transform_5, window_bounds = array<i64: 8, 64>}, {pipeline_mode = #tpu.pipeline_mode<synchronous>, transform_indices = @transform_6, window_bounds = array<i64: 8, 1>}, {pipeline_mode = #tpu.pipeline_mode<synchronous>, transform_indices = @transform_7, window_bounds = array<i64: 1, 128>}, {pipeline_mode = #tpu.pipeline_mode<synchronous>, transform_indices = @transform_8, window_bounds = array<i64: 1, 128>}, {pipeline_mode = #tpu.pipeline_mode<synchronous>, transform_indices = @transform_9, window_bounds = array<i64: 128, 512>}, {pipeline_mode = #tpu.pipeline_mode<synchronous>, transform_indices = @transform_10, window_bounds = array<i64: 1, 512>}, {pipeline_mode = #tpu.pipeline_mode<synchronous>, transform_indices = @transform_11, window_bounds = array<i64: 512, 128>}, {pipeline_mode = #tpu.pipeline_mode<synchronous>, transform_indices = @transform_12, window_bounds = array<i64: 1, 128>}, {transform_indices = @transform_13, window_bounds = array<i64: 2, 8, 128>}]} {
    %c0 = arith.constant 0 : index
    %c0_0 = arith.constant 0 : index
    %c0_1 = arith.constant 0 : index
    %0 = vector.load %arg1[%c0, %c0_0, %c0_1] : memref<2x8x128xf32, #tpu.memory_space<vmem>>, vector<2x8x128xf32>
    %c0_2 = arith.constant 0 : index
    %c0_3 = arith.constant 0 : index
    %1 = vector.load %arg2[%c0_2, %c0_3] : memref<1x128xf32, #tpu.memory_space<vmem>>, vector<1x128xf32>
    %c0_4 = arith.constant 0 : index
    %c0_5 = arith.constant 0 : index
    %2 = vector.load %arg3[%c0_4, %c0_5] : memref<1x128xf32, #tpu.memory_space<vmem>>, vector<1x128xf32>
    %cst = arith.constant dense<0.000000e+00> : vector<2x8xf32>
    %3 = vector.multi_reduction <add>, %0, %cst [2] : vector<2x8x128xf32> to vector<2x8xf32>
    %4 = vector.shape_cast %3 : vector<2x8xf32> to vector<2x8x1xf32>
    %cst_6 = arith.constant 1.280000e+02 : f32
    %5 = vector.broadcast %cst_6 : f32 to vector<2x8x1xf32>
    %6 = arith.divf %4, %5 : vector<2x8x1xf32>
    %7 = vector.broadcast %6 : vector<2x8x1xf32> to vector<2x8x128xf32>
    %8 = arith.subf %0, %7 : vector<2x8x128xf32>
    %9 = arith.mulf %8, %8 : vector<2x8x128xf32>
    %cst_7 = arith.constant dense<0.000000e+00> : vector<2x8xf32>
    %10 = vector.multi_reduction <add>, %9, %cst_7 [2] : vector<2x8x128xf32> to vector<2x8xf32>
    %11 = vector.shape_cast %10 : vector<2x8xf32> to vector<2x8x1xf32>
    %cst_8 = arith.constant 1.280000e+02 : f32
    %12 = vector.broadcast %cst_8 : f32 to vector<2x8x1xf32>
    %13 = arith.divf %11, %12 : vector<2x8x1xf32>
    %cst_9 = arith.constant 9.99999974E-6 : f32
    %14 = vector.broadcast %cst_9 : f32 to vector<2x8x1xf32>
    %15 = arith.addf %13, %14 : vector<2x8x1xf32>
    %16 = math.rsqrt %15 : vector<2x8x1xf32>
    %17 = vector.broadcast %16 : vector<2x8x1xf32> to vector<2x8x128xf32>
    %18 = arith.mulf %8, %17 : vector<2x8x128xf32>
    %19 = vector.shape_cast %1 : vector<1x128xf32> to vector<1x1x128xf32>
    %20 = vector.broadcast %19 : vector<1x1x128xf32> to vector<2x8x128xf32>
    %21 = arith.mulf %18, %20 : vector<2x8x128xf32>
    %22 = vector.shape_cast %2 : vector<1x128xf32> to vector<1x1x128xf32>
    %23 = vector.broadcast %22 : vector<1x1x128xf32> to vector<2x8x128xf32>
    %24 = arith.addf %21, %23 : vector<2x8x128xf32>
    %25 = tpu.transpose %24, [1, 0, 2] : vector<2x8x128xf32> -> vector<8x2x128xf32>
    %26 = vector.shape_cast %25 : vector<8x2x128xf32> to vector<8x256xf32>
    %27 = arith.truncf %26 : vector<8x256xf32> to vector<8x256xbf16>
    %c0_10 = arith.constant 0 : index
    %c0_11 = arith.constant 0 : index
    %28 = vector.load %arg4[%c0_10, %c0_11] : memref<64x8xbf16, #tpu.memory_space<vmem>>, vector<64x8xbf16>
    %cst_12 = arith.constant dense<0.000000e+00> : vector<64x256xf32>
    %29 = tpu.matmul %28, %27, %cst_12 {dimension_numbers = #tpu.dot_dimension_numbers<[1], [0], [0], [1], [0, 0, 1, 1], [], []>} : vector<64x8xbf16>, vector<8x256xbf16>, vector<64x256xf32> -> vector<64x256xf32>
    %c0_13 = arith.constant 0 : index
    %c0_14 = arith.constant 0 : index
    %30 = vector.load %arg5[%c0_13, %c0_14] : memref<64x1xf32, #tpu.memory_space<vmem>>, vector<64x1xf32>
    %31 = vector.broadcast %30 : vector<64x1xf32> to vector<64x256xf32>
    %32 = arith.addf %29, %31 : vector<64x256xf32>
    %cst_15 = arith.constant 5.000000e-01 : f32
    %33 = vector.broadcast %cst_15 : f32 to vector<64x256xf32>
    %34 = arith.mulf %33, %32 : vector<64x256xf32>
    %cst_16 = arith.constant 0.707106769 : f32
    %35 = vector.broadcast %cst_16 : f32 to vector<64x256xf32>
    %36 = arith.mulf %32, %35 : vector<64x256xf32>
    %37 = math.erf %36 : vector<64x256xf32>
    %cst_17 = arith.constant 1.000000e+00 : f32
    %38 = vector.broadcast %cst_17 : f32 to vector<64x256xf32>
    %39 = arith.addf %38, %37 : vector<64x256xf32>
    %40 = arith.mulf %34, %39 : vector<64x256xf32>
    %41 = arith.truncf %40 : vector<64x256xf32> to vector<64x256xbf16>
    %c0_18 = arith.constant 0 : index
    %c0_19 = arith.constant 0 : index
    %42 = vector.load %arg6[%c0_18, %c0_19] : memref<8x64xbf16, #tpu.memory_space<vmem>>, vector<8x64xbf16>
    %cst_20 = arith.constant dense<0.000000e+00> : vector<8x256xf32>
    %43 = tpu.matmul %42, %41, %cst_20 {dimension_numbers = #tpu.dot_dimension_numbers<[1], [0], [0], [1], [0, 0, 1, 1], [], []>} : vector<8x64xbf16>, vector<64x256xbf16>, vector<8x256xf32> -> vector<8x256xf32>
    %c0_21 = arith.constant 0 : index
    %c0_22 = arith.constant 0 : index
    %44 = vector.load %arg7[%c0_21, %c0_22] : memref<8x1xf32, #tpu.memory_space<vmem>>, vector<8x1xf32>
    %45 = vector.broadcast %44 : vector<8x1xf32> to vector<8x256xf32>
    %46 = arith.addf %43, %45 : vector<8x256xf32>
    %47 = vector.shape_cast %46 : vector<8x256xf32> to vector<8x2x128xf32>
    %48 = tpu.transpose %47, [1, 0, 2] : vector<8x2x128xf32> -> vector<2x8x128xf32>
    %49 = arith.addf %0, %48 : vector<2x8x128xf32>
    %50 = vector.shape_cast %49 : vector<2x8x128xf32> to vector<16x128xf32>
    %c0_23 = arith.constant 0 : index
    %c0_24 = arith.constant 0 : index
    %51 = vector.load %arg8[%c0_23, %c0_24] : memref<1x128xf32, #tpu.memory_space<vmem>>, vector<1x128xf32>
    %c0_25 = arith.constant 0 : index
    %c0_26 = arith.constant 0 : index
    %52 = vector.load %arg9[%c0_25, %c0_26] : memref<1x128xf32, #tpu.memory_space<vmem>>, vector<1x128xf32>
    %cst_27 = arith.constant dense<0.000000e+00> : vector<16xf32>
    %53 = vector.multi_reduction <add>, %50, %cst_27 [1] : vector<16x128xf32> to vector<16xf32>
    %54 = vector.shape_cast %53 : vector<16xf32> to vector<16x1xf32>
    %cst_28 = arith.constant 1.280000e+02 : f32
    %55 = vector.broadcast %cst_28 : f32 to vector<16x1xf32>
    %56 = arith.divf %54, %55 : vector<16x1xf32>
    %57 = vector.broadcast %56 : vector<16x1xf32> to vector<16x128xf32>
    %58 = arith.subf %50, %57 : vector<16x128xf32>
    %59 = arith.mulf %58, %58 : vector<16x128xf32>
    %cst_29 = arith.constant dense<0.000000e+00> : vector<16xf32>
    %60 = vector.multi_reduction <add>, %59, %cst_29 [1] : vector<16x128xf32> to vector<16xf32>
    %61 = vector.shape_cast %60 : vector<16xf32> to vector<16x1xf32>
    %cst_30 = arith.constant 1.280000e+02 : f32
    %62 = vector.broadcast %cst_30 : f32 to vector<16x1xf32>
    %63 = arith.divf %61, %62 : vector<16x1xf32>
    %cst_31 = arith.constant 9.99999974E-6 : f32
    %64 = vector.broadcast %cst_31 : f32 to vector<16x1xf32>
    %65 = arith.addf %63, %64 : vector<16x1xf32>
    %66 = math.rsqrt %65 : vector<16x1xf32>
    %67 = vector.broadcast %66 : vector<16x1xf32> to vector<16x128xf32>
    %68 = arith.mulf %58, %67 : vector<16x128xf32>
    %69 = vector.broadcast %51 : vector<1x128xf32> to vector<16x128xf32>
    %70 = arith.mulf %68, %69 : vector<16x128xf32>
    %71 = vector.broadcast %52 : vector<1x128xf32> to vector<16x128xf32>
    %72 = arith.addf %70, %71 : vector<16x128xf32>
    %73 = arith.truncf %72 : vector<16x128xf32> to vector<16x128xbf16>
    %c0_32 = arith.constant 0 : index
    %c0_33 = arith.constant 0 : index
    %74 = vector.load %arg10[%c0_32, %c0_33] : memref<128x512xbf16, #tpu.memory_space<vmem>>, vector<128x512xbf16>
    %cst_34 = arith.constant dense<0.000000e+00> : vector<16x512xf32>
    %75 = tpu.matmul %73, %74, %cst_34 {dimension_numbers = #tpu.dot_dimension_numbers<[1], [0], [0], [1], [0, 0, 1, 1], [], []>} : vector<16x128xbf16>, vector<128x512xbf16>, vector<16x512xf32> -> vector<16x512xf32>
    %c0_35 = arith.constant 0 : index
    %c0_36 = arith.constant 0 : index
    %76 = vector.load %arg11[%c0_35, %c0_36] : memref<1x512xf32, #tpu.memory_space<vmem>>, vector<1x512xf32>
    %77 = vector.broadcast %76 : vector<1x512xf32> to vector<16x512xf32>
    %78 = arith.addf %75, %77 : vector<16x512xf32>
    %cst_37 = arith.constant 5.000000e-01 : f32
    %79 = vector.broadcast %cst_37 : f32 to vector<16x512xf32>
    %80 = arith.mulf %79, %78 : vector<16x512xf32>
    %cst_38 = arith.constant 0.707106769 : f32
    %81 = vector.broadcast %cst_38 : f32 to vector<16x512xf32>
    %82 = arith.mulf %78, %81 : vector<16x512xf32>
    %83 = math.erf %82 : vector<16x512xf32>
    %cst_39 = arith.constant 1.000000e+00 : f32
    %84 = vector.broadcast %cst_39 : f32 to vector<16x512xf32>
    %85 = arith.addf %84, %83 : vector<16x512xf32>
    %86 = arith.mulf %80, %85 : vector<16x512xf32>
    %87 = arith.truncf %86 : vector<16x512xf32> to vector<16x512xbf16>
    %c0_40 = arith.constant 0 : index
    %c0_41 = arith.constant 0 : index
    %88 = vector.load %arg12[%c0_40, %c0_41] : memref<512x128xbf16, #tpu.memory_space<vmem>>, vector<512x128xbf16>
    %cst_42 = arith.constant dense<0.000000e+00> : vector<16x128xf32>
    %89 = tpu.matmul %87, %88, %cst_42 {dimension_numbers = #tpu.dot_dimension_numbers<[1], [0], [0], [1], [0, 0, 1, 1], [], []>} : vector<16x512xbf16>, vector<512x128xbf16>, vector<16x128xf32> -> vector<16x128xf32>
    %c0_43 = arith.constant 0 : index
    %c0_44 = arith.constant 0 : index
    %90 = vector.load %arg13[%c0_43, %c0_44] : memref<1x128xf32, #tpu.memory_space<vmem>>, vector<1x128xf32>
    %91 = vector.broadcast %90 : vector<1x128xf32> to vector<16x128xf32>
    %92 = arith.addf %89, %91 : vector<16x128xf32>
    %93 = arith.addf %50, %92 : vector<16x128xf32>
    %94 = vector.shape_cast %93 : vector<16x128xf32> to vector<2x8x128xf32>
    %c0_45 = arith.constant 0 : index
    %c0_46 = arith.constant 0 : index
    %c0_47 = arith.constant 0 : index
    %95 = vector.load %arg14[%c0_45, %c0_46, %c0_47] : memref<2x8x128xf32, #tpu.memory_space<vmem>>, vector<2x8x128xf32>
    tpu.vector_store %arg14[%c0_45, %c0_46, %c0_47], %94 {strides = array<i32>} : memref<2x8x128xf32, #tpu.memory_space<vmem>>, vector<2x8x128xf32>,
    return
  }
  func.func @transform_0(%arg0: i32) -> (i32, i32, i32) {
    %c0_i32 = arith.constant 0 : i32
    %c0_i32_0 = arith.constant 0 : i32
    %c0_i32_1 = arith.constant 0 : i32
    return %arg0, %c0_i32, %c0_i32_0 : i32, i32, i32
  }
  func.func @transform_1(%arg0: i32) -> (i32, i32) {
    %c0_i32 = arith.constant 0 : i32
    %c0_i32_0 = arith.constant 0 : i32
    %c0_i32_1 = arith.constant 0 : i32
    return %c0_i32, %c0_i32_0 : i32, i32
  }
  func.func @transform_2(%arg0: i32) -> (i32, i32) {
    %c0_i32 = arith.constant 0 : i32
    %c0_i32_0 = arith.constant 0 : i32
    %c0_i32_1 = arith.constant 0 : i32
    return %c0_i32, %c0_i32_0 : i32, i32
  }
  func.func @transform_3(%arg0: i32) -> (i32, i32) {
    %c0_i32 = arith.constant 0 : i32
    %c0_i32_0 = arith.constant 0 : i32
    %c0_i32_1 = arith.constant 0 : i32
    return %c0_i32, %c0_i32_0 : i32, i32
  }
  func.func @transform_4(%arg0: i32) -> (i32, i32) {
    %c0_i32 = arith.constant 0 : i32
    %c0_i32_0 = arith.constant 0 : i32
    %c0_i32_1 = arith.constant 0 : i32
    return %c0_i32, %c0_i32_0 : i32, i32
  }
  func.func @transform_5(%arg0: i32) -> (i32, i32) {
    %c0_i32 = arith.constant 0 : i32
    %c0_i32_0 = arith.constant 0 : i32
    %c0_i32_1 = arith.constant 0 : i32
    return %c0_i32, %c0_i32_0 : i32, i32
  }
  func.func @transform_6(%arg0: i32) -> (i32, i32) {
    %c0_i32 = arith.constant 0 : i32
    %c0_i32_0 = arith.constant 0 : i32
    %c0_i32_1 = arith.constant 0 : i32
    return %c0_i32, %c0_i32_0 : i32, i32
  }
  func.func @transform_7(%arg0: i32) -> (i32, i32) {
    %c0_i32 = arith.constant 0 : i32
    %c0_i32_0 = arith.constant 0 : i32
    %c0_i32_1 = arith.constant 0 : i32
    return %c0_i32, %c0_i32_0 : i32, i32
  }
  func.func @transform_8(%arg0: i32) -> (i32, i32) {
    %c0_i32 = arith.constant 0 : i32
    %c0_i32_0 = arith.constant 0 : i32
    %c0_i32_1 = arith.constant 0 : i32
    return %c0_i32, %c0_i32_0 : i32, i32
  }
  func.func @transform_9(%arg0: i32) -> (i32, i32) {
    %c0_i32 = arith.constant 0 : i32
    %c0_i32_0 = arith.constant 0 : i32
    %c0_i32_1 = arith.constant 0 : i32
    return %c0_i32, %c0_i32_0 : i32, i32
  }
  func.func @transform_10(%arg0: i32) -> (i32, i32) {
    %c0_i32 = arith.constant 0 : i32
    %c0_i32_0 = arith.constant 0 : i32
    %c0_i32_1 = arith.constant 0 : i32
    return %c0_i32, %c0_i32_0 : i32, i32
  }
  func.func @transform_11(%arg0: i32) -> (i32, i32) {
    %c0_i32 = arith.constant 0 : i32
    %c0_i32_0 = arith.constant 0 : i32
    %c0_i32_1 = arith.constant 0 : i32
    return %c0_i32, %c0_i32_0 : i32, i32
  }
  func.func @transform_12(%arg0: i32) -> (i32, i32) {
    %c0_i32 = arith.constant 0 : i32
    %c0_i32_0 = arith.constant 0 : i32
    %c0_i32_1 = arith.constant 0 : i32
    return %c0_i32, %c0_i32_0 : i32, i32
  }
  func.func @transform_13(%arg0: i32) -> (i32, i32, i32) {
    %c0_i32 = arith.constant 0 : i32
    %c0_i32_0 = arith.constant 0 : i32
    %c0_i32_1 = arith.constant 0 : i32
    return %arg0, %c0_i32, %c0_i32_0 : i32, i32, i32
  }
}

module attributes {stable_mosaic.version = 11 : i64} {
  func.func @mixer_kernel(%arg0: i32, %arg1: memref<2x8x128xf32, #tpu.memory_space<vmem>>, %arg2: memref<1x128xf32, #tpu.memory_space<vmem>>, %arg3: memref<1x128xf32, #tpu.memory_space<vmem>>, %arg4: memref<64x8xbf16, #tpu.memory_space<vmem>>, %arg5: memref<64x1xf32, #tpu.memory_space<vmem>>, %arg6: memref<8x64xbf16, #tpu.memory_space<vmem>>, %arg7: memref<8x1xf32, #tpu.memory_space<vmem>>, %arg8: memref<1x128xf32, #tpu.memory_space<vmem>>, %arg9: memref<1x128xf32, #tpu.memory_space<vmem>>, %arg10: memref<128x512xbf16, #tpu.memory_space<vmem>>, %arg11: memref<1x512xf32, #tpu.memory_space<vmem>>, %arg12: memref<512x128xbf16, #tpu.memory_space<vmem>>, %arg13: memref<1x128xf32, #tpu.memory_space<vmem>>, %arg14: memref<2x8x128xf32, #tpu.memory_space<vmem>>) attributes {dimension_semantics = [#tpu.dimension_semantics<parallel>], iteration_bounds = array<i64: 2>, scalar_prefetch = 0 : i64, scratch_operands = 0 : i64, tpu.core_type = #tpu.core_type<tc>, window_params = [{transform_indices = @transform_0, window_bounds = array<i64: 2, 8, 128>}, {pipeline_mode = #tpu.pipeline_mode<synchronous>, transform_indices = @transform_1, window_bounds = array<i64: 1, 128>}, {pipeline_mode = #tpu.pipeline_mode<synchronous>, transform_indices = @transform_2, window_bounds = array<i64: 1, 128>}, {pipeline_mode = #tpu.pipeline_mode<synchronous>, transform_indices = @transform_3, window_bounds = array<i64: 64, 8>}, {pipeline_mode = #tpu.pipeline_mode<synchronous>, transform_indices = @transform_4, window_bounds = array<i64: 64, 1>}, {pipeline_mode = #tpu.pipeline_mode<synchronous>, transform_indices = @transform_5, window_bounds = array<i64: 8, 64>}, {pipeline_mode = #tpu.pipeline_mode<synchronous>, transform_indices = @transform_6, window_bounds = array<i64: 8, 1>}, {pipeline_mode = #tpu.pipeline_mode<synchronous>, transform_indices = @transform_7, window_bounds = array<i64: 1, 128>}, {pipeline_mode = #tpu.pipeline_mode<synchronous>, transform_indices = @transform_8, window_bounds = array<i64: 1, 128>}, {pipeline_mode = #tpu.pipeline_mode<synchronous>, transform_indices = @transform_9, window_bounds = array<i64: 128, 512>}, {pipeline_mode = #tpu.pipeline_mode<synchronous>, transform_indices = @transform_10, window_bounds = array<i64: 1, 512>}, {pipeline_mode = #tpu.pipeline_mode<synchronous>, transform_indices = @transform_11, window_bounds = array<i64: 512, 128>}, {pipeline_mode = #tpu.pipeline_mode<synchronous>, transform_indices = @transform_12, window_bounds = array<i64: 1, 128>}, {transform_indices = @transform_13, window_bounds = array<i64: 2, 8, 128>}]} {
    %c0 = arith.constant 0 : index
    %c0_0 = arith.constant 0 : index
    %c0_1 = arith.constant 0 : index
    %0 = vector.load %arg1[%c0, %c0_0, %c0_1] : memref<2x8x128xf32, #tpu.memory_space<vmem>>, vector<2x8x128xf32>
    %c0_2 = arith.constant 0 : index
    %c0_3 = arith.constant 0 : index
    %1 = vector.load %arg2[%c0_2, %c0_3] : memref<1x128xf32, #tpu.memory_space<vmem>>, vector<1x128xf32>
    %c0_4 = arith.constant 0 : index
    %c0_5 = arith.constant 0 : index
    %2 = vector.load %arg3[%c0_4, %c0_5] : memref<1x128xf32, #tpu.memory_space<vmem>>, vector<1x128xf32>
    %cst = arith.constant dense<0.000000e+00> : vector<2x8xf32>
    %3 = vector.multi_reduction <add>, %0, %cst [2] : vector<2x8x128xf32> to vector<2x8xf32>
    %4 = vector.shape_cast %3 : vector<2x8xf32> to vector<2x8x1xf32>
    %cst_6 = arith.constant 1.280000e+02 : f32
    %5 = vector.broadcast %cst_6 : f32 to vector<2x8x1xf32>
    %6 = arith.divf %4, %5 : vector<2x8x1xf32>
    %7 = vector.broadcast %6 : vector<2x8x1xf32> to vector<2x8x128xf32>
    %8 = arith.subf %0, %7 : vector<2x8x128xf32>
    %9 = arith.mulf %8, %8 : vector<2x8x128xf32>
    %cst_7 = arith.constant dense<0.000000e+00> : vector<2x8xf32>
    %10 = vector.multi_reduction <add>, %9, %cst_7 [2] : vector<2x8x128xf32> to vector<2x8xf32>
    %11 = vector.shape_cast %10 : vector<2x8xf32> to vector<2x8x1xf32>
    %cst_8 = arith.constant 1.280000e+02 : f32
    %12 = vector.broadcast %cst_8 : f32 to vector<2x8x1xf32>
    %13 = arith.divf %11, %12 : vector<2x8x1xf32>
    %cst_9 = arith.constant 9.99999974E-6 : f32
    %14 = vector.broadcast %cst_9 : f32 to vector<2x8x1xf32>
    %15 = arith.addf %13, %14 : vector<2x8x1xf32>
    %16 = math.rsqrt %15 : vector<2x8x1xf32>
    %17 = vector.broadcast %16 : vector<2x8x1xf32> to vector<2x8x128xf32>
    %18 = arith.mulf %8, %17 : vector<2x8x128xf32>
    %19 = vector.shape_cast %1 : vector<1x128xf32> to vector<1x1x128xf32>
    %20 = vector.broadcast %19 : vector<1x1x128xf32> to vector<2x8x128xf32>
    %21 = arith.mulf %18, %20 : vector<2x8x128xf32>
    %22 = vector.shape_cast %2 : vector<1x128xf32> to vector<1x1x128xf32>
    %23 = vector.broadcast %22 : vector<1x1x128xf32> to vector<2x8x128xf32>
    %24 = arith.addf %21, %23 : vector<2x8x128xf32>
    %25 = tpu.transpose %24, [1, 0, 2] : vector<2x8x128xf32> -> vector<8x2x128xf32>
    %26 = vector.shape_cast %25 : vector<8x2x128xf32> to vector<8x256xf32>
    %27 = arith.truncf %26 : vector<8x256xf32> to vector<8x256xbf16>
    %c0_10 = arith.constant 0 : index
    %c0_11 = arith.constant 0 : index
    %28 = vector.load %arg4[%c0_10, %c0_11] : memref<64x8xbf16, #tpu.memory_space<vmem>>, vector<64x8xbf16>
    %cst_12 = arith.constant dense<0.000000e+00> : vector<64x256xf32>
    %29 = tpu.matmul %28, %27, %cst_12 {dimension_numbers = #tpu.dot_dimension_numbers<[1], [0], [0], [1], [0, 0, 1, 1], [], []>} : vector<64x8xbf16>, vector<8x256xbf16>, vector<64x256xf32> -> vector<64x256xf32>
    %c0_13 = arith.constant 0 : index
    %c0_14 = arith.constant 0 : index
    %30 = vector.load %arg5[%c0_13, %c0_14] : memref<64x1xf32, #tpu.memory_space<vmem>>, vector<64x1xf32>
    %31 = vector.broadcast %30 : vector<64x1xf32> to vector<64x256xf32>
    %32 = arith.addf %29, %31 : vector<64x256xf32>
    %cst_15 = arith.constant 5.000000e-01 : f32
    %33 = vector.broadcast %cst_15 : f32 to vector<64x256xf32>
    %34 = arith.mulf %33, %32 : vector<64x256xf32>
    %cst_16 = arith.constant 0.707106769 : f32
    %35 = vector.broadcast %cst_16 : f32 to vector<64x256xf32>
    %36 = arith.mulf %32, %35 : vector<64x256xf32>
    %37 = math.erf %36 : vector<64x256xf32>
    %cst_17 = arith.constant 1.000000e+00 : f32
    %38 = vector.broadcast %cst_17 : f32 to vector<64x256xf32>
    %39 = arith.addf %38, %37 : vector<64x256xf32>
    %40 = arith.mulf %34, %39 : vector<64x256xf32>
    %41 = arith.truncf %40 : vector<64x256xf32> to vector<64x256xbf16>
    %c0_18 = arith.constant 0 : index
    %c0_19 = arith.constant 0 : index
    %42 = vector.load %arg6[%c0_18, %c0_19] : memref<8x64xbf16, #tpu.memory_space<vmem>>, vector<8x64xbf16>
    %cst_20 = arith.constant dense<0.000000e+00> : vector<8x256xf32>
    %43 = tpu.matmul %42, %41, %cst_20 {dimension_numbers = #tpu.dot_dimension_numbers<[1], [0], [0], [1], [0, 0, 1, 1], [], []>} : vector<8x64xbf16>, vector<64x256xbf16>, vector<8x256xf32> -> vector<8x256xf32>
    %c0_21 = arith.constant 0 : index
    %c0_22 = arith.constant 0 : index
    %44 = vector.load %arg7[%c0_21, %c0_22] : memref<8x1xf32, #tpu.memory_space<vmem>>, vector<8x1xf32>
    %45 = vector.broadcast %44 : vector<8x1xf32> to vector<8x256xf32>
    %46 = arith.addf %43, %45 : vector<8x256xf32>
    %47 = vector.shape_cast %46 : vector<8x256xf32> to vector<8x2x128xf32>
    %48 = tpu.transpose %47, [1, 0, 2] : vector<8x2x128xf32> -> vector<2x8x128xf32>
    %49 = arith.addf %0, %48 : vector<2x8x128xf32>
    %50 = vector.shape_cast %49 : vector<2x8x128xf32> to vector<16x128xf32>
    %c0_23 = arith.constant 0 : index
    %c0_24 = arith.constant 0 : index
    %51 = vector.load %arg8[%c0_23, %c0_24] : memref<1x128xf32, #tpu.memory_space<vmem>>, vector<1x128xf32>
    %c0_25 = arith.constant 0 : index
    %c0_26 = arith.constant 0 : index
    %52 = vector.load %arg9[%c0_25, %c0_26] : memref<1x128xf32, #tpu.memory_space<vmem>>, vector<1x128xf32>
    %cst_27 = arith.constant dense<0.000000e+00> : vector<16xf32>
    %53 = vector.multi_reduction <add>, %50, %cst_27 [1] : vector<16x128xf32> to vector<16xf32>
    %54 = vector.shape_cast %53 : vector<16xf32> to vector<16x1xf32>
    %cst_28 = arith.constant 1.280000e+02 : f32
    %55 = vector.broadcast %cst_28 : f32 to vector<16x1xf32>
    %56 = arith.divf %54, %55 : vector<16x1xf32>
    %57 = vector.broadcast %56 : vector<16x1xf32> to vector<16x128xf32>
    %58 = arith.subf %50, %57 : vector<16x128xf32>
    %59 = arith.mulf %58, %58 : vector<16x128xf32>
    %cst_29 = arith.constant dense<0.000000e+00> : vector<16xf32>
    %60 = vector.multi_reduction <add>, %59, %cst_29 [1] : vector<16x128xf32> to vector<16xf32>
    %61 = vector.shape_cast %60 : vector<16xf32> to vector<16x1xf32>
    %cst_30 = arith.constant 1.280000e+02 : f32
    %62 = vector.broadcast %cst_30 : f32 to vector<16x1xf32>
    %63 = arith.divf %61, %62 : vector<16x1xf32>
    %cst_31 = arith.constant 9.99999974E-6 : f32
    %64 = vector.broadcast %cst_31 : f32 to vector<16x1xf32>
    %65 = arith.addf %63, %64 : vector<16x1xf32>
    %66 = math.rsqrt %65 : vector<16x1xf32>
    %67 = vector.broadcast %66 : vector<16x1xf32> to vector<16x128xf32>
    %68 = arith.mulf %58, %67 : vector<16x128xf32>
    %69 = vector.broadcast %51 : vector<1x128xf32> to vector<16x128xf32>
    %70 = arith.mulf %68, %69 : vector<16x128xf32>
    %71 = vector.broadcast %52 : vector<1x128xf32> to vector<16x128xf32>
    %72 = arith.addf %70, %71 : vector<16x128xf32>
    %73 = arith.truncf %72 : vector<16x128xf32> to vector<16x128xbf16>
    %c0_32 = arith.constant 0 : index
    %c0_33 = arith.constant 0 : index
    %74 = vector.load %arg10[%c0_32, %c0_33] : memref<128x512xbf16, #tpu.memory_space<vmem>>, vector<128x512xbf16>
    %cst_34 = arith.constant dense<0.000000e+00> : vector<16x512xf32>
    %75 = tpu.matmul %73, %74, %cst_34 {dimension_numbers = #tpu.dot_dimension_numbers<[1], [0], [0], [1], [0, 0, 1, 1], [], []>} : vector<16x128xbf16>, vector<128x512xbf16>, vector<16x512xf32> -> vector<16x512xf32>
    %c0_35 = arith.constant 0 : index
    %c0_36 = arith.constant 0 : index
    %76 = vector.load %arg11[%c0_35, %c0_36] : memref<1x512xf32, #tpu.memory_space<vmem>>, vector<1x512xf32>
    %77 = vector.broadcast %76 : vector<1x512xf32> to vector<16x512xf32>
    %78 = arith.addf %75, %77 : vector<16x512xf32>
    %cst_37 = arith.constant 5.000000e-01 : f32
    %79 = vector.broadcast %cst_37 : f32 to vector<16x512xf32>
    %80 = arith.mulf %79, %78 : vector<16x512xf32>
    %cst_38 = arith.constant 0.707106769 : f32
    %81 = vector.broadcast %cst_38 : f32 to vector<16x512xf32>
    %82 = arith.mulf %78, %81 : vector<16x512xf32>
    %83 = math.erf %82 : vector<16x512xf32>
    %cst_39 = arith.constant 1.000000e+00 : f32
    %84 = vector.broadcast %cst_39 : f32 to vector<16x512xf32>
    %85 = arith.addf %84, %83 : vector<16x512xf32>
    %86 = arith.mulf %80, %85 : vector<16x512xf32>
    %87 = arith.truncf %86 : vector<16x512xf32> to vector<16x512xbf16>
    %c0_40 = arith.constant 0 : index
    %c0_41 = arith.constant 0 : index
    %88 = vector.load %arg12[%c0_40, %c0_41] : memref<512x128xbf16, #tpu.memory_space<vmem>>, vector<512x128xbf16>
    %cst_42 = arith.constant dense<0.000000e+00> : vector<16x128xf32>
    %89 = tpu.matmul %87, %88, %cst_42 {dimension_numbers = #tpu.dot_dimension_numbers<[1], [0], [0], [1], [0, 0, 1, 1], [], []>} : vector<16x512xbf16>, vector<512x128xbf16>, vector<16x128xf32> -> vector<16x128xf32>
    %c0_43 = arith.constant 0 : index
    %c0_44 = arith.constant 0 : index
    %90 = vector.load %arg13[%c0_43, %c0_44] : memref<1x128xf32, #tpu.memory_space<vmem>>, vector<1x128xf32>
    %91 = vector.broadcast %90 : vector<1x128xf32> to vector<16x128xf32>
    %92 = arith.addf %89, %91 : vector<16x128xf32>
    %93 = arith.addf %50, %92 : vector<16x128xf32>
    %94 = vector.shape_cast %93 : vector<16x128xf32> to vector<2x8x128xf32>
    %c0_45 = arith.constant 0 : index
    %c0_46 = arith.constant 0 : index
    %c0_47 = arith.constant 0 : index
    %95 = vector.load %arg14[%c0_45, %c0_46, %c0_47] : memref<2x8x128xf32, #tpu.memory_space<vmem>>, vector<2x8x128xf32>
    tpu.vector_store %arg14[%c0_45, %c0_46, %c0_47], %94 {strides = array<i32>} : memref<2x8x128xf32, #tpu.memory_space<vmem>>, vector<2x8x128xf32>,
    return
  }
  func.func @transform_0(%arg0: i32) -> (i32, i32, i32) {
    %c0_i32 = arith.constant 0 : i32
    %c0_i32_0 = arith.constant 0 : i32
    %c0_i32_1 = arith.constant 0 : i32
    return %arg0, %c0_i32, %c0_i32_0 : i32, i32, i32
  }
  func.func @transform_1(%arg0: i32) -> (i32, i32) {
    %c0_i32 = arith.constant 0 : i32
    %c0_i32_0 = arith.constant 0 : i32
    %c0_i32_1 = arith.constant 0 : i32
    return %c0_i32, %c0_i32_0 : i32, i32
  }
  func.func @transform_2(%arg0: i32) -> (i32, i32) {
    %c0_i32 = arith.constant 0 : i32
    %c0_i32_0 = arith.constant 0 : i32
    %c0_i32_1 = arith.constant 0 : i32
    return %c0_i32, %c0_i32_0 : i32, i32
  }
  func.func @transform_3(%arg0: i32) -> (i32, i32) {
    %c0_i32 = arith.constant 0 : i32
    %c0_i32_0 = arith.constant 0 : i32
    %c0_i32_1 = arith.constant 0 : i32
    return %c0_i32, %c0_i32_0 : i32, i32
  }
  func.func @transform_4(%arg0: i32) -> (i32, i32) {
    %c0_i32 = arith.constant 0 : i32
    %c0_i32_0 = arith.constant 0 : i32
    %c0_i32_1 = arith.constant 0 : i32
    return %c0_i32, %c0_i32_0 : i32, i32
  }
  func.func @transform_5(%arg0: i32) -> (i32, i32) {
    %c0_i32 = arith.constant 0 : i32
    %c0_i32_0 = arith.constant 0 : i32
    %c0_i32_1 = arith.constant 0 : i32
    return %c0_i32, %c0_i32_0 : i32, i32
  }
  func.func @transform_6(%arg0: i32) -> (i32, i32) {
    %c0_i32 = arith.constant 0 : i32
    %c0_i32_0 = arith.constant 0 : i32
    %c0_i32_1 = arith.constant 0 : i32
    return %c0_i32, %c0_i32_0 : i32, i32
  }
  func.func @transform_7(%arg0: i32) -> (i32, i32) {
    %c0_i32 = arith.constant 0 : i32
    %c0_i32_0 = arith.constant 0 : i32
    %c0_i32_1 = arith.constant 0 : i32
    return %c0_i32, %c0_i32_0 : i32, i32
  }
  func.func @transform_8(%arg0: i32) -> (i32, i32) {
    %c0_i32 = arith.constant 0 : i32
    %c0_i32_0 = arith.constant 0 : i32
    %c0_i32_1 = arith.constant 0 : i32
    return %c0_i32, %c0_i32_0 : i32, i32
  }
  func.func @transform_9(%arg0: i32) -> (i32, i32) {
    %c0_i32 = arith.constant 0 : i32
    %c0_i32_0 = arith.constant 0 : i32
    %c0_i32_1 = arith.constant 0 : i32
    return %c0_i32, %c0_i32_0 : i32, i32
  }
  func.func @transform_10(%arg0: i32) -> (i32, i32) {
    %c0_i32 = arith.constant 0 : i32
    %c0_i32_0 = arith.constant 0 : i32
    %c0_i32_1 = arith.constant 0 : i32
    return %c0_i32, %c0_i32_0 : i32, i32
  }
  func.func @transform_11(%arg0: i32) -> (i32, i32) {
    %c0_i32 = arith.constant 0 : i32
    %c0_i32_0 = arith.constant 0 : i32
    %c0_i32_1 = arith.constant 0 : i32
    return %c0_i32, %c0_i32_0 : i32, i32
  }
  func.func @transform_12(%arg0: i32) -> (i32, i32) {
    %c0_i32 = arith.constant 0 : i32
    %c0_i32_0 = arith.constant 0 : i32
    %c0_i32_1 = arith.constant 0 : i32
    return %c0_i32, %c0_i32_0 : i32, i32
  }
  func.func @transform_13(%arg0: i32) -> (i32, i32, i32) {
    %c0_i32 = arith.constant 0 : i32
    %c0_i32_0 = arith.constant 0 : i32
    %c0_i32_1 = arith.constant 0 : i32
    return %arg0, %c0_i32, %c0_i32_0 : i32, i32, i32
  }
}

</mosaic_0001>

<llo_original>
// kernel: _lambda_.1
$region0: #{_lambda_.1}
  #allocation0 [shape = 'u32[]', space=smem, size = 0x4, offset = 0x4, fixed_abs, tag = 'smem constant byte address 0x4 - core index']
  #allocation1 [shape = 'u32[144,128]{1,0:T(1,128)}', space=vmem, size = 0x12000, scoped, tag = 'internal scratch']
  %s0 = inlined_call_operand.hbm [shape: f32[4,8,128], index: 0, kind: input, shape index: {}]
  %s1 = inlined_call_operand.hbm [shape: f32[1,128], index: 1, kind: input, shape index: {}]
  %s2 = inlined_call_operand.hbm [shape: f32[1,128], index: 2, kind: input, shape index: {}]
  %s3 = inlined_call_operand.hbm [shape: bf16[64,8], index: 3, kind: input, shape index: {}]
  %s4 = inlined_call_operand.hbm [shape: f32[64,1], index: 4, kind: input, shape index: {}]
  %s5 = inlined_call_operand.hbm [shape: bf16[8,64], index: 5, kind: input, shape index: {}]
  %s6 = inlined_call_operand.hbm [shape: f32[8,1], index: 6, kind: input, shape index: {}]
  %s7 = inlined_call_operand.hbm [shape: f32[1,128], index: 7, kind: input, shape index: {}]
  %s8 = inlined_call_operand.hbm [shape: f32[1,128], index: 8, kind: input, shape index: {}]
  %s9 = inlined_call_operand.hbm [shape: bf16[128,512], index: 9, kind: input, shape index: {}]
  %s10 = inlined_call_operand.hbm [shape: f32[1,512], index: 10, kind: input, shape index: {}]
  %s11 = inlined_call_operand.hbm [shape: bf16[512,128], index: 11, kind: input, shape index: {}]
  %s12 = inlined_call_operand.hbm [shape: f32[1,128], index: 12, kind: input, shape index: {}]
  %s13 = inlined_call_operand.hbm [shape: f32[4,8,128], index: 13, kind: output, shape index: {}]
  %s14 = sld [smem:[#allocation0]]
  $region137: #{_lambda_.1} parent=0
    _
  %s16 = ssub.s32 1, %s14
  %s17 = scalar_select 0, %s16, %s14
  $region1: #{_lambda_.1} parent=0
    #allocation2 [shape = 'u8[16384]{0}', space=vmem, size = 0x4000, scoped, tag = 'input window, operand 0']
    #allocation3 [shape = 's32[2]{0}', space=sflag, size = 0x8, scoped, tag = 'scoped memory for _lambda_.1']
    #allocation4 [shape = 's32[2]{0}', space=sflag, size = 0x8, scoped, tag = 'scoped memory for _lambda_.1']
    #allocation5 [shape = 'u8[512]{0}', space=vmem, size = 0x400, scoped, tag = 'input window, operand 1, single buffered']
    #allocation6 [shape = 's32[1]{0}', space=sflag, size = 0x4, scoped, tag = 'scoped memory for _lambda_.1']
    #allocation7 [shape = 'u8[512]{0}', space=vmem, size = 0x400, scoped, tag = 'input window, operand 2, single buffered']
    #allocation8 [shape = 'u8[16384]{0}', space=vmem, size = 0x4000, scoped, tag = 'input window, operand 3, single buffered']
    #allocation9 [shape = 's32[1]{0}', space=sflag, size = 0x4, scoped, tag = 'scoped memory for _lambda_.1']
    #allocation10 [shape = 'u8[32768]{0}', space=vmem, size = 0x8000, scoped, tag = 'input window, operand 4, single buffered']
    #allocation11 [shape = 'u8[2048]{0}', space=vmem, size = 0x800, scoped, tag = 'input window, operand 5, single buffered']
    #allocation12 [shape = 's32[1]{0}', space=sflag, size = 0x4, scoped, tag = 'scoped memory for _lambda_.1']
    #allocation13 [shape = 'u8[4096]{0}', space=vmem, size = 0x1000, scoped, tag = 'input window, operand 6, single buffered']
    #allocation14 [shape = 'u8[512]{0}', space=vmem, size = 0x400, scoped, tag = 'input window, operand 7, single buffered']
    #allocation15 [shape = 's32[1]{0}', space=sflag, size = 0x4, scoped, tag = 'scoped memory for _lambda_.1']
    #allocation16 [shape = 'u8[512]{0}', space=vmem, size = 0x400, scoped, tag = 'input window, operand 8, single buffered']
    #allocation17 [shape = 'u8[131072]{0}', space=vmem, size = 0x20000, scoped, tag = 'input window, operand 9, single buffered']
    #allocation18 [shape = 's32[1]{0}', space=sflag, size = 0x4, scoped, tag = 'scoped memory for _lambda_.1']
    #allocation19 [shape = 'u8[2048]{0}', space=vmem, size = 0x800, scoped, tag = 'input window, operand 10, single buffered']
    #allocation20 [shape = 'u8[131072]{0}', space=vmem, size = 0x20000, scoped, tag = 'input window, operand 11, single buffered']
    #allocation21 [shape = 's32[1]{0}', space=sflag, size = 0x4, scoped, tag = 'scoped memory for _lambda_.1']
    #allocation22 [shape = 'u8[512]{0}', space=vmem, size = 0x400, scoped, tag = 'input window, operand 12, single buffered']
    #allocation23 [shape = 'u8[16384]{0}', space=vmem, size = 0x4000, scoped, tag = 'output window, operand 0']
    %18 = vsyncpa [#allocation3], 0
    %s19 = scalar_lea.sflag [#allocation3], 1
    %20 = vsyncpa %s19, 0
    %21 = vsyncpa [#allocation6], 0
    %22 = vsyncpa [#allocation9], 0
    %23 = vsyncpa [#allocation12], 0
    %24 = vsyncpa [#allocation15], 0
    %25 = vsyncpa [#allocation18], 0
    %26 = vsyncpa [#allocation21], 0
    %27 = vsyncpa [#allocation4], 0
    %s28 = scalar_lea.sflag [#allocation4], 1
    %29 = vsyncpa %s28, 0
    loop: start=0, step=1, limit=4
    $region2: #{_lambda_.1} parent=1 // loop_pre_header
      _
    $region3: #{_lambda_.1} parent=1 // loop_header
      %s31 = sphi 0, %s35
      %p32 = scmp.ge.s32.totalorder %s31, 4
      %s41 = sphi 0, %s43
      %s44 = sphi 0, %s41
      %s45 = sphi 0, %s44
      %s61 = sphi 0, %s45
      %s65 = sphi 0, %s65
      %s67 = sphi 0, %s65
      %s68 = sphi 0, %s67
      %s82 = sphi 0, %s68
      %s86 = sphi 0, %s86
      %s88 = sphi 0, %s86
      %s89 = sphi 0, %s88
      %s103 = sphi 0, %s89
      %s107 = sphi 0, %s107
      %s109 = sphi 0, %s107
      %s110 = sphi 0, %s109
      %s124 = sphi 0, %s110
      %s128 = sphi 0, %s128
      %s130 = sphi 0, %s128
      %s131 = sphi 0, %s130
      %s145 = sphi 0, %s131
      %s149 = sphi 0, %s149
      %s151 = sphi 0, %s149
      %s152 = sphi 0, %s151
      %s166 = sphi 0, %s152
      %s170 = sphi 0, %s170
      %s172 = sphi 0, %s170
      %s173 = sphi 0, %s172
      %s187 = sphi 0, %s173
      %s191 = sphi 0, %s191
      %s193 = sphi 0, %s191
      %s194 = sphi 0, %s193
      %s208 = sphi 0, %s194
      %s212 = sphi 0, %s212
      %s214 = sphi 0, %s212
      %s215 = sphi 0, %s214
      %s229 = sphi 0, %s215
      %s233 = sphi 0, %s233
      %s235 = sphi 0, %s233
      %s236 = sphi 0, %s235
      %s250 = sphi 0, %s236
      %s254 = sphi 0, %s254
      %s256 = sphi 0, %s254
      %s257 = sphi 0, %s256
      %s271 = sphi 0, %s257
      %s275 = sphi 0, %s275
      %s277 = sphi 0, %s275
      %s278 = sphi 0, %s277
      %s292 = sphi 0, %s278
      %s296 = sphi 0, %s296
      %s298 = sphi 0, %s296
      %s299 = sphi 0, %s298
      %s313 = sphi 0, %s299
      %s319 = sphi 0, %s321
      %s322 = sphi 0, %s319
      %s323 = sphi 0, %s322
      %s339 = sphi 0, %s323
    $region4: #{_lambda_.1} parent=1 // loop_header_branch
      %34 = sbr.rel (%p32) target = $region8
    $region5: #{_lambda_.1} parent=1 // loop_body
      %s36 = ssub.s32 %s31, 1
      %s37 = ssub.s32 %s31, 2
      %s38 = sadd.s32 %s31, 1
      %s39 = ssub.s32 %s31, %s38
      %p40 = scmp.eq.s32.totalorder %s39, 0
      %s42 = sadd.s32 %s41, 1
      %s43 = scalar_select %p40, %s41, %s42
      %p46 = pneg %p40
      %p47 = scmp.eq.s32.totalorder %s31, 1
      %p48 = por %p46, %p47
      %p49 = scmp.ne.s32.totalorder %s41, %s44
      %p50 = scmp.eq.s32.totalorder %s31, 0
      %p51 = por %p49, %p50
      %p52 = scmp.ne.s32.totalorder %s41, %s44
      %p53 = scmp.eq.s32.totalorder %s36, 1
      %p54 = por %p52, %p53
      %p55 = scmp.ne.s32.totalorder %s44, %s45
      %p56 = scmp.eq.s32.totalorder %s36, 0
      %p57 = por %p55, %p56
      %p58 = scmp.ne.s32.totalorder %s44, %s45
      %p59 = scmp.eq.s32.totalorder %s37, 1
      %p60 = por %p58, %p59
      %p62 = scmp.ne.s32.totalorder %s45, %s61
      %p63 = scmp.eq.s32.totalorder %s37, 0
      %p64 = por %p62, %p63
      %s66 = sadd.s32 %s65, 1
      %p69 = scmp.eq.s32.totalorder %s31, 1
      %p70 = scmp.ne.s32.totalorder %s65, %s67
      %p71 = scmp.eq.s32.totalorder %s31, 0
      %p72 = por %p70, %p71
      %p73 = scmp.ne.s32.totalorder %s65, %s67
      %p74 = scmp.eq.s32.totalorder %s36, 1
      %p75 = por %p73, %p74
      %p76 = scmp.ne.s32.totalorder %s67, %s68
      %p77 = scmp.eq.s32.totalorder %s36, 0
      %p78 = por %p76, %p77
      %p79 = scmp.ne.s32.totalorder %s67, %s68
      %p80 = scmp.eq.s32.totalorder %s37, 1
      %p81 = por %p79, %p80
      %p83 = scmp.ne.s32.totalorder %s68, %s82
      %p84 = scmp.eq.s32.totalorder %s37, 0
      %p85 = por %p83, %p84
      %s87 = sadd.s32 %s86, 1
      %p90 = scmp.eq.s32.totalorder %s31, 1
      %p91 = scmp.ne.s32.totalorder %s86, %s88
      %p92 = scmp.eq.s32.totalorder %s31, 0
      %p93 = por %p91, %p92
      %p94 = scmp.ne.s32.totalorder %s86, %s88
      %p95 = scmp.eq.s32.totalorder %s36, 1
      %p96 = por %p94, %p95
      %p97 = scmp.ne.s32.totalorder %s88, %s89
      %p98 = scmp.eq.s32.totalorder %s36, 0
      %p99 = por %p97, %p98
      %p100 = scmp.ne.s32.totalorder %s88, %s89
      %p101 = scmp.eq.s32.totalorder %s37, 1
      %p102 = por %p100, %p101
      %p104 = scmp.ne.s32.totalorder %s89, %s103
      %p105 = scmp.eq.s32.totalorder %s37, 0
      %p106 = por %p104, %p105
      %s108 = sadd.s32 %s107, 1
      %p111 = scmp.eq.s32.totalorder %s31, 1
      %p112 = scmp.ne.s32.totalorder %s107, %s109
      %p113 = scmp.eq.s32.totalorder %s31, 0
      %p114 = por %p112, %p113
      %p115 = scmp.ne.s32.totalorder %s107, %s109
      %p116 = scmp.eq.s32.totalorder %s36, 1
      %p117 = por %p115, %p116
      %p118 = scmp.ne.s32.totalorder %s109, %s110
      %p119 = scmp.eq.s32.totalorder %s36, 0
      %p120 = por %p118, %p119
      %p121 = scmp.ne.s32.totalorder %s109, %s110
      %p122 = scmp.eq.s32.totalorder %s37, 1
      %p123 = por %p121, %p122
      %p125 = scmp.ne.s32.totalorder %s110, %s124
      %p126 = scmp.eq.s32.totalorder %s37, 0
      %p127 = por %p125, %p126
      %s129 = sadd.s32 %s128, 1
      %p132 = scmp.eq.s32.totalorder %s31, 1
      %p133 = scmp.ne.s32.totalorder %s128, %s130
      %p134 = scmp.eq.s32.totalorder %s31, 0
      %p135 = por %p133, %p134
      %p136 = scmp.ne.s32.totalorder %s128, %s130
      %p137 = scmp.eq.s32.totalorder %s36, 1
      %p138 = por %p136, %p137
      %p139 = scmp.ne.s32.totalorder %s130, %s131
      %p140 = scmp.eq.s32.totalorder %s36, 0
      %p141 = por %p139, %p140
      %p142 = scmp.ne.s32.totalorder %s130, %s131
      %p143 = scmp.eq.s32.totalorder %s37, 1
      %p144 = por %p142, %p143
      %p146 = scmp.ne.s32.totalorder %s131, %s145
      %p147 = scmp.eq.s32.totalorder %s37, 0
      %p148 = por %p146, %p147
      %s150 = sadd.s32 %s149, 1
      %p153 = scmp.eq.s32.totalorder %s31, 1
      %p154 = scmp.ne.s32.totalorder %s149, %s151
      %p155 = scmp.eq.s32.totalorder %s31, 0
      %p156 = por %p154, %p155
      %p157 = scmp.ne.s32.totalorder %s149, %s151
      %p158 = scmp.eq.s32.totalorder %s36, 1
      %p159 = por %p157, %p158
      %p160 = scmp.ne.s32.totalorder %s151, %s152
      %p161 = scmp.eq.s32.totalorder %s36, 0
      %p162 = por %p160, %p161
      %p163 = scmp.ne.s32.totalorder %s151, %s152
      %p164 = scmp.eq.s32.totalorder %s37, 1
      %p165 = por %p163, %p164
      %p167 = scmp.ne.s32.totalorder %s152, %s166
      %p168 = scmp.eq.s32.totalorder %s37, 0
      %p169 = por %p167, %p168
      %s171 = sadd.s32 %s170, 1
      %p174 = scmp.eq.s32.totalorder %s31, 1
      %p175 = scmp.ne.s32.totalorder %s170, %s172
      %p176 = scmp.eq.s32.totalorder %s31, 0
      %p177 = por %p175, %p176
      %p178 = scmp.ne.s32.totalorder %s170, %s172
      %p179 = scmp.eq.s32.totalorder %s36, 1
      %p180 = por %p178, %p179
      %p181 = scmp.ne.s32.totalorder %s172, %s173
      %p182 = scmp.eq.s32.totalorder %s36, 0
      %p183 = por %p181, %p182
      %p184 = scmp.ne.s32.totalorder %s172, %s173
      %p185 = scmp.eq.s32.totalorder %s37, 1
      %p186 = por %p184, %p185
      %p188 = scmp.ne.s32.totalorder %s173, %s187
      %p189 = scmp.eq.s32.totalorder %s37, 0
      %p190 = por %p188, %p189
      %s192 = sadd.s32 %s191, 1
      %p195 = scmp.eq.s32.totalorder %s31, 1
      %p196 = scmp.ne.s32.totalorder %s191, %s193
      %p197 = scmp.eq.s32.totalorder %s31, 0
      %p198 = por %p196, %p197
      %p199 = scmp.ne.s32.totalorder %s191, %s193
      %p200 = scmp.eq.s32.totalorder %s36, 1
      %p201 = por %p199, %p200
      %p202 = scmp.ne.s32.totalorder %s193, %s194
      %p203 = scmp.eq.s32.totalorder %s36, 0
      %p204 = por %p202, %p203
      %p205 = scmp.ne.s32.totalorder %s193, %s194
      %p206 = scmp.eq.s32.totalorder %s37, 1
      %p207 = por %p205, %p206
      %p209 = scmp.ne.s32.totalorder %s194, %s208
      %p210 = scmp.eq.s32.totalorder %s37, 0
      %p211 = por %p209, %p210
      %s213 = sadd.s32 %s212, 1
      %p216 = scmp.eq.s32.totalorder %s31, 1
      %p217 = scmp.ne.s32.totalorder %s212, %s214
      %p218 = scmp.eq.s32.totalorder %s31, 0
      %p219 = por %p217, %p218
      %p220 = scmp.ne.s32.totalorder %s212, %s214
      %p221 = scmp.eq.s32.totalorder %s36, 1
      %p222 = por %p220, %p221
      %p223 = scmp.ne.s32.totalorder %s214, %s215
      %p224 = scmp.eq.s32.totalorder %s36, 0
      %p225 = por %p223, %p224
      %p226 = scmp.ne.s32.totalorder %s214, %s215
      %p227 = scmp.eq.s32.totalorder %s37, 1
      %p228 = por %p226, %p227
      %p230 = scmp.ne.s32.totalorder %s215, %s229
      %p231 = scmp.eq.s32.totalorder %s37, 0
      %p232 = por %p230, %p231
      %s234 = sadd.s32 %s233, 1
      %p237 = scmp.eq.s32.totalorder %s31, 1
      %p238 = scmp.ne.s32.totalorder %s233, %s235
      %p239 = scmp.eq.s32.totalorder %s31, 0
      %p240 = por %p238, %p239
      %p241 = scmp.ne.s32.totalorder %s233, %s235
      %p242 = scmp.eq.s32.totalorder %s36, 1
      %p243 = por %p241, %p242
      %p244 = scmp.ne.s32.totalorder %s235, %s236
      %p245 = scmp.eq.s32.totalorder %s36, 0
      %p246 = por %p244, %p245
      %p247 = scmp.ne.s32.totalorder %s235, %s236
      %p248 = scmp.eq.s32.totalorder %s37, 1
      %p249 = por %p247, %p248
      %p251 = scmp.ne.s32.totalorder %s236, %s250
      %p252 = scmp.eq.s32.totalorder %s37, 0
      %p253 = por %p251, %p252
      %s255 = sadd.s32 %s254, 1
      %p258 = scmp.eq.s32.totalorder %s31, 1
      %p259 = scmp.ne.s32.totalorder %s254, %s256
      %p260 = scmp.eq.s32.totalorder %s31, 0
      %p261 = por %p259, %p260
      %p262 = scmp.ne.s32.totalorder %s254, %s256
      %p263 = scmp.eq.s32.totalorder %s36, 1
      %p264 = por %p262, %p263
      %p265 = scmp.ne.s32.totalorder %s256, %s257
      %p266 = scmp.eq.s32.totalorder %s36, 0
      %p267 = por %p265, %p266
      %p268 = scmp.ne.s32.totalorder %s256, %s257
      %p269 = scmp.eq.s32.totalorder %s37, 1
      %p270 = por %p268, %p269
      %p272 = scmp.ne.s32.totalorder %s257, %s271
      %p273 = scmp.eq.s32.totalorder %s37, 0
      %p274 = por %p272, %p273
      %s276 = sadd.s32 %s275, 1
      %p279 = scmp.eq.s32.totalorder %s31, 1
      %p280 = scmp.ne.s32.totalorder %s275, %s277
      %p281 = scmp.eq.s32.totalorder %s31, 0
      %p282 = por %p280, %p281
      %p283 = scmp.ne.s32.totalorder %s275, %s277
      %p284 = scmp.eq.s32.totalorder %s36, 1
      %p285 = por %p283, %p284
      %p286 = scmp.ne.s32.totalorder %s277, %s278
      %p287 = scmp.eq.s32.totalorder %s36, 0
      %p288 = por %p286, %p287
      %p289 = scmp.ne.s32.totalorder %s277, %s278
      %p290 = scmp.eq.s32.totalorder %s37, 1
      %p291 = por %p289, %p290
      %p293 = scmp.ne.s32.totalorder %s278, %s292
      %p294 = scmp.eq.s32.totalorder %s37, 0
      %p295 = por %p293, %p294
      %s297 = sadd.s32 %s296, 1
      %p300 = scmp.eq.s32.totalorder %s31, 1
      %p301 = scmp.ne.s32.totalorder %s296, %s298
      %p302 = scmp.eq.s32.totalorder %s31, 0
      %p303 = por %p301, %p302
      %p304 = scmp.ne.s32.totalorder %s296, %s298
      %p305 = scmp.eq.s32.totalorder %s36, 1
      %p306 = por %p304, %p305
      %p307 = scmp.ne.s32.totalorder %s298, %s299
      %p308 = scmp.eq.s32.totalorder %s36, 0
      %p309 = por %p307, %p308
      %p310 = scmp.ne.s32.totalorder %s298, %s299
      %p311 = scmp.eq.s32.totalorder %s37, 1
      %p312 = por %p310, %p311
      %p314 = scmp.ne.s32.totalorder %s299, %s313
      %p315 = scmp.eq.s32.totalorder %s37, 0
      %p316 = por %p314, %p315
      %s317 = ssub.s32 %s31, %s38
      %p318 = scmp.eq.s32.totalorder %s317, 0
      %s320 = sadd.s32 %s319, 1
      %s321 = scalar_select %p318, %s319, %s320
      %p324 = pneg %p318
      %p325 = scmp.eq.s32.totalorder %s31, 1
      %p326 = por %p324, %p325
      %p327 = scmp.ne.s32.totalorder %s319, %s322
      %p328 = scmp.eq.s32.totalorder %s31, 0
      %p329 = por %p327, %p328
      %p330 = scmp.ne.s32.totalorder %s319, %s322
      %p331 = scmp.eq.s32.totalorder %s36, 1
      %p332 = por %p330, %p331
      %p333 = scmp.ne.s32.totalorder %s322, %s323
      %p334 = scmp.eq.s32.totalorder %s36, 0
      %p335 = por %p333, %p334
      %p336 = scmp.ne.s32.totalorder %s322, %s323
      %p337 = scmp.eq.s32.totalorder %s37, 1
      %p338 = por %p336, %p337
      %p340 = scmp.ne.s32.totalorder %s323, %s339
      %p341 = scmp.eq.s32.totalorder %s37, 0
      %p342 = por %p340, %p341
      %p343 = scmp.le.s32.totalorder 1, %s31
      %p344 = scmp.lt.s32.totalorder %s31, 3
      %p345 = pnand %p343, %p344
      %p346 = pneg %p345
      // Predicated region
      $region9: #{_lambda_.1} parent=5 // pred_check
        _
      $region10: #{_lambda_.1} parent=5 // pred_check_branch
        %348 = sbr.rel (%p345) target = $region12
      $region11: #{_lambda_.1} parent=5 // pred_region
        %s349 = ssub.s32 %s31, 1
        // Predicated region
        $region13: #{_lambda_.1} parent=11 // pred_check
          %p350 = pneg %p78
        $region14: #{_lambda_.1} parent=11 // pred_check_branch
          %352 = sbr.rel (%p350) target = $region16
        $region15: #{_lambda_.1} parent=11 // pred_region
          %s354 = ssub.s32 16, 16
          %355 = vsyncadd [#allocation6], %s354
          %s357 = sshll.u32 [#allocation5], 4
          %s358 = int_to_ptr.vmem [resolvable:$true] %s357
          %360 = dma.hbm_to_vmem [thread:$0]  %s1, 16, %s358, [#allocation6]
        $region16: #{_lambda_.1} parent=11 // pred_fallthru
          _
        // Predicated region
        $region17: #{_lambda_.1} parent=11 // pred_check
          %p361 = pneg %p99
        $region18: #{_lambda_.1} parent=11 // pred_check_branch
          %363 = sbr.rel (%p361) target = $region20
        $region19: #{_lambda_.1} parent=11 // pred_region
          %s365 = ssub.s32 16, 16
          %366 = vsyncadd [#allocation6], %s365
          %s368 = sshll.u32 [#allocation7], 4
          %s369 = int_to_ptr.vmem [resolvable:$true] %s368
          %371 = dma.hbm_to_vmem [thread:$0]  %s2, 16, %s369, [#allocation6]
        $region20: #{_lambda_.1} parent=11 // pred_fallthru
          _
        // Predicated region
        $region21: #{_lambda_.1} parent=11 // pred_check
          %p372 = pneg %p120
        $region22: #{_lambda_.1} parent=11 // pred_check_branch
          %374 = sbr.rel (%p372) target = $region24
        $region23: #{_lambda_.1} parent=11 // pred_region
          %s376 = ssub.s32 512, 512
          %377 = vsyncadd [#allocation9], %s376
          %s378 = sshll.u32 [#allocation8], 4
          %s379 = int_to_ptr.vmem [resolvable:$true] %s378
          %384 = dma.hbm_to_vmem [thread:$0]  %s3, 512, %s379, [#allocation9], 64, 64, 4
        $region24: #{_lambda_.1} parent=11 // pred_fallthru
          _
        // Predicated region
        $region25: #{_lambda_.1} parent=11 // pred_check
          %p385 = pneg %p141
        $region26: #{_lambda_.1} parent=11 // pred_check_branch
          %387 = sbr.rel (%p385) target = $region28
        $region27: #{_lambda_.1} parent=11 // pred_region
          %s389 = ssub.s32 1024, 1024
          %390 = vsyncadd [#allocation9], %s389
          %s391 = sshll.u32 [#allocation10], 4
          %s392 = int_to_ptr.vmem [resolvable:$true] %s391
          %397 = dma.hbm_to_vmem [thread:$0]  %s4, 1024, %s392, [#allocation9], 128, 128, 8
        $region28: #{_lambda_.1} parent=11 // pred_fallthru
          _
        // Predicated region
        $region29: #{_lambda_.1} parent=11 // pred_check
          %p398 = pneg %p162
        $region30: #{_lambda_.1} parent=11 // pred_check_branch
          %400 = sbr.rel (%p398) target = $region32
        $region31: #{_lambda_.1} parent=11 // pred_region
          %s402 = ssub.s32 64, 64
          %403 = vsyncadd [#allocation12], %s402
          %s405 = sshll.u32 [#allocation11], 4
          %s406 = int_to_ptr.vmem [resolvable:$true] %s405
          %408 = dma.hbm_to_vmem [thread:$0]  %s5, 64, %s406, [#allocation12]
        $region32: #{_lambda_.1} parent=11 // pred_fallthru
          _
        // Predicated region
        $region33: #{_lambda_.1} parent=11 // pred_check
          %p409 = pneg %p183
        $region34: #{_lambda_.1} parent=11 // pred_check_branch
          %411 = sbr.rel (%p409) target = $region36
        $region35: #{_lambda_.1} parent=11 // pred_region
          %s413 = ssub.s32 128, 128
          %414 = vsyncadd [#allocation12], %s413
          %s416 = sshll.u32 [#allocation13], 4
          %s417 = int_to_ptr.vmem [resolvable:$true] %s416
          %419 = dma.hbm_to_vmem [thread:$0]  %s6, 128, %s417, [#allocation12]
        $region36: #{_lambda_.1} parent=11 // pred_fallthru
          _
        // Predicated region
        $region37: #{_lambda_.1} parent=11 // pred_check
          %p420 = pneg %p204
        $region38: #{_lambda_.1} parent=11 // pred_check_branch
          %422 = sbr.rel (%p420) target = $region40
        $region39: #{_lambda_.1} parent=11 // pred_region
          %s424 = ssub.s32 16, 16
          %425 = vsyncadd [#allocation15], %s424
          %s427 = sshll.u32 [#allocation14], 4
          %s428 = int_to_ptr.vmem [resolvable:$true] %s427
          %430 = dma.hbm_to_vmem [thread:$0]  %s7, 16, %s428, [#allocation15]
        $region40: #{_lambda_.1} parent=11 // pred_fallthru
          _
        // Predicated region
        $region41: #{_lambda_.1} parent=11 // pred_check
          %p431 = pneg %p225
        $region42: #{_lambda_.1} parent=11 // pred_check_branch
          %433 = sbr.rel (%p431) target = $region44
        $region43: #{_lambda_.1} parent=11 // pred_region
          %s435 = ssub.s32 16, 16
          %436 = vsyncadd [#allocation15], %s435
          %s438 = sshll.u32 [#allocation16], 4
          %s439 = int_to_ptr.vmem [resolvable:$true] %s438
          %441 = dma.hbm_to_vmem [thread:$0]  %s8, 16, %s439, [#allocation15]
        $region44: #{_lambda_.1} parent=11 // pred_fallthru
          _
        // Predicated region
        $region45: #{_lambda_.1} parent=11 // pred_check
          %p442 = pneg %p246
        $region46: #{_lambda_.1} parent=11 // pred_check_branch
          %444 = sbr.rel (%p442) target = $region48
        $region47: #{_lambda_.1} parent=11 // pred_region
          %s446 = ssub.s32 4096, 4096
          %447 = vsyncadd [#allocation18], %s446
          %s448 = sshll.u32 [#allocation17], 4
          %s449 = int_to_ptr.vmem [resolvable:$true] %s448
          %454 = dma.hbm_to_vmem [thread:$0]  %s9, 4096, %s449, [#allocation18], 256, 256, 16
        $region48: #{_lambda_.1} parent=11 // pred_fallthru
          _
        // Predicated region
        $region49: #{_lambda_.1} parent=11 // pred_check
          %p455 = pneg %p267
        $region50: #{_lambda_.1} parent=11 // pred_check_branch
          %457 = sbr.rel (%p455) target = $region52
        $region51: #{_lambda_.1} parent=11 // pred_region
          %s459 = ssub.s32 64, 64
          %460 = vsyncadd [#allocation18], %s459
          %s462 = sshll.u32 [#allocation19], 4
          %s463 = int_to_ptr.vmem [resolvable:$true] %s462
          %465 = dma.hbm_to_vmem [thread:$0]  %s10, 64, %s463, [#allocation18]
        $region52: #{_lambda_.1} parent=11 // pred_fallthru
          _
        // Predicated region
        $region53: #{_lambda_.1} parent=11 // pred_check
          %p466 = pneg %p288
        $region54: #{_lambda_.1} parent=11 // pred_check_branch
          %468 = sbr.rel (%p466) target = $region56
        $region55: #{_lambda_.1} parent=11 // pred_region
          %s470 = ssub.s32 4096, 4096
          %471 = vsyncadd [#allocation21], %s470
          %s472 = sshll.u32 [#allocation20], 4
          %s473 = int_to_ptr.vmem [resolvable:$true] %s472
          %478 = dma.hbm_to_vmem [thread:$0]  %s11, 4096, %s473, [#allocation21], 64, 64, 4
        $region56: #{_lambda_.1} parent=11 // pred_fallthru
          _
        // Predicated region
        $region57: #{_lambda_.1} parent=11 // pred_check
          %p479 = pneg %p309
        $region58: #{_lambda_.1} parent=11 // pred_check_branch
          %481 = sbr.rel (%p479) target = $region60
        $region59: #{_lambda_.1} parent=11 // pred_region
          %s483 = ssub.s32 16, 16
          %484 = vsyncadd [#allocation21], %s483
          %s486 = sshll.u32 [#allocation22], 4
          %s487 = int_to_ptr.vmem [resolvable:$true] %s486
          %489 = dma.hbm_to_vmem [thread:$0]  %s12, 16, %s487, [#allocation21]
        $region60: #{_lambda_.1} parent=11 // pred_fallthru
          _
      $region12: #{_lambda_.1} parent=5 // pred_fallthru
        _
      %p490 = scmp.lt.s32.totalorder %s31, 2
      // Predicated region
      $region61: #{_lambda_.1} parent=5 // pred_check
        %p491 = pneg %p490
      $region62: #{_lambda_.1} parent=5 // pred_check_branch
        %493 = sbr.rel (%p491) target = $region64
      $region63: #{_lambda_.1} parent=5 // pred_region
        // Predicated region
        $region65: #{_lambda_.1} parent=63 // pred_check
          %p494 = pneg %p51
        $region66: #{_lambda_.1} parent=63 // pred_check_branch
          %496 = sbr.rel (%p494) target = $region68
        $region67: #{_lambda_.1} parent=63 // pred_region
          %s497 = sand.u32 %s41, 1
          %s498 = scalar_lea.sflag [#allocation3], %s497
          %s499 = sand.u32 %s41, 1
          %s500 = smul.addr %s499, 16
          %s501 = scalar_lea.vmem [#allocation2], %s500
          %s502 = smul.u32 2, %s31
          %s504 = ssub.s32 256, 256
          %505 = vsyncadd %s498, %s504
          %s506 = smul.addr %s502, 128
          %s507 = scalar_lea.hbm %s0, %s506
          %s508 = sshll.u32 %s501, 4
          %s509 = int_to_ptr.vmem [resolvable:$true] %s508
          %514 = dma.hbm_to_vmem [thread:$0]  %s507, 256, %s509, %s498, 128, 128, 8
        $region68: #{_lambda_.1} parent=63 // pred_fallthru
          _
      $region64: #{_lambda_.1} parent=5 // pred_fallthru
        _
      %p515 = scmp.le.s32.totalorder 1, %s31
      %p516 = scmp.lt.s32.totalorder %s31, 3
      %p517 = pnand %p515, %p516
      %p518 = pneg %p517
      // Predicated region
      $region69: #{_lambda_.1} parent=5 // pred_check
        _
      $region70: #{_lambda_.1} parent=5 // pred_check_branch
        %520 = sbr.rel (%p517) target = $region72
      $region71: #{_lambda_.1} parent=5 // pred_region
        %s521 = ssub.s32 %s31, 1
        %s522 = sand.u32 %s44, 1
        %s523 = scalar_lea.sflag [#allocation3], %s522
        %s524 = sand.u32 %s44, 1
        %s525 = smul.addr %s524, 16
        %s526 = scalar_lea.vmem [#allocation2], %s525
        // Predicated region
        $region73: #{_lambda_.1} parent=71 // pred_check
          %p527 = pneg %p57
        $region74: #{_lambda_.1} parent=71 // pred_check_branch
          %529 = sbr.rel (%p527) target = $region76
        $region75: #{_lambda_.1} parent=71 // pred_region
          %530 = dma.done %s523, 256
        $region76: #{_lambda_.1} parent=71 // pred_fallthru
          _
        // Predicated region
        $region77: #{_lambda_.1} parent=71 // pred_check
          %p531 = pneg %p78
        $region78: #{_lambda_.1} parent=71 // pred_check_branch
          %533 = sbr.rel (%p531) target = $region80
        $region79: #{_lambda_.1} parent=71 // pred_region
          %534 = dma.done [#allocation6], 16
        $region80: #{_lambda_.1} parent=71 // pred_fallthru
          _
        // Predicated region
        $region81: #{_lambda_.1} parent=71 // pred_check
          %p535 = pneg %p99
        $region82: #{_lambda_.1} parent=71 // pred_check_branch
          %537 = sbr.rel (%p535) target = $region84
        $region83: #{_lambda_.1} parent=71 // pred_region
          %538 = dma.done [#allocation6], 16
        $region84: #{_lambda_.1} parent=71 // pred_fallthru
          _
        // Predicated region
        $region85: #{_lambda_.1} parent=71 // pred_check
          %p539 = pneg %p120
        $region86: #{_lambda_.1} parent=71 // pred_check_branch
          %541 = sbr.rel (%p539) target = $region88
        $region87: #{_lambda_.1} parent=71 // pred_region
          %542 = dma.done [#allocation9], 512
        $region88: #{_lambda_.1} parent=71 // pred_fallthru
          _
        // Predicated region
        $region89: #{_lambda_.1} parent=71 // pred_check
          %p543 = pneg %p141
        $region90: #{_lambda_.1} parent=71 // pred_check_branch
          %545 = sbr.rel (%p543) target = $region92
        $region91: #{_lambda_.1} parent=71 // pred_region
          %546 = dma.done [#allocation9], 1024
        $region92: #{_lambda_.1} parent=71 // pred_fallthru
          _
        // Predicated region
        $region93: #{_lambda_.1} parent=71 // pred_check
          %p547 = pneg %p162
        $region94: #{_lambda_.1} parent=71 // pred_check_branch
          %549 = sbr.rel (%p547) target = $region96
        $region95: #{_lambda_.1} parent=71 // pred_region
          %550 = dma.done [#allocation12], 64
        $region96: #{_lambda_.1} parent=71 // pred_fallthru
          _
        // Predicated region
        $region97: #{_lambda_.1} parent=71 // pred_check
          %p551 = pneg %p183
        $region98: #{_lambda_.1} parent=71 // pred_check_branch
          %553 = sbr.rel (%p551) target = $region100
        $region99: #{_lambda_.1} parent=71 // pred_region
          %554 = dma.done [#allocation12], 128
        $region100: #{_lambda_.1} parent=71 // pred_fallthru
          _
        // Predicated region
        $region101: #{_lambda_.1} parent=71 // pred_check
          %p555 = pneg %p204
        $region102: #{_lambda_.1} parent=71 // pred_check_branch
          %557 = sbr.rel (%p555) target = $region104
        $region103: #{_lambda_.1} parent=71 // pred_region
          %558 = dma.done [#allocation15], 16
        $region104: #{_lambda_.1} parent=71 // pred_fallthru
          _
        // Predicated region
        $region105: #{_lambda_.1} parent=71 // pred_check
          %p559 = pneg %p225
        $region106: #{_lambda_.1} parent=71 // pred_check_branch
          %561 = sbr.rel (%p559) target = $region108
        $region107: #{_lambda_.1} parent=71 // pred_region
          %562 = dma.done [#allocation15], 16
        $region108: #{_lambda_.1} parent=71 // pred_fallthru
          _
        // Predicated region
        $region109: #{_lambda_.1} parent=71 // pred_check
          %p563 = pneg %p246
        $region110: #{_lambda_.1} parent=71 // pred_check_branch
          %565 = sbr.rel (%p563) target = $region112
        $region111: #{_lambda_.1} parent=71 // pred_region
          %566 = dma.done [#allocation18], 4096
        $region112: #{_lambda_.1} parent=71 // pred_fallthru
          _
        // Predicated region
        $region113: #{_lambda_.1} parent=71 // pred_check
          %p567 = pneg %p267
        $region114: #{_lambda_.1} parent=71 // pred_check_branch
          %569 = sbr.rel (%p567) target = $region116
        $region115: #{_lambda_.1} parent=71 // pred_region
          %570 = dma.done [#allocation18], 64
        $region116: #{_lambda_.1} parent=71 // pred_fallthru
          _
        // Predicated region
        $region117: #{_lambda_.1} parent=71 // pred_check
          %p571 = pneg %p288
        $region118: #{_lambda_.1} parent=71 // pred_check_branch
          %573 = sbr.rel (%p571) target = $region120
        $region119: #{_lambda_.1} parent=71 // pred_region
          %574 = dma.done [#allocation21], 4096
        $region120: #{_lambda_.1} parent=71 // pred_fallthru
          _
        // Predicated region
        $region121: #{_lambda_.1} parent=71 // pred_check
          %p575 = pneg %p309
        $region122: #{_lambda_.1} parent=71 // pred_check_branch
          %577 = sbr.rel (%p575) target = $region124
        $region123: #{_lambda_.1} parent=71 // pred_region
          %578 = dma.done [#allocation21], 16
        $region124: #{_lambda_.1} parent=71 // pred_fallthru
          _
        %s579 = sand.u32 %s44, 1
        %s580 = scalar_lea.sflag [#allocation3], %s579
        %s581 = sand.u32 %s44, 1
        %s582 = smul.addr %s581, 16
        %s583 = scalar_lea.vmem [#allocation2], %s582
        %p584 = pneg %p57
        %p585 = pneg %p54
        %p586 = pneg %p78
        %p587 = pneg %p75
        %p588 = pneg %p99
        %p589 = pneg %p96
        %p590 = pneg %p120
        %p591 = pneg %p117
        %p592 = pneg %p141
        %p593 = pneg %p138
        %p594 = pneg %p162
        %p595 = pneg %p159
        %p596 = pneg %p183
        %p597 = pneg %p180
        %p598 = pneg %p204
        %p599 = pneg %p201
        %p600 = pneg %p225
        %p601 = pneg %p222
        %p602 = pneg %p246
        %p603 = pneg %p243
        %p604 = pneg %p267
        %p605 = pneg %p264
        %p606 = pneg %p288
        %p607 = pneg %p285
        %p608 = pneg %p309
        %p609 = pneg %p306
        %p610 = pneg %p335
        %p611 = pneg %p332
        %s612 = sand.u32 %s322, 1
        %s613 = scalar_lea.sflag [#allocation4], %s612
        %s614 = sand.u32 %s322, 1
        %s615 = smul.addr %s614, 16
        %s616 = scalar_lea.vmem [#allocation23], %s615
        %s617 = smul.u32 2, %s36
        %s618 = smul.u32 2, %s36
        %v620 = vld [vmem:[%s526] sm:$0xff]
        %v621 = vld [vmem:[%s526 + $0x8] sm:$0xff]
        %v622 = vld [vmem:[#allocation5] sm:$0x1]
        %v623 = vld [vmem:[#allocation7] sm:$0x1]
        %624 = vadd.xlane.f32.xlu0 %v620
        %v625 = vpop.xlane.xlu0 %624
        %626 = vadd.xlane.f32.xlu0 %v621
        %v627 = vpop.xlane.xlu0 %626
        %v628 = vrcp.pop 128.0
        %v629 = vmul.f32 %v625, %v628
        %v630 = vmul.f32 %v627, %v628
        %v631 = vsub.f32 %v620, %v629
        %v632 = vsub.f32 %v621, %v630
        %v633 = vmul.f32 %v631, %v631
        %v634 = vmul.f32 %v632, %v632
        %635 = vadd.xlane.f32.xlu0 %v633
        %v636 = vpop.xlane.xlu0 %635
        %637 = vadd.xlane.f32.xlu0 %v634
        %v638 = vpop.xlane.xlu0 %637
        %v639 = vmul.f32 %v636, %v628
        %v640 = vmul.f32 %v638, %v628
        %v641 = vadd.f32 %v639, 1e-05
        %v642 = vadd.f32 %v640, 1e-05
        %v643 = vrsqrt.pop %v641
        %v644 = vrsqrt.pop %v642
        %v645 = vmul.f32 %v631, %v643
        %v646 = vmul.f32 %v632, %v644
        %v648 = vlaneseq
        %v649 = vshrl.u32 %v648, 7
        %v650 = vsub.s32 0, %v649
        %v651 = vrot.slane %v622, %v650
        %v653 = vmul.f32 %v645, %v651
        %v654 = vmul.f32 %v646, %v651
        %v656 = vlaneseq
        %v657 = vshrl.u32 %v656, 7
        %v658 = vsub.s32 0, %v657
        %v659 = vrot.slane %v623, %v658
        %v661 = vadd.f32 %v653, %v659
        %v662 = vadd.f32 %v654, %v659
        %v663 = vcombine.high %v661, 0.0
        %v665 = vunpack.c.l.s4 1983009808
        %v666 = vunpack.c.0.s8 %v665
        %v667 = vlaneseq
        %v668 = vshrl.u32 %v667, 7
        %v669 = vsub.s32 %v666, %v668
        %v670 = vrot.slane %v661, %v669
        %v672 = vunpack.c.l.s4 1983009808
        %v673 = vunpack.c.0.s8 %v672
        %v674 = vlaneseq
        %v675 = vshrl.u32 %v674, 7
        %v676 = vsub.s32 %v673, %v675
        %v677 = vrot.slane %v663, %v676
        %v678 = vcombine.high %v662, 0.0
        %v680 = vunpack.c.l.s4 1983009808
        %v681 = vunpack.c.0.s8 %v680
        %v682 = vlaneseq
        %v683 = vshrl.u32 %v682, 7
        %v684 = vsub.s32 %v681, %v683
        %v685 = vrot.slane %v662, %v684
        %v687 = vunpack.c.l.s4 1983009808
        %v688 = vunpack.c.0.s8 %v687
        %v689 = vlaneseq
        %v690 = vshrl.u32 %v689, 7
        %v691 = vsub.s32 %v688, %v690
        %v692 = vrot.slane %v678, %v691
        %v693 = vcombine.low %v670, %v685
        %v694 = vcombine.high %v670, %v685
        %v696 = vunpack.c.l.s4 1934713408
        %v697 = vunpack.c.0.s8 %v696
        %v698 = vlaneseq
        %v699 = vshrl.u32 %v698, 7
        %v700 = vsub.s32 %v697, %v699
        %v701 = vrot.slane %v693, %v700
        %v703 = vunpack.c.l.s4 1934713408
        %v704 = vunpack.c.0.s8 %v703
        %v705 = vlaneseq
        %v706 = vshrl.u32 %v705, 7
        %v707 = vsub.s32 %v704, %v706
        %v708 = vrot.slane %v694, %v707
        %v709 = vcombine.low %v677, %v692
        %v710 = vcombine.high %v677, %v692
        %v712 = vunpack.c.l.s4 1934713408
        %v713 = vunpack.c.0.s8 %v712
        %v714 = vlaneseq
        %v715 = vshrl.u32 %v714, 7
        %v716 = vsub.s32 %v713, %v715
        %v717 = vrot.slane %v709, %v716
        %v719 = vunpack.c.l.s4 1934713408
        %v720 = vunpack.c.0.s8 %v719
        %v721 = vlaneseq
        %v722 = vshrl.u32 %v721, 7
        %v723 = vsub.s32 %v720, %v722
        %v724 = vrot.slane %v710, %v723
        %v725 = vcombine.high %v701, 0.0
        %v726 = vcombine.high %v708, 0.0
        %v727 = vcombine.high %v717, 0.0
        %v728 = vcombine.high %v724, 0.0
        %v729 = vcombine.low %v701, %v708
        %v731 = vunpack.c.l.s4 1983009808
        %v732 = vunpack.c.0.s8 %v731
        %v733 = vlaneseq
        %v734 = vshrl.u32 %v733, 7
        %v735 = vsub.s32 %v732, %v734
        %v736 = vrot.slane %v729, %v735
        %v737 = vcombine.low %v725, %v726
        %v739 = vunpack.c.l.s4 1983009808
        %v740 = vunpack.c.0.s8 %v739
        %v741 = vlaneseq
        %v742 = vshrl.u32 %v741, 7
        %v743 = vsub.s32 %v740, %v742
        %v744 = vrot.slane %v737, %v743
        %v745 = vcombine.low %v717, %v724
        %v747 = vunpack.c.l.s4 1983009808
        %v748 = vunpack.c.0.s8 %v747
        %v749 = vlaneseq
        %v750 = vshrl.u32 %v749, 7
        %v751 = vsub.s32 %v748, %v750
        %v752 = vrot.slane %v745, %v751
        %v753 = vcombine.low %v727, %v728
        %v755 = vunpack.c.l.s4 1983009808
        %v756 = vunpack.c.0.s8 %v755
        %v757 = vlaneseq
        %v758 = vshrl.u32 %v757, 7
        %v759 = vsub.s32 %v756, %v758
        %v760 = vrot.slane %v753, %v759
        %v761 = vcombine.low %v736, %v744
        %v763 = vunpack.c.l.s4 1934713408
        %v764 = vunpack.c.0.s8 %v763
        %v765 = vlaneseq
        %v766 = vshrl.u32 %v765, 7
        %v767 = vsub.s32 %v764, %v766
        %v768 = vrot.slane %v761, %v767
        %v769 = vcombine.low %v752, %v760
        %v771 = vunpack.c.l.s4 1934713408
        %v772 = vunpack.c.0.s8 %v771
        %v773 = vlaneseq
        %v774 = vshrl.u32 %v773, 7
        %v775 = vsub.s32 %v772, %v774
        %v776 = vrot.slane %v769, %v775
        %v777 = vcombine.low %v768, %v776
        %v778 = vcombine.high %v768, %v776
        %v779 = vpack.c.bf16 %v777, %v777
        %v780 = vpack.c.bf16 %v778, %v778
        %v781 = vld [vmem:[#allocation8] sm:$0xf]
        %v782 = vld [vmem:[#allocation8 + $0x4] sm:$0xf]
        %v783 = vld [vmem:[#allocation8 + $0x8] sm:$0xf]
        %v784 = vld [vmem:[#allocation8 + $0xc] sm:$0xf]
        %v785 = vld [vmem:[#allocation8 + $0x10] sm:$0xf]
        %v786 = vld [vmem:[#allocation8 + $0x14] sm:$0xf]
        %v787 = vld [vmem:[#allocation8 + $0x18] sm:$0xf]
        %v788 = vld [vmem:[#allocation8 + $0x1c] sm:$0xf]
        %v789 = vld [vmem:[#allocation10] sm:$0xff]
        %v790 = vld [vmem:[#allocation10 + $0x8] sm:$0xff]
        %v791 = vld [vmem:[#allocation10 + $0x10] sm:$0xff]
        %v792 = vld [vmem:[#allocation10 + $0x18] sm:$0xff]
        %v793 = vld [vmem:[#allocation10 + $0x20] sm:$0xff]
        %v794 = vld [vmem:[#allocation10 + $0x28] sm:$0xff]
        %v795 = vld [vmem:[#allocation10 + $0x30] sm:$0xff]
        %v796 = vld [vmem:[#allocation10 + $0x38] sm:$0xff]
        %798 = vset.pattern.permute.xlu0 0
        %799 = vperm.xlu0 %798, %v789
        %v800 = vpop.permute.xlu0 %799
        %803 = vset.pattern.permute.xlu0 0
        %804 = vperm.xlu0 %803, %v790
        %v805 = vpop.permute.xlu0 %804
        %808 = vset.pattern.permute.xlu0 0
        %809 = vperm.xlu0 %808, %v791
        %v810 = vpop.permute.xlu0 %809
        %813 = vset.pattern.permute.xlu0 0
        %814 = vperm.xlu0 %813, %v792
        %v815 = vpop.permute.xlu0 %814
        %818 = vset.pattern.permute.xlu0 0
        %819 = vperm.xlu0 %818, %v793
        %v820 = vpop.permute.xlu0 %819
        %823 = vset.pattern.permute.xlu0 0
        %824 = vperm.xlu0 %823, %v794
        %v825 = vpop.permute.xlu0 %824
        %828 = vset.pattern.permute.xlu0 0
        %829 = vperm.xlu0 %828, %v795
        %v830 = vpop.permute.xlu0 %829
        %833 = vset.pattern.permute.xlu0 0
        %834 = vperm.xlu0 %833, %v796
        %v835 = vpop.permute.xlu0 %834
        %v845 = vunpack.c.l.b16 %v781
        %v846 = vunpack.c.l.b16 %v782
        %v847 = vunpack.c.l.b16 %v783
        %v848 = vunpack.c.l.b16 %v784
        %v849 = vunpack.c.l.b16 %v785
        %v850 = vunpack.c.l.b16 %v786
        %v851 = vunpack.c.l.b16 %v787
        %v852 = vunpack.c.l.b16 %v788
        %v853 = vpack.c.b16 %v846, %v845
        %v854 = vpack.c.b16 %v848, %v847
        %v855 = vpack.c.b16 %v850, %v849
        %v856 = vpack.c.b16 %v852, %v851
        %vm857 = vcmask 64512
        %v859 = vsel %vm857, %v853, 0
        %v862 = vsel %vm857, %v854, 0
        %v865 = vsel %vm857, %v855, 0
        %v868 = vsel %vm857, %v856, 0
        %vm870 = vcmask 1043456
        %v872 = vsel %vm870, %v779, 0
        %v875 = vsel %vm870, %v780, 0
        %877 = vmatprep.subr.bf16.mxu0 %v875
        %878 = vmatpush1.bf16.msra.mxu0 %v872
        %879 = vmatprep.subr.bf16.mxu0 0
        %880 = vmatpush1.bf16.msra.mxu0 0
        %881 = vmatprep.subr.bf16.mxu0 0
        %882 = vmatpush1.bf16.msra.mxu0 0
        %883 = vmatprep.subr.bf16.mxu0 0
        %884 = vmatpush1.bf16.msra.mxu0 0
        %885 = vmatprep.subr.bf16.mxu0 0
        %886 = vmatpush1.bf16.msra.mxu0 0
        %887 = vmatprep.subr.bf16.mxu0 0
        %888 = vmatpush1.bf16.msra.mxu0 0
        %889 = vmatprep.subr.bf16.mxu0 0
        %890 = vmatpush1.bf16.msra.mxu0 0
        %891 = vmatprep.subr.bf16.mxu0 0
        %892 = vmatpush1.bf16.msra.mxu0 0
        %893 = vmatprep.subr.bf16.mxu0 0
        %894 = vmatpush1.bf16.msra.mxu0 0
        %895 = vmatprep.subr.bf16.mxu0 0
        %896 = vmatpush1.bf16.msra.mxu0 0
        %897 = vmatprep.subr.bf16.mxu0 0
        %898 = vmatpush1.bf16.msra.mxu0 0
        %899 = vmatprep.subr.bf16.mxu0 0
        %900 = vmatpush1.bf16.msra.mxu0 0
        %901 = vmatprep.subr.bf16.mxu0 0
        %902 = vmatpush1.bf16.msra.mxu0 0
        %903 = vmatprep.subr.bf16.mxu0 0
        %904 = vmatpush1.bf16.msra.mxu0 0
        %905 = vmatprep.subr.bf16.mxu0 0
        %906 = vmatpush1.bf16.msra.mxu0 0
        %907 = vmatprep.subr.bf16.mxu0 0
        %908 = vmatpush1.bf16.msra.mxu0 0
        %909 = vmatprep.mubr.bf16.mxu0 0
        %910 = vmatmul.mubr.bf16.gmra.mrb[0].mxu0 %v859
        %v911 = vpop.f32.mrb[0].mxu0
        %v912 = vadd.f32 %v800, %v911
        %v913 = vpop.f32.mrb[0].mxu0
        %v914 = vadd.f32 %v800, %v913
        %v915 = vpop.f32.mrb[0].mxu0
        %v916 = vadd.f32 %v805, %v915
        %v917 = vpop.f32.mrb[0].mxu0
        %v918 = vadd.f32 %v805, %v917
        %919 = vmatprep.mubr.bf16.mxu0 0
        %920 = vmatmul.mubr.bf16.gmra.mrb[0].mxu0 %v862
        %v921 = vpop.f32.mrb[0].mxu0
        %v922 = vadd.f32 %v810, %v921
        %v923 = vpop.f32.mrb[0].mxu0
        %v924 = vadd.f32 %v810, %v923
        %v925 = vpop.f32.mrb[0].mxu0
        %v926 = vadd.f32 %v815, %v925
        %v927 = vpop.f32.mrb[0].mxu0
        %v928 = vadd.f32 %v815, %v927
        %929 = vmatprep.mubr.bf16.mxu0 0
        %930 = vmatmul.mubr.bf16.gmra.mrb[0].mxu0 %v865
        %v931 = vpop.f32.mrb[0].mxu0
        %v932 = vadd.f32 %v820, %v931
        %v933 = vpop.f32.mrb[0].mxu0
        %v934 = vadd.f32 %v820, %v933
        %v935 = vpop.f32.mrb[0].mxu0
        %v936 = vadd.f32 %v825, %v935
        %v937 = vpop.f32.mrb[0].mxu0
        %v938 = vadd.f32 %v825, %v937
        %939 = vmatprep.mubr.bf16.mxu0 0
        %940 = vmatmul.mubr.bf16.gmra.mrb[0].mxu0 %v868
        %v941 = vpop.f32.mrb[0].mxu0
        %v942 = vadd.f32 %v830, %v941
        %v943 = vpop.f32.mrb[0].mxu0
        %v944 = vadd.f32 %v830, %v943
        %v945 = vpop.f32.mrb[0].mxu0
        %v946 = vadd.f32 %v835, %v945
        %v947 = vpop.f32.mrb[0].mxu0
        %v948 = vadd.f32 %v835, %v947
        %949 = vdwg.mxu0
        %v950 = vmul.f32 %v912, 0.5
        %v951 = vmul.f32 %v914, 0.5
        %v952 = vmul.f32 %v916, 0.5
        %v953 = vmul.f32 %v918, 0.5
        %v954 = vmul.f32 %v922, 0.5
        %v955 = vmul.f32 %v924, 0.5
        %v956 = vmul.f32 %v926, 0.5
        %v957 = vmul.f32 %v928, 0.5
        %v958 = vmul.f32 %v932, 0.5
        %v959 = vmul.f32 %v934, 0.5
        %v960 = vmul.f32 %v936, 0.5
        %v961 = vmul.f32 %v938, 0.5
        %v962 = vmul.f32 %v942, 0.5
        %v963 = vmul.f32 %v944, 0.5
        %v964 = vmul.f32 %v946, 0.5
        %v965 = vmul.f32 %v948, 0.5
        %v966 = vmul.f32 %v912, 0.70710677
        %v967 = vmul.f32 %v914, 0.70710677
        %v968 = vmul.f32 %v916, 0.70710677
        %v969 = vmul.f32 %v918, 0.70710677
        %v970 = vmul.f32 %v922, 0.70710677
        %v971 = vmul.f32 %v924, 0.70710677
        %v972 = vmul.f32 %v926, 0.70710677
        %v973 = vmul.f32 %v928, 0.70710677
        %v974 = vmul.f32 %v932, 0.70710677
        %v975 = vmul.f32 %v934, 0.70710677
        %v976 = vmul.f32 %v936, 0.70710677
        %v977 = vmul.f32 %v938, 0.70710677
        %v978 = vmul.f32 %v942, 0.70710677
        %v979 = vmul.f32 %v944, 0.70710677
        %v980 = vmul.f32 %v946, 0.70710677
        %v981 = vmul.f32 %v948, 0.70710677
        %v982 = verf.f32.pop %v966
        %v983 = verf.f32.pop %v967
        %v984 = verf.f32.pop %v968
        %v985 = verf.f32.pop %v969
        %v986 = verf.f32.pop %v970
        %v987 = verf.f32.pop %v971
        %v988 = verf.f32.pop %v972
        %v989 = verf.f32.pop %v973
        %v990 = verf.f32.pop %v974
        %v991 = verf.f32.pop %v975
        %v992 = verf.f32.pop %v976
        %v993 = verf.f32.pop %v977
        %v994 = verf.f32.pop %v978
        %v995 = verf.f32.pop %v979
        %v996 = verf.f32.pop %v980
        %v997 = verf.f32.pop %v981
        %v998 = vadd.f32 %v982, 1.0
        %v999 = vadd.f32 %v983, 1.0
        %v1000 = vadd.f32 %v984, 1.0
        %v1001 = vadd.f32 %v985, 1.0
        %v1002 = vadd.f32 %v986, 1.0
        %v1003 = vadd.f32 %v987, 1.0
        %v1004 = vadd.f32 %v988, 1.0
        %v1005 = vadd.f32 %v989, 1.0
        %v1006 = vadd.f32 %v990, 1.0
        %v1007 = vadd.f32 %v991, 1.0
        %v1008 = vadd.f32 %v992, 1.0
        %v1009 = vadd.f32 %v993, 1.0
        %v1010 = vadd.f32 %v994, 1.0
        %v1011 = vadd.f32 %v995, 1.0
        %v1012 = vadd.f32 %v996, 1.0
        %v1013 = vadd.f32 %v997, 1.0
        %v1014 = vmul.f32 %v950, %v998
        %v1015 = vmul.f32 %v951, %v999
        %v1016 = vmul.f32 %v952, %v1000
        %v1017 = vmul.f32 %v953, %v1001
        %v1018 = vmul.f32 %v954, %v1002
        %v1019 = vmul.f32 %v955, %v1003
        %v1020 = vmul.f32 %v956, %v1004
        %v1021 = vmul.f32 %v957, %v1005
        %v1022 = vmul.f32 %v958, %v1006
        %v1023 = vmul.f32 %v959, %v1007
        %v1024 = vmul.f32 %v960, %v1008
        %v1025 = vmul.f32 %v961, %v1009
        %v1026 = vmul.f32 %v962, %v1010
        %v1027 = vmul.f32 %v963, %v1011
        %v1028 = vmul.f32 %v964, %v1012
        %v1029 = vmul.f32 %v965, %v1013
        %v1030 = vpack.c.bf16 %v1016, %v1014
        %v1031 = vpack.c.bf16 %v1017, %v1015
        %v1032 = vpack.c.bf16 %v1020, %v1018
        %v1033 = vpack.c.bf16 %v1021, %v1019
        %v1034 = vpack.c.bf16 %v1024, %v1022
        %v1035 = vpack.c.bf16 %v1025, %v1023
        %v1036 = vpack.c.bf16 %v1028, %v1026
        %v1037 = vpack.c.bf16 %v1029, %v1027
        %v1038 = vld [vmem:[#allocation11] sm:$0xf]
        %v1039 = vld [vmem:[#allocation13] sm:$0xff]
        %1041 = vset.pattern.permute.xlu0 0
        %1042 = vperm.xlu0 %1041, %v1039
        %v1043 = vpop.permute.xlu0 %1042
        %vm1045 = vcmask 523264
        %v1047 = vsel %vm1045, %v1038, 0
        %1049 = vmatprep.subr.bf16.mxu0 %v1031
        %1050 = vmatpush1.bf16.msra.mxu0 %v1030
        %1051 = vmatprep.subr.bf16.mxu0 %v1033
        %1052 = vmatpush1.bf16.msra.mxu0 %v1032
        %1053 = vmatprep.subr.bf16.mxu0 %v1035
        %1054 = vmatpush1.bf16.msra.mxu0 %v1034
        %1055 = vmatprep.subr.bf16.mxu0 %v1037
        %1056 = vmatpush1.bf16.msra.mxu0 %v1036
        %1057 = vmatprep.subr.bf16.mxu0 0
        %1058 = vmatpush1.bf16.msra.mxu0 0
        %1059 = vmatprep.subr.bf16.mxu0 0
        %1060 = vmatpush1.bf16.msra.mxu0 0
        %1061 = vmatprep.subr.bf16.mxu0 0
        %1062 = vmatpush1.bf16.msra.mxu0 0
        %1063 = vmatprep.subr.bf16.mxu0 0
        %1064 = vmatpush1.bf16.msra.mxu0 0
        %1065 = vmatprep.subr.bf16.mxu0 0
        %1066 = vmatpush1.bf16.msra.mxu0 0
        %1067 = vmatprep.subr.bf16.mxu0 0
        %1068 = vmatpush1.bf16.msra.mxu0 0
        %1069 = vmatprep.subr.bf16.mxu0 0
        %1070 = vmatpush1.bf16.msra.mxu0 0
        %1071 = vmatprep.subr.bf16.mxu0 0
        %1072 = vmatpush1.bf16.msra.mxu0 0
        %1073 = vmatprep.subr.bf16.mxu0 0
        %1074 = vmatpush1.bf16.msra.mxu0 0
        %1075 = vmatprep.subr.bf16.mxu0 0
        %1076 = vmatpush1.bf16.msra.mxu0 0
        %1077 = vmatprep.subr.bf16.mxu0 0
        %1078 = vmatpush1.bf16.msra.mxu0 0
        %1079 = vmatprep.subr.bf16.mxu0 0
        %1080 = vmatpush1.bf16.msra.mxu0 0
        %1081 = vmatprep.mubr.bf16.mxu0 0
        %1082 = vmatmul.mubr.bf16.gmra.mrb[0].mxu0 %v1047
        %v1083 = vpop.f32.mrb[0].mxu0
        %v1084 = vadd.f32 %v1043, %v1083
        %v1085 = vpop.f32.mrb[0].mxu0
        %v1086 = vadd.f32 %v1043, %v1085
        %v1087 = vpop.f32.mrb[0].mxu0
        %v1088 = vpop.f32.mrb[0].mxu0
        %1089 = vdwg.mxu0
        %v1090 = vcombine.high %v1084, 0.0
        %v1092 = vunpack.c.l.s4 1983009808
        %v1093 = vunpack.c.0.s8 %v1092
        %v1094 = vlaneseq
        %v1095 = vshrl.u32 %v1094, 7
        %v1096 = vsub.s32 %v1093, %v1095
        %v1097 = vrot.slane %v1084, %v1096
        %v1099 = vunpack.c.l.s4 1983009808
        %v1100 = vunpack.c.0.s8 %v1099
        %v1101 = vlaneseq
        %v1102 = vshrl.u32 %v1101, 7
        %v1103 = vsub.s32 %v1100, %v1102
        %v1104 = vrot.slane %v1090, %v1103
        %v1105 = vcombine.high %v1086, 0.0
        %v1107 = vunpack.c.l.s4 1983009808
        %v1108 = vunpack.c.0.s8 %v1107
        %v1109 = vlaneseq
        %v1110 = vshrl.u32 %v1109, 7
        %v1111 = vsub.s32 %v1108, %v1110
        %v1112 = vrot.slane %v1086, %v1111
        %v1114 = vunpack.c.l.s4 1983009808
        %v1115 = vunpack.c.0.s8 %v1114
        %v1116 = vlaneseq
        %v1117 = vshrl.u32 %v1116, 7
        %v1118 = vsub.s32 %v1115, %v1117
        %v1119 = vrot.slane %v1105, %v1118
        %v1120 = vcombine.low %v1097, %v1112
        %v1121 = vcombine.high %v1097, %v1112
        %v1123 = vunpack.c.l.s4 1934713408
        %v1124 = vunpack.c.0.s8 %v1123
        %v1125 = vlaneseq
        %v1126 = vshrl.u32 %v1125, 7
        %v1127 = vsub.s32 %v1124, %v1126
        %v1128 = vrot.slane %v1120, %v1127
        %v1130 = vunpack.c.l.s4 1934713408
        %v1131 = vunpack.c.0.s8 %v1130
        %v1132 = vlaneseq
        %v1133 = vshrl.u32 %v1132, 7
        %v1134 = vsub.s32 %v1131, %v1133
        %v1135 = vrot.slane %v1121, %v1134
        %v1136 = vcombine.low %v1104, %v1119
        %v1137 = vcombine.high %v1104, %v1119
        %v1139 = vunpack.c.l.s4 1934713408
        %v1140 = vunpack.c.0.s8 %v1139
        %v1141 = vlaneseq
        %v1142 = vshrl.u32 %v1141, 7
        %v1143 = vsub.s32 %v1140, %v1142
        %v1144 = vrot.slane %v1136, %v1143
        %v1146 = vunpack.c.l.s4 1934713408
        %v1147 = vunpack.c.0.s8 %v1146
        %v1148 = vlaneseq
        %v1149 = vshrl.u32 %v1148, 7
        %v1150 = vsub.s32 %v1147, %v1149
        %v1151 = vrot.slane %v1137, %v1150
        %v1152 = vcombine.high %v1128, 0.0
        %v1153 = vcombine.high %v1135, 0.0
        %v1154 = vcombine.high %v1144, 0.0
        %v1155 = vcombine.high %v1151, 0.0
        %v1156 = vcombine.low %v1128, %v1135
        %v1158 = vunpack.c.l.s4 1983009808
        %v1159 = vunpack.c.0.s8 %v1158
        %v1160 = vlaneseq
        %v1161 = vshrl.u32 %v1160, 7
        %v1162 = vsub.s32 %v1159, %v1161
        %v1163 = vrot.slane %v1156, %v1162
        %v1164 = vcombine.low %v1152, %v1153
        %v1166 = vunpack.c.l.s4 1983009808
        %v1167 = vunpack.c.0.s8 %v1166
        %v1168 = vlaneseq
        %v1169 = vshrl.u32 %v1168, 7
        %v1170 = vsub.s32 %v1167, %v1169
        %v1171 = vrot.slane %v1164, %v1170
        %v1172 = vcombine.low %v1144, %v1151
        %v1174 = vunpack.c.l.s4 1983009808
        %v1175 = vunpack.c.0.s8 %v1174
        %v1176 = vlaneseq
        %v1177 = vshrl.u32 %v1176, 7
        %v1178 = vsub.s32 %v1175, %v1177
        %v1179 = vrot.slane %v1172, %v1178
        %v1180 = vcombine.low %v1154, %v1155
        %v1182 = vunpack.c.l.s4 1983009808
        %v1183 = vunpack.c.0.s8 %v1182
        %v1184 = vlaneseq
        %v1185 = vshrl.u32 %v1184, 7
        %v1186 = vsub.s32 %v1183, %v1185
        %v1187 = vrot.slane %v1180, %v1186
        %v1188 = vcombine.low %v1163, %v1171
        %v1190 = vunpack.c.l.s4 1934713408
        %v1191 = vunpack.c.0.s8 %v1190
        %v1192 = vlaneseq
        %v1193 = vshrl.u32 %v1192, 7
        %v1194 = vsub.s32 %v1191, %v1193
        %v1195 = vrot.slane %v1188, %v1194
        %v1196 = vcombine.low %v1179, %v1187
        %v1198 = vunpack.c.l.s4 1934713408
        %v1199 = vunpack.c.0.s8 %v1198
        %v1200 = vlaneseq
        %v1201 = vshrl.u32 %v1200, 7
        %v1202 = vsub.s32 %v1199, %v1201
        %v1203 = vrot.slane %v1196, %v1202
        %v1204 = vcombine.low %v1195, %v1203
        %v1205 = vcombine.high %v1195, %v1203
        %v1206 = vadd.f32 %v620, %v1204
        %v1207 = vadd.f32 %v621, %v1205
        %v1208 = vld [vmem:[#allocation14] sm:$0x1]
        %v1209 = vld [vmem:[#allocation16] sm:$0x1]
        %1210 = vadd.xlane.f32.xlu0 %v1206
        %v1211 = vpop.xlane.xlu0 %1210
        %1212 = vadd.xlane.f32.xlu0 %v1207
        %v1213 = vpop.xlane.xlu0 %1212
        %v1214 = vmul.f32 %v1211, %v628
        %v1215 = vmul.f32 %v1213, %v628
        %v1216 = vsub.f32 %v1206, %v1214
        %v1217 = vsub.f32 %v1207, %v1215
        %v1218 = vmul.f32 %v1216, %v1216
        %v1219 = vmul.f32 %v1217, %v1217
        %1220 = vadd.xlane.f32.xlu0 %v1218
        %v1221 = vpop.xlane.xlu0 %1220
        %1222 = vadd.xlane.f32.xlu0 %v1219
        %v1223 = vpop.xlane.xlu0 %1222
        %v1224 = vmul.f32 %v1221, %v628
        %v1225 = vmul.f32 %v1223, %v628
        %v1226 = vadd.f32 %v1224, 1e-05
        %v1227 = vadd.f32 %v1225, 1e-05
        %v1228 = vrsqrt.pop %v1226
        %v1229 = vrsqrt.pop %v1227
        %v1230 = vmul.f32 %v1216, %v1228
        %v1231 = vmul.f32 %v1217, %v1229
        %v1233 = vlaneseq
        %v1234 = vshrl.u32 %v1233, 7
        %v1235 = vsub.s32 0, %v1234
        %v1236 = vrot.slane %v1208, %v1235
        %v1238 = vmul.f32 %v1230, %v1236
        %v1239 = vmul.f32 %v1231, %v1236
        %v1241 = vlaneseq
        %v1242 = vshrl.u32 %v1241, 7
        %v1243 = vsub.s32 0, %v1242
        %v1244 = vrot.slane %v1209, %v1243
        %v1246 = vadd.f32 %v1238, %v1244
        %v1247 = vadd.f32 %v1239, %v1244
        %v1248 = vpack.c.bf16 %v1247, %v1246
        %v1249 = vld [vmem:[#allocation17] sm:$0xff]
        %v1250 = vld [vmem:[#allocation17 + $0x8] sm:$0xff]
        %v1251 = vld [vmem:[#allocation17 + $0x10] sm:$0xff]
        %v1252 = vld [vmem:[#allocation17 + $0x18] sm:$0xff]
        %v1253 = vld [vmem:[#allocation17 + $0x20] sm:$0xff]
        %v1254 = vld [vmem:[#allocation17 + $0x28] sm:$0xff]
        %v1255 = vld [vmem:[#allocation17 + $0x30] sm:$0xff]
        %v1256 = vld [vmem:[#allocation17 + $0x38] sm:$0xff]
        %v1257 = vld [vmem:[#allocation17 + $0x40] sm:$0xff]
        %v1258 = vld [vmem:[#allocation17 + $0x48] sm:$0xff]
        %v1259 = vld [vmem:[#allocation17 + $0x50] sm:$0xff]
        %v1260 = vld [vmem:[#allocation17 + $0x58] sm:$0xff]
        %v1261 = vld [vmem:[#allocation17 + $0x60] sm:$0xff]
        %v1262 = vld [vmem:[#allocation17 + $0x68] sm:$0xff]
        %v1263 = vld [vmem:[#allocation17 + $0x70] sm:$0xff]
        %v1264 = vld [vmem:[#allocation17 + $0x78] sm:$0xff]
        %v1265 = vld [vmem:[#allocation17 + $0x80] sm:$0xff]
        %v1266 = vld [vmem:[#allocation17 + $0x88] sm:$0xff]
        %v1267 = vld [vmem:[#allocation17 + $0x90] sm:$0xff]
        %v1268 = vld [vmem:[#allocation17 + $0x98] sm:$0xff]
        %v1269 = vld [vmem:[#allocation17 + $0xa0] sm:$0xff]
        %v1270 = vld [vmem:[#allocation17 + $0xa8] sm:$0xff]
        %v1271 = vld [vmem:[#allocation17 + $0xb0] sm:$0xff]
        %v1272 = vld [vmem:[#allocation17 + $0xb8] sm:$0xff]
        %v1273 = vld [vmem:[#allocation17 + $0xc0] sm:$0xff]
        %v1274 = vld [vmem:[#allocation17 + $0xc8] sm:$0xff]
        %v1275 = vld [vmem:[#allocation17 + $0xd0] sm:$0xff]
        %v1276 = vld [vmem:[#allocation17 + $0xd8] sm:$0xff]
        %v1277 = vld [vmem:[#allocation17 + $0xe0] sm:$0xff]
        %v1278 = vld [vmem:[#allocation17 + $0xe8] sm:$0xff]
        %v1279 = vld [vmem:[#allocation17 + $0xf0] sm:$0xff]
        %v1280 = vld [vmem:[#allocation17 + $0xf8] sm:$0xff]
        %v1281 = vld [vmem:[#allocation19] sm:$0xf]
        %v1283 = vlaneseq
        %v1284 = vshrl.u32 %v1283, 7
        %v1285 = vsub.s32 0, %v1284
        %v1286 = vrot.slane %v1281, %v1285
        %v1287 = vlaneseq
        %v1288 = vshrl.u32 %v1287, 7
        %v1289 = vsub.s32 1, %v1288
        %v1290 = vrot.slane %v1281, %v1289
        %v1291 = vlaneseq
        %v1292 = vshrl.u32 %v1291, 7
        %v1293 = vsub.s32 2, %v1292
        %v1294 = vrot.slane %v1281, %v1293
        %v1295 = vlaneseq
        %v1296 = vshrl.u32 %v1295, 7
        %v1297 = vsub.s32 3, %v1296
        %v1298 = vrot.slane %v1281, %v1297
        %v1335 = vunpack.c.l.b16 %v1249
        %v1336 = vunpack.c.h.b16 %v1249
        %v1337 = vunpack.c.l.b16 %v1250
        %v1338 = vunpack.c.h.b16 %v1250
        %v1339 = vunpack.c.l.b16 %v1251
        %v1340 = vunpack.c.h.b16 %v1251
        %v1341 = vunpack.c.l.b16 %v1252
        %v1342 = vunpack.c.h.b16 %v1252
        %v1343 = vunpack.c.l.b16 %v1253
        %v1344 = vunpack.c.h.b16 %v1253
        %v1345 = vunpack.c.l.b16 %v1254
        %v1346 = vunpack.c.h.b16 %v1254
        %v1347 = vunpack.c.l.b16 %v1255
        %v1348 = vunpack.c.h.b16 %v1255
        %v1349 = vunpack.c.l.b16 %v1256
        %v1350 = vunpack.c.h.b16 %v1256
        %v1351 = vunpack.c.l.b16 %v1257
        %v1352 = vunpack.c.h.b16 %v1257
        %v1353 = vunpack.c.l.b16 %v1258
        %v1354 = vunpack.c.h.b16 %v1258
        %v1355 = vunpack.c.l.b16 %v1259
        %v1356 = vunpack.c.h.b16 %v1259
        %v1357 = vunpack.c.l.b16 %v1260
        %v1358 = vunpack.c.h.b16 %v1260
        %v1359 = vunpack.c.l.b16 %v1261
        %v1360 = vunpack.c.h.b16 %v1261
        %v1361 = vunpack.c.l.b16 %v1262
        %v1362 = vunpack.c.h.b16 %v1262
        %v1363 = vunpack.c.l.b16 %v1263
        %v1364 = vunpack.c.h.b16 %v1263
        %v1365 = vunpack.c.l.b16 %v1264
        %v1366 = vunpack.c.h.b16 %v1264
        %v1367 = vunpack.c.l.b16 %v1265
        %v1368 = vunpack.c.h.b16 %v1265
        %v1369 = vunpack.c.l.b16 %v1266
        %v1370 = vunpack.c.h.b16 %v1266
        %v1371 = vunpack.c.l.b16 %v1267
        %v1372 = vunpack.c.h.b16 %v1267
        %v1373 = vunpack.c.l.b16 %v1268
        %v1374 = vunpack.c.h.b16 %v1268
        %v1375 = vunpack.c.l.b16 %v1269
        %v1376 = vunpack.c.h.b16 %v1269
        %v1377 = vunpack.c.l.b16 %v1270
        %v1378 = vunpack.c.h.b16 %v1270
        %v1379 = vunpack.c.l.b16 %v1271
        %v1380 = vunpack.c.h.b16 %v1271
        %v1381 = vunpack.c.l.b16 %v1272
        %v1382 = vunpack.c.h.b16 %v1272
        %v1383 = vunpack.c.l.b16 %v1273
        %v1384 = vunpack.c.h.b16 %v1273
        %v1385 = vunpack.c.l.b16 %v1274
        %v1386 = vunpack.c.h.b16 %v1274
        %v1387 = vunpack.c.l.b16 %v1275
        %v1388 = vunpack.c.h.b16 %v1275
        %v1389 = vunpack.c.l.b16 %v1276
        %v1390 = vunpack.c.h.b16 %v1276
        %v1391 = vunpack.c.l.b16 %v1277
        %v1392 = vunpack.c.h.b16 %v1277
        %v1393 = vunpack.c.l.b16 %v1278
        %v1394 = vunpack.c.h.b16 %v1278
        %v1395 = vunpack.c.l.b16 %v1279
        %v1396 = vunpack.c.h.b16 %v1279
        %v1397 = vunpack.c.l.b16 %v1280
        %v1398 = vunpack.c.h.b16 %v1280
        %v1399 = vpack.c.b16 %v1339, %v1335
        %v1400 = vpack.c.b16 %v1340, %v1336
        %v1401 = vpack.c.b16 %v1341, %v1337
        %v1402 = vpack.c.b16 %v1342, %v1338
        %v1403 = vpack.c.b16 %v1347, %v1343
        %v1404 = vpack.c.b16 %v1348, %v1344
        %v1405 = vpack.c.b16 %v1349, %v1345
        %v1406 = vpack.c.b16 %v1350, %v1346
        %v1407 = vpack.c.b16 %v1355, %v1351
        %v1408 = vpack.c.b16 %v1356, %v1352
        %v1409 = vpack.c.b16 %v1357, %v1353
        %v1410 = vpack.c.b16 %v1358, %v1354
        %v1411 = vpack.c.b16 %v1363, %v1359
        %v1412 = vpack.c.b16 %v1364, %v1360
        %v1413 = vpack.c.b16 %v1365, %v1361
        %v1414 = vpack.c.b16 %v1366, %v1362
        %v1415 = vpack.c.b16 %v1371, %v1367
        %v1416 = vpack.c.b16 %v1372, %v1368
        %v1417 = vpack.c.b16 %v1373, %v1369
        %v1418 = vpack.c.b16 %v1374, %v1370
        %v1419 = vpack.c.b16 %v1379, %v1375
        %v1420 = vpack.c.b16 %v1380, %v1376
        %v1421 = vpack.c.b16 %v1381, %v1377
        %v1422 = vpack.c.b16 %v1382, %v1378
        %v1423 = vpack.c.b16 %v1387, %v1383
        %v1424 = vpack.c.b16 %v1388, %v1384
        %v1425 = vpack.c.b16 %v1389, %v1385
        %v1426 = vpack.c.b16 %v1390, %v1386
        %v1427 = vpack.c.b16 %v1395, %v1391
        %v1428 = vpack.c.b16 %v1396, %v1392
        %v1429 = vpack.c.b16 %v1397, %v1393
        %v1430 = vpack.c.b16 %v1398, %v1394
        %1463 = vmatprep.subr.bf16.mxu0 %v1400
        %1464 = vmatpush1.bf16.msra.mxu0 %v1399
        %1465 = vmatprep.subr.bf16.mxu0 %v1404
        %1466 = vmatpush1.bf16.msra.mxu0 %v1403
        %1467 = vmatprep.subr.bf16.mxu0 %v1408
        %1468 = vmatpush1.bf16.msra.mxu0 %v1407
        %1469 = vmatprep.subr.bf16.mxu0 %v1412
        %1470 = vmatpush1.bf16.msra.mxu0 %v1411
        %1471 = vmatprep.subr.bf16.mxu0 %v1416
        %1472 = vmatpush1.bf16.msra.mxu0 %v1415
        %1473 = vmatprep.subr.bf16.mxu0 %v1420
        %1474 = vmatpush1.bf16.msra.mxu0 %v1419
        %1475 = vmatprep.subr.bf16.mxu0 %v1424
        %1476 = vmatpush1.bf16.msra.mxu0 %v1423
        %1477 = vmatprep.subr.bf16.mxu0 %v1428
        %1478 = vmatpush1.bf16.msra.mxu0 %v1427
        %1479 = vmatprep.subr.bf16.mxu0 0
        %1480 = vmatpush1.bf16.msra.mxu0 0
        %1481 = vmatprep.subr.bf16.mxu0 0
        %1482 = vmatpush1.bf16.msra.mxu0 0
        %1483 = vmatprep.subr.bf16.mxu0 0
        %1484 = vmatpush1.bf16.msra.mxu0 0
        %1485 = vmatprep.subr.bf16.mxu0 0
        %1486 = vmatpush1.bf16.msra.mxu0 0
        %1487 = vmatprep.subr.bf16.mxu0 0
        %1488 = vmatpush1.bf16.msra.mxu0 0
        %1489 = vmatprep.subr.bf16.mxu0 0
        %1490 = vmatpush1.bf16.msra.mxu0 0
        %1491 = vmatprep.subr.bf16.mxu0 0
        %1492 = vmatpush1.bf16.msra.mxu0 0
        %1493 = vmatprep.subr.bf16.mxu0 0
        %1494 = vmatpush1.bf16.msra.mxu0 0
        %1495 = vmatprep.mubr.bf16.mxu0 0
        %1496 = vmatmul.mubr.bf16.gmra.mrb[0].mxu0 %v1248
        %v1497 = vpop.f32.mrb[0].mxu0
        %v1498 = vadd.f32 %v1286, %v1497
        %v1499 = vpop.f32.mrb[0].mxu0
        %v1500 = vadd.f32 %v1290, %v1499
        %v1501 = vpop.f32.mrb[0].mxu0
        %v1502 = vadd.f32 %v1286, %v1501
        %v1503 = vpop.f32.mrb[0].mxu0
        %v1504 = vadd.f32 %v1290, %v1503
        %1505 = vdwg.mxu0
        %1506 = vmatprep.subr.bf16.mxu0 %v1402
        %1507 = vmatpush1.bf16.msra.mxu0 %v1401
        %1508 = vmatprep.subr.bf16.mxu0 %v1406
        %1509 = vmatpush1.bf16.msra.mxu0 %v1405
        %1510 = vmatprep.subr.bf16.mxu0 %v1410
        %1511 = vmatpush1.bf16.msra.mxu0 %v1409
        %1512 = vmatprep.subr.bf16.mxu0 %v1414
        %1513 = vmatpush1.bf16.msra.mxu0 %v1413
        %1514 = vmatprep.subr.bf16.mxu0 %v1418
        %1515 = vmatpush1.bf16.msra.mxu0 %v1417
        %1516 = vmatprep.subr.bf16.mxu0 %v1422
        %1517 = vmatpush1.bf16.msra.mxu0 %v1421
        %1518 = vmatprep.subr.bf16.mxu0 %v1426
        %1519 = vmatpush1.bf16.msra.mxu0 %v1425
        %1520 = vmatprep.subr.bf16.mxu0 %v1430
        %1521 = vmatpush1.bf16.msra.mxu0 %v1429
        %1522 = vmatprep.subr.bf16.mxu0 0
        %1523 = vmatpush1.bf16.msra.mxu0 0
        %1524 = vmatprep.subr.bf16.mxu0 0
        %1525 = vmatpush1.bf16.msra.mxu0 0
        %1526 = vmatprep.subr.bf16.mxu0 0
        %1527 = vmatpush1.bf16.msra.mxu0 0
        %1528 = vmatprep.subr.bf16.mxu0 0
        %1529 = vmatpush1.bf16.msra.mxu0 0
        %1530 = vmatprep.subr.bf16.mxu0 0
        %1531 = vmatpush1.bf16.msra.mxu0 0
        %1532 = vmatprep.subr.bf16.mxu0 0
        %1533 = vmatpush1.bf16.msra.mxu0 0
        %1534 = vmatprep.subr.bf16.mxu0 0
        %1535 = vmatpush1.bf16.msra.mxu0 0
        %1536 = vmatprep.subr.bf16.mxu0 0
        %1537 = vmatpush1.bf16.msra.mxu0 0
        %1538 = vmatprep.mubr.bf16.mxu0 0
        %1539 = vmatmul.mubr.bf16.gmra.mrb[0].mxu0 %v1248
        %v1540 = vpop.f32.mrb[0].mxu0
        %v1541 = vadd.f32 %v1294, %v1540
        %v1542 = vpop.f32.mrb[0].mxu0
        %v1543 = vadd.f32 %v1298, %v1542
        %v1544 = vpop.f32.mrb[0].mxu0
        %v1545 = vadd.f32 %v1294, %v1544
        %v1546 = vpop.f32.mrb[0].mxu0
        %v1547 = vadd.f32 %v1298, %v1546
        %1548 = vdwg.mxu0
        %v1549 = vmul.f32 %v1498, 0.5
        %v1550 = vmul.f32 %v1500, 0.5
        %v1551 = vmul.f32 %v1541, 0.5
        %v1552 = vmul.f32 %v1543, 0.5
        %v1553 = vmul.f32 %v1502, 0.5
        %v1554 = vmul.f32 %v1504, 0.5
        %v1555 = vmul.f32 %v1545, 0.5
        %v1556 = vmul.f32 %v1547, 0.5
        %v1557 = vmul.f32 %v1498, 0.70710677
        %v1558 = vmul.f32 %v1500, 0.70710677
        %v1559 = vmul.f32 %v1541, 0.70710677
        %v1560 = vmul.f32 %v1543, 0.70710677
        %v1561 = vmul.f32 %v1502, 0.70710677
        %v1562 = vmul.f32 %v1504, 0.70710677
        %v1563 = vmul.f32 %v1545, 0.70710677
        %v1564 = vmul.f32 %v1547, 0.70710677
        %v1565 = verf.f32.pop %v1557
        %v1566 = verf.f32.pop %v1558
        %v1567 = verf.f32.pop %v1559
        %v1568 = verf.f32.pop %v1560
        %v1569 = verf.f32.pop %v1561
        %v1570 = verf.f32.pop %v1562
        %v1571 = verf.f32.pop %v1563
        %v1572 = verf.f32.pop %v1564
        %v1573 = vadd.f32 %v1565, 1.0
        %v1574 = vadd.f32 %v1566, 1.0
        %v1575 = vadd.f32 %v1567, 1.0
        %v1576 = vadd.f32 %v1568, 1.0
        %v1577 = vadd.f32 %v1569, 1.0
        %v1578 = vadd.f32 %v1570, 1.0
        %v1579 = vadd.f32 %v1571, 1.0
        %v1580 = vadd.f32 %v1572, 1.0
        %v1581 = vmul.f32 %v1549, %v1573
        %v1582 = vmul.f32 %v1550, %v1574
        %v1583 = vmul.f32 %v1551, %v1575
        %v1584 = vmul.f32 %v1552, %v1576
        %v1585 = vmul.f32 %v1553, %v1577
        %v1586 = vmul.f32 %v1554, %v1578
        %v1587 = vmul.f32 %v1555, %v1579
        %v1588 = vmul.f32 %v1556, %v1580
        %v1589 = vpack.c.bf16 %v1585, %v1581
        %v1590 = vpack.c.bf16 %v1586, %v1582
        %v1591 = vpack.c.bf16 %v1587, %v1583
        %v1592 = vpack.c.bf16 %v1588, %v1584
        %v1593 = vld [vmem:[#allocation20] sm:$0xf]
        %v1594 = vld [vmem:[#allocation20 + $0x4] sm:$0xf]
        %v1595 = vld [vmem:[#allocation20 + $0x8] sm:$0xf]
        %v1596 = vld [vmem:[#allocation20 + $0xc] sm:$0xf]
        %v1597 = vld [vmem:[#allocation20 + $0x10] sm:$0xf]
        %v1598 = vld [vmem:[#allocation20 + $0x14] sm:$0xf]
        %v1599 = vld [vmem:[#allocation20 + $0x18] sm:$0xf]
        %v1600 = vld [vmem:[#allocation20 + $0x1c] sm:$0xf]
        %v1601 = vld [vmem:[#allocation20 + $0x20] sm:$0xf]
        %v1602 = vld [vmem:[#allocation20 + $0x24] sm:$0xf]
        %v1603 = vld [vmem:[#allocation20 + $0x28] sm:$0xf]
        %v1604 = vld [vmem:[#allocation20 + $0x2c] sm:$0xf]
        %v1605 = vld [vmem:[#allocation20 + $0x30] sm:$0xf]
        %v1606 = vld [vmem:[#allocation20 + $0x34] sm:$0xf]
        %v1607 = vld [vmem:[#allocation20 + $0x38] sm:$0xf]
        %v1608 = vld [vmem:[#allocation20 + $0x3c] sm:$0xf]
        %v1609 = vld [vmem:[#allocation20 + $0x40] sm:$0xf]
        %v1610 = vld [vmem:[#allocation20 + $0x44] sm:$0xf]
        %v1611 = vld [vmem:[#allocation20 + $0x48] sm:$0xf]
        %v1612 = vld [vmem:[#allocation20 + $0x4c] sm:$0xf]
        %v1613 = vld [vmem:[#allocation20 + $0x50] sm:$0xf]
        %v1614 = vld [vmem:[#allocation20 + $0x54] sm:$0xf]
        %v1615 = vld [vmem:[#allocation20 + $0x58] sm:$0xf]
        %v1616 = vld [vmem:[#allocation20 + $0x5c] sm:$0xf]
        %v1617 = vld [vmem:[#allocation20 + $0x60] sm:$0xf]
        %v1618 = vld [vmem:[#allocation20 + $0x64] sm:$0xf]
        %v1619 = vld [vmem:[#allocation20 + $0x68] sm:$0xf]
        %v1620 = vld [vmem:[#allocation20 + $0x6c] sm:$0xf]
        %v1621 = vld [vmem:[#allocation20 + $0x70] sm:$0xf]
        %v1622 = vld [vmem:[#allocation20 + $0x74] sm:$0xf]
        %v1623 = vld [vmem:[#allocation20 + $0x78] sm:$0xf]
        %v1624 = vld [vmem:[#allocation20 + $0x7c] sm:$0xf]
        %v1625 = vld [vmem:[#allocation20 + $0x80] sm:$0xf]
        %v1626 = vld [vmem:[#allocation20 + $0x84] sm:$0xf]
        %v1627 = vld [vmem:[#allocation20 + $0x88] sm:$0xf]
        %v1628 = vld [vmem:[#allocation20 + $0x8c] sm:$0xf]
        %v1629 = vld [vmem:[#allocation20 + $0x90] sm:$0xf]
        %v1630 = vld [vmem:[#allocation20 + $0x94] sm:$0xf]
        %v1631 = vld [vmem:[#allocation20 + $0x98] sm:$0xf]
        %v1632 = vld [vmem:[#allocation20 + $0x9c] sm:$0xf]
        %v1633 = vld [vmem:[#allocation20 + $0xa0] sm:$0xf]
        %v1634 = vld [vmem:[#allocation20 + $0xa4] sm:$0xf]
        %v1635 = vld [vmem:[#allocation20 + $0xa8] sm:$0xf]
        %v1636 = vld [vmem:[#allocation20 + $0xac] sm:$0xf]
        %v1637 = vld [vmem:[#allocation20 + $0xb0] sm:$0xf]
        %v1638 = vld [vmem:[#allocation20 + $0xb4] sm:$0xf]
        %v1639 = vld [vmem:[#allocation20 + $0xb8] sm:$0xf]
        %v1640 = vld [vmem:[#allocation20 + $0xbc] sm:$0xf]
        %v1641 = vld [vmem:[#allocation20 + $0xc0] sm:$0xf]
        %v1642 = vld [vmem:[#allocation20 + $0xc4] sm:$0xf]
        %v1643 = vld [vmem:[#allocation20 + $0xc8] sm:$0xf]
        %v1644 = vld [vmem:[#allocation20 + $0xcc] sm:$0xf]
        %v1645 = vld [vmem:[#allocation20 + $0xd0] sm:$0xf]
        %v1646 = vld [vmem:[#allocation20 + $0xd4] sm:$0xf]
        %v1647 = vld [vmem:[#allocation20 + $0xd8] sm:$0xf]
        %v1648 = vld [vmem:[#allocation20 + $0xdc] sm:$0xf]
        %v1649 = vld [vmem:[#allocation20 + $0xe0] sm:$0xf]
        %v1650 = vld [vmem:[#allocation20 + $0xe4] sm:$0xf]
        %v1651 = vld [vmem:[#allocation20 + $0xe8] sm:$0xf]
        %v1652 = vld [vmem:[#allocation20 + $0xec] sm:$0xf]
        %v1653 = vld [vmem:[#allocation20 + $0xf0] sm:$0xf]
        %v1654 = vld [vmem:[#allocation20 + $0xf4] sm:$0xf]
        %v1655 = vld [vmem:[#allocation20 + $0xf8] sm:$0xf]
        %v1656 = vld [vmem:[#allocation20 + $0xfc] sm:$0xf]
        %v1657 = vld [vmem:[#allocation22] sm:$0x1]
        %v1659 = vlaneseq
        %v1660 = vshrl.u32 %v1659, 7
        %v1661 = vsub.s32 0, %v1660
        %v1662 = vrot.slane %v1657, %v1661
        %v1728 = vunpack.c.l.b16 %v1593
        %v1729 = vunpack.c.l.b16 %v1594
        %v1730 = vunpack.c.l.b16 %v1595
        %v1731 = vunpack.c.l.b16 %v1596
        %v1732 = vunpack.c.l.b16 %v1597
        %v1733 = vunpack.c.l.b16 %v1598
        %v1734 = vunpack.c.l.b16 %v1599
        %v1735 = vunpack.c.l.b16 %v1600
        %v1736 = vunpack.c.l.b16 %v1601
        %v1737 = vunpack.c.l.b16 %v1602
        %v1738 = vunpack.c.l.b16 %v1603
        %v1739 = vunpack.c.l.b16 %v1604
        %v1740 = vunpack.c.l.b16 %v1605
        %v1741 = vunpack.c.l.b16 %v1606
        %v1742 = vunpack.c.l.b16 %v1607
        %v1743 = vunpack.c.l.b16 %v1608
        %v1744 = vunpack.c.l.b16 %v1609
        %v1745 = vunpack.c.l.b16 %v1610
        %v1746 = vunpack.c.l.b16 %v1611
        %v1747 = vunpack.c.l.b16 %v1612
        %v1748 = vunpack.c.l.b16 %v1613
        %v1749 = vunpack.c.l.b16 %v1614
        %v1750 = vunpack.c.l.b16 %v1615
        %v1751 = vunpack.c.l.b16 %v1616
        %v1752 = vunpack.c.l.b16 %v1617
        %v1753 = vunpack.c.l.b16 %v1618
        %v1754 = vunpack.c.l.b16 %v1619
        %v1755 = vunpack.c.l.b16 %v1620
        %v1756 = vunpack.c.l.b16 %v1621
        %v1757 = vunpack.c.l.b16 %v1622
        %v1758 = vunpack.c.l.b16 %v1623
        %v1759 = vunpack.c.l.b16 %v1624
        %v1760 = vunpack.c.l.b16 %v1625
        %v1761 = vunpack.c.l.b16 %v1626
        %v1762 = vunpack.c.l.b16 %v1627
        %v1763 = vunpack.c.l.b16 %v1628
        %v1764 = vunpack.c.l.b16 %v1629
        %v1765 = vunpack.c.l.b16 %v1630
        %v1766 = vunpack.c.l.b16 %v1631
        %v1767 = vunpack.c.l.b16 %v1632
        %v1768 = vunpack.c.l.b16 %v1633
        %v1769 = vunpack.c.l.b16 %v1634
        %v1770 = vunpack.c.l.b16 %v1635
        %v1771 = vunpack.c.l.b16 %v1636
        %v1772 = vunpack.c.l.b16 %v1637
        %v1773 = vunpack.c.l.b16 %v1638
        %v1774 = vunpack.c.l.b16 %v1639
        %v1775 = vunpack.c.l.b16 %v1640
        %v1776 = vunpack.c.l.b16 %v1641
        %v1777 = vunpack.c.l.b16 %v1642
        %v1778 = vunpack.c.l.b16 %v1643
        %v1779 = vunpack.c.l.b16 %v1644
        %v1780 = vunpack.c.l.b16 %v1645
        %v1781 = vunpack.c.l.b16 %v1646
        %v1782 = vunpack.c.l.b16 %v1647
        %v1783 = vunpack.c.l.b16 %v1648
        %v1784 = vunpack.c.l.b16 %v1649
        %v1785 = vunpack.c.l.b16 %v1650
        %v1786 = vunpack.c.l.b16 %v1651
        %v1787 = vunpack.c.l.b16 %v1652
        %v1788 = vunpack.c.l.b16 %v1653
        %v1789 = vunpack.c.l.b16 %v1654
        %v1790 = vunpack.c.l.b16 %v1655
        %v1791 = vunpack.c.l.b16 %v1656
        %v1792 = vpack.c.b16 %v1729, %v1728
        %v1793 = vpack.c.b16 %v1731, %v1730
        %v1794 = vpack.c.b16 %v1733, %v1732
        %v1795 = vpack.c.b16 %v1735, %v1734
        %v1796 = vpack.c.b16 %v1737, %v1736
        %v1797 = vpack.c.b16 %v1739, %v1738
        %v1798 = vpack.c.b16 %v1741, %v1740
        %v1799 = vpack.c.b16 %v1743, %v1742
        %v1800 = vpack.c.b16 %v1745, %v1744
        %v1801 = vpack.c.b16 %v1747, %v1746
        %v1802 = vpack.c.b16 %v1749, %v1748
        %v1803 = vpack.c.b16 %v1751, %v1750
        %v1804 = vpack.c.b16 %v1753, %v1752
        %v1805 = vpack.c.b16 %v1755, %v1754
        %v1806 = vpack.c.b16 %v1757, %v1756
        %v1807 = vpack.c.b16 %v1759, %v1758
        %v1808 = vpack.c.b16 %v1761, %v1760
        %v1809 = vpack.c.b16 %v1763, %v1762
        %v1810 = vpack.c.b16 %v1765, %v1764
        %v1811 = vpack.c.b16 %v1767, %v1766
        %v1812 = vpack.c.b16 %v1769, %v1768
        %v1813 = vpack.c.b16 %v1771, %v1770
        %v1814 = vpack.c.b16 %v1773, %v1772
        %v1815 = vpack.c.b16 %v1775, %v1774
        %v1816 = vpack.c.b16 %v1777, %v1776
        %v1817 = vpack.c.b16 %v1779, %v1778
        %v1818 = vpack.c.b16 %v1781, %v1780
        %v1819 = vpack.c.b16 %v1783, %v1782
        %v1820 = vpack.c.b16 %v1785, %v1784
        %v1821 = vpack.c.b16 %v1787, %v1786
        %v1822 = vpack.c.b16 %v1789, %v1788
        %v1823 = vpack.c.b16 %v1791, %v1790
        %1856 = vmatprep.subr.bf16.mxu0 0
        %1857 = vmatpush1.bf16.msra.mxu0 %v1792
        %1858 = vmatprep.subr.bf16.mxu0 0
        %1859 = vmatpush1.bf16.msra.mxu0 %v1793
        %1860 = vmatprep.subr.bf16.mxu0 0
        %1861 = vmatpush1.bf16.msra.mxu0 %v1794
        %1862 = vmatprep.subr.bf16.mxu0 0
        %1863 = vmatpush1.bf16.msra.mxu0 %v1795
        %1864 = vmatprep.subr.bf16.mxu0 0
        %1865 = vmatpush1.bf16.msra.mxu0 %v1796
        %1866 = vmatprep.subr.bf16.mxu0 0
        %1867 = vmatpush1.bf16.msra.mxu0 %v1797
        %1868 = vmatprep.subr.bf16.mxu0 0
        %1869 = vmatpush1.bf16.msra.mxu0 %v1798
        %1870 = vmatprep.subr.bf16.mxu0 0
        %1871 = vmatpush1.bf16.msra.mxu0 %v1799
        %1872 = vmatprep.subr.bf16.mxu0 0
        %1873 = vmatpush1.bf16.msra.mxu0 %v1800
        %1874 = vmatprep.subr.bf16.mxu0 0
        %1875 = vmatpush1.bf16.msra.mxu0 %v1801
        %1876 = vmatprep.subr.bf16.mxu0 0
        %1877 = vmatpush1.bf16.msra.mxu0 %v1802
        %1878 = vmatprep.subr.bf16.mxu0 0
        %1879 = vmatpush1.bf16.msra.mxu0 %v1803
        %1880 = vmatprep.subr.bf16.mxu0 0
        %1881 = vmatpush1.bf16.msra.mxu0 %v1804
        %1882 = vmatprep.subr.bf16.mxu0 0
        %1883 = vmatpush1.bf16.msra.mxu0 %v1805
        %1884 = vmatprep.subr.bf16.mxu0 0
        %1885 = vmatpush1.bf16.msra.mxu0 %v1806
        %1886 = vmatprep.subr.bf16.mxu0 0
        %1887 = vmatpush1.bf16.msra.mxu0 %v1807
        %1888 = vmatprep.mubr.bf16.mxu0 %v1590
        %1889 = vmatmul.mubr.bf16.gmra.mrb[0].mxu0 %v1589
        %v1890 = vpop.f32.mrb[0].mxu0
        %v1891 = vadd.f32 %v1662, %v1890
        %v1892 = vpop.f32.mrb[0].mxu0
        %v1893 = vpop.f32.mrb[0].mxu0
        %v1894 = vadd.f32 %v1662, %v1893
        %v1895 = vpop.f32.mrb[0].mxu0
        %1896 = vdwg.mxu0
        %1897 = vmatprep.subr.bf16.mxu0 0
        %1898 = vmatpush1.bf16.msra.mxu0 %v1808
        %1899 = vmatprep.subr.bf16.mxu0 0
        %1900 = vmatpush1.bf16.msra.mxu0 %v1809
        %1901 = vmatprep.subr.bf16.mxu0 0
        %1902 = vmatpush1.bf16.msra.mxu0 %v1810
        %1903 = vmatprep.subr.bf16.mxu0 0
        %1904 = vmatpush1.bf16.msra.mxu0 %v1811
        %1905 = vmatprep.subr.bf16.mxu0 0
        %1906 = vmatpush1.bf16.msra.mxu0 %v1812
        %1907 = vmatprep.subr.bf16.mxu0 0
        %1908 = vmatpush1.bf16.msra.mxu0 %v1813
        %1909 = vmatprep.subr.bf16.mxu0 0
        %1910 = vmatpush1.bf16.msra.mxu0 %v1814
        %1911 = vmatprep.subr.bf16.mxu0 0
        %1912 = vmatpush1.bf16.msra.mxu0 %v1815
        %1913 = vmatprep.subr.bf16.mxu0 0
        %1914 = vmatpush1.bf16.msra.mxu0 %v1816
        %1915 = vmatprep.subr.bf16.mxu0 0
        %1916 = vmatpush1.bf16.msra.mxu0 %v1817
        %1917 = vmatprep.subr.bf16.mxu0 0
        %1918 = vmatpush1.bf16.msra.mxu0 %v1818
        %1919 = vmatprep.subr.bf16.mxu0 0
        %1920 = vmatpush1.bf16.msra.mxu0 %v1819
        %1921 = vmatprep.subr.bf16.mxu0 0
        %1922 = vmatpush1.bf16.msra.mxu0 %v1820
        %1923 = vmatprep.subr.bf16.mxu0 0
        %1924 = vmatpush1.bf16.msra.mxu0 %v1821
        %1925 = vmatprep.subr.bf16.mxu0 0
        %1926 = vmatpush1.bf16.msra.mxu0 %v1822
        %1927 = vmatprep.subr.bf16.mxu0 0
        %1928 = vmatpush1.bf16.msra.mxu0 %v1823
        %1929 = vmatprep.mubr.bf16.mxu0 %v1592
        %1930 = vmatmul.mubr.bf16.gmra.mrb[0].mxu0 %v1591
        %v1931 = vpop.f32.mrb[0].mxu0
        %v1932 = vadd.f32 %v1891, %v1931
        %v1933 = vpop.f32.mrb[0].mxu0
        %v1934 = vpop.f32.mrb[0].mxu0
        %v1935 = vadd.f32 %v1894, %v1934
        %v1936 = vpop.f32.mrb[0].mxu0
        %1937 = vdwg.mxu0
        %v1938 = vadd.f32 %v1206, %v1932
        %v1939 = vadd.f32 %v1207, %v1935
        %1940 = vst [vmem:[%s616] sm:$0xff] %v1938
        %1941 = vst [vmem:[%s616 + $0x8] sm:$0xff] %v1939
        %s1942 = sand.u32 %s322, 1
        %s1943 = scalar_lea.sflag [#allocation4], %s1942
        %s1944 = sand.u32 %s322, 1
        %s1945 = smul.addr %s1944, 16
        %s1946 = scalar_lea.vmem [#allocation23], %s1945
        // Predicated region
        $region125: #{_lambda_.1} parent=71 // pred_check
          %p1947 = pneg %p332
        $region126: #{_lambda_.1} parent=71 // pred_check_branch
          %1949 = sbr.rel (%p1947) target = $region128
        $region127: #{_lambda_.1} parent=71 // pred_region
          %s1950 = smul.u32 2, %s36
          %s1952 = ssub.s32 256, 256
          %1953 = vsyncadd %s1943, %s1952
          %s1954 = smul.addr %s1950, 128
          %s1955 = scalar_lea.hbm %s13, %s1954
          %s1956 = sshll.u32 %s1946, 4
          %s1957 = int_to_ptr.vmem [resolvable:$true] %s1956
          %1962 = dma.vmem_to_hbm [thread:$0]  %s1957, 256, %s1955, %s1943, 128, 128, 8
        $region128: #{_lambda_.1} parent=71 // pred_fallthru
          _
      $region72: #{_lambda_.1} parent=5 // pred_fallthru
        _
      %p1963 = scmp.le.s32.totalorder 2, %s31
      // Predicated region
      $region129: #{_lambda_.1} parent=5 // pred_check
        %p1964 = pneg %p1963
      $region130: #{_lambda_.1} parent=5 // pred_check_branch
        %1966 = sbr.rel (%p1964) target = $region132
      $region131: #{_lambda_.1} parent=5 // pred_region
        %s1967 = ssub.s32 %s31, 2
        // Predicated region
        $region133: #{_lambda_.1} parent=131 // pred_check
          %p1968 = pneg %p338
        $region134: #{_lambda_.1} parent=131 // pred_check_branch
          %1970 = sbr.rel (%p1968) target = $region136
        $region135: #{_lambda_.1} parent=131 // pred_region
          %s1971 = sand.u32 %s323, 1
          %s1972 = scalar_lea.sflag [#allocation4], %s1971
          %s1973 = sand.u32 %s323, 1
          %s1974 = smul.addr %s1973, 16
          %s1975 = scalar_lea.vmem [#allocation23], %s1974
          %1976 = dma.done %s1972, 256
        $region136: #{_lambda_.1} parent=131 // pred_fallthru
          _
      $region132: #{_lambda_.1} parent=5 // pred_fallthru
        _
    $region6: #{_lambda_.1} parent=1 // loop_footer
      %s35 = sadd.s32 1, %s31
    $region7: #{_lambda_.1} parent=1 // loop_footer_branch
      %30 = sbr.rel target = $region3
    $region8: #{_lambda_.1} parent=1 // loop_exit
      _
    %1977 = vsyncpa [#allocation3], 1
    %s1978 = scalar_lea.sflag [#allocation3], 1
    %1979 = vsyncpa %s1978, 1
    %1980 = vsyncpa [#allocation6], 1
    %1981 = vsyncpa [#allocation9], 1
    %1982 = vsyncpa [#allocation12], 1
    %1983 = vsyncpa [#allocation15], 1
    %1984 = vsyncpa [#allocation18], 1
    %1985 = vsyncpa [#allocation21], 1
    %1986 = vsyncpa [#allocation4], 1
    %s1987 = scalar_lea.sflag [#allocation4], 1
    %1988 = vsyncpa %s1987, 1

// kernel: _lambda_.1
$region0: #{_lambda_.1}
  #allocation0 [shape = 'u32[]', space=smem, size = 0x4, offset = 0x4, fixed_abs, tag = 'smem constant byte address 0x4 - core index']
  #allocation1 [shape = 'u32[144,128]{1,0:T(1,128)}', space=vmem, size = 0x12000, scoped, tag = 'internal scratch']
  %s0 = inlined_call_operand.hbm [shape: f32[4,8,128], index: 0, kind: input, shape index: {}]
  %s1 = inlined_call_operand.hbm [shape: f32[1,128], index: 1, kind: input, shape index: {}]
  %s2 = inlined_call_operand.hbm [shape: f32[1,128], index: 2, kind: input, shape index: {}]
  %s3 = inlined_call_operand.hbm [shape: bf16[64,8], index: 3, kind: input, shape index: {}]
  %s4 = inlined_call_operand.hbm [shape: f32[64,1], index: 4, kind: input, shape index: {}]
  %s5 = inlined_call_operand.hbm [shape: bf16[8,64], index: 5, kind: input, shape index: {}]
  %s6 = inlined_call_operand.hbm [shape: f32[8,1], index: 6, kind: input, shape index: {}]
  %s7 = inlined_call_operand.hbm [shape: f32[1,128], index: 7, kind: input, shape index: {}]
  %s8 = inlined_call_operand.hbm [shape: f32[1,128], index: 8, kind: input, shape index: {}]
  %s9 = inlined_call_operand.hbm [shape: bf16[128,512], index: 9, kind: input, shape index: {}]
  %s10 = inlined_call_operand.hbm [shape: f32[1,512], index: 10, kind: input, shape index: {}]
  %s11 = inlined_call_operand.hbm [shape: bf16[512,128], index: 11, kind: input, shape index: {}]
  %s12 = inlined_call_operand.hbm [shape: f32[1,128], index: 12, kind: input, shape index: {}]
  %s13 = inlined_call_operand.hbm [shape: f32[4,8,128], index: 13, kind: output, shape index: {}]
  %s14 = sld [smem:[#allocation0]]
  $region137: #{_lambda_.1} parent=0
    _
  %s16 = ssub.s32 1, %s14
  %s17 = scalar_select 0, %s16, %s14
  $region1: #{_lambda_.1} parent=0
    #allocation2 [shape = 'u8[16384]{0}', space=vmem, size = 0x4000, scoped, tag = 'input window, operand 0']
    #allocation3 [shape = 's32[2]{0}', space=sflag, size = 0x8, scoped, tag = 'scoped memory for _lambda_.1']
    #allocation4 [shape = 's32[2]{0}', space=sflag, size = 0x8, scoped, tag = 'scoped memory for _lambda_.1']
    #allocation5 [shape = 'u8[512]{0}', space=vmem, size = 0x400, scoped, tag = 'input window, operand 1, single buffered']
    #allocation6 [shape = 's32[1]{0}', space=sflag, size = 0x4, scoped, tag = 'scoped memory for _lambda_.1']
    #allocation7 [shape = 'u8[512]{0}', space=vmem, size = 0x400, scoped, tag = 'input window, operand 2, single buffered']
    #allocation8 [shape = 'u8[16384]{0}', space=vmem, size = 0x4000, scoped, tag = 'input window, operand 3, single buffered']
    #allocation9 [shape = 's32[1]{0}', space=sflag, size = 0x4, scoped, tag = 'scoped memory for _lambda_.1']
    #allocation10 [shape = 'u8[32768]{0}', space=vmem, size = 0x8000, scoped, tag = 'input window, operand 4, single buffered']
    #allocation11 [shape = 'u8[2048]{0}', space=vmem, size = 0x800, scoped, tag = 'input window, operand 5, single buffered']
    #allocation12 [shape = 's32[1]{0}', space=sflag, size = 0x4, scoped, tag = 'scoped memory for _lambda_.1']
    #allocation13 [shape = 'u8[4096]{0}', space=vmem, size = 0x1000, scoped, tag = 'input window, operand 6, single buffered']
    #allocation14 [shape = 'u8[512]{0}', space=vmem, size = 0x400, scoped, tag = 'input window, operand 7, single buffered']
    #allocation15 [shape = 's32[1]{0}', space=sflag, size = 0x4, scoped, tag = 'scoped memory for _lambda_.1']
    #allocation16 [shape = 'u8[512]{0}', space=vmem, size = 0x400, scoped, tag = 'input window, operand 8, single buffered']
    #allocation17 [shape = 'u8[131072]{0}', space=vmem, size = 0x20000, scoped, tag = 'input window, operand 9, single buffered']
    #allocation18 [shape = 's32[1]{0}', space=sflag, size = 0x4, scoped, tag = 'scoped memory for _lambda_.1']
    #allocation19 [shape = 'u8[2048]{0}', space=vmem, size = 0x800, scoped, tag = 'input window, operand 10, single buffered']
    #allocation20 [shape = 'u8[131072]{0}', space=vmem, size = 0x20000, scoped, tag = 'input window, operand 11, single buffered']
    #allocation21 [shape = 's32[1]{0}', space=sflag, size = 0x4, scoped, tag = 'scoped memory for _lambda_.1']
    #allocation22 [shape = 'u8[512]{0}', space=vmem, size = 0x400, scoped, tag = 'input window, operand 12, single buffered']
    #allocation23 [shape = 'u8[16384]{0}', space=vmem, size = 0x4000, scoped, tag = 'output window, operand 0']
    %18 = vsyncpa [#allocation3], 0
    %s19 = scalar_lea.sflag [#allocation3], 1
    %20 = vsyncpa %s19, 0
    %21 = vsyncpa [#allocation6], 0
    %22 = vsyncpa [#allocation9], 0
    %23 = vsyncpa [#allocation12], 0
    %24 = vsyncpa [#allocation15], 0
    %25 = vsyncpa [#allocation18], 0
    %26 = vsyncpa [#allocation21], 0
    %27 = vsyncpa [#allocation4], 0
    %s28 = scalar_lea.sflag [#allocation4], 1
    %29 = vsyncpa %s28, 0
    loop: start=0, step=1, limit=4
    $region2: #{_lambda_.1} parent=1 // loop_pre_header
      _
    $region3: #{_lambda_.1} parent=1 // loop_header
      %s31 = sphi 0, %s35
      %p32 = scmp.ge.s32.totalorder %s31, 4
      %s41 = sphi 0, %s43
      %s44 = sphi 0, %s41
      %s45 = sphi 0, %s44
      %s61 = sphi 0, %s45
      %s65 = sphi 0, %s65
      %s67 = sphi 0, %s65
      %s68 = sphi 0, %s67
      %s82 = sphi 0, %s68
      %s86 = sphi 0, %s86
      %s88 = sphi 0, %s86
      %s89 = sphi 0, %s88
      %s103 = sphi 0, %s89
      %s107 = sphi 0, %s107
      %s109 = sphi 0, %s107
      %s110 = sphi 0, %s109
      %s124 = sphi 0, %s110
      %s128 = sphi 0, %s128
      %s130 = sphi 0, %s128
      %s131 = sphi 0, %s130
      %s145 = sphi 0, %s131
      %s149 = sphi 0, %s149
      %s151 = sphi 0, %s149
      %s152 = sphi 0, %s151
      %s166 = sphi 0, %s152
      %s170 = sphi 0, %s170
      %s172 = sphi 0, %s170
      %s173 = sphi 0, %s172
      %s187 = sphi 0, %s173
      %s191 = sphi 0, %s191
      %s193 = sphi 0, %s191
      %s194 = sphi 0, %s193
      %s208 = sphi 0, %s194
      %s212 = sphi 0, %s212
      %s214 = sphi 0, %s212
      %s215 = sphi 0, %s214
      %s229 = sphi 0, %s215
      %s233 = sphi 0, %s233
      %s235 = sphi 0, %s233
      %s236 = sphi 0, %s235
      %s250 = sphi 0, %s236
      %s254 = sphi 0, %s254
      %s256 = sphi 0, %s254
      %s257 = sphi 0, %s256
      %s271 = sphi 0, %s257
      %s275 = sphi 0, %s275
      %s277 = sphi 0, %s275
      %s278 = sphi 0, %s277
      %s292 = sphi 0, %s278
      %s296 = sphi 0, %s296
      %s298 = sphi 0, %s296
      %s299 = sphi 0, %s298
      %s313 = sphi 0, %s299
      %s319 = sphi 0, %s321
      %s322 = sphi 0, %s319
      %s323 = sphi 0, %s322
      %s339 = sphi 0, %s323
    $region4: #{_lambda_.1} parent=1 // loop_header_branch
      %34 = sbr.rel (%p32) target = $region8
    $region5: #{_lambda_.1} parent=1 // loop_body
      %s36 = ssub.s32 %s31, 1
      %s37 = ssub.s32 %s31, 2
      %s38 = sadd.s32 %s31, 1
      %s39 = ssub.s32 %s31, %s38
      %p40 = scmp.eq.s32.totalorder %s39, 0
      %s42 = sadd.s32 %s41, 1
      %s43 = scalar_select %p40, %s41, %s42
      %p46 = pneg %p40
      %p47 = scmp.eq.s32.totalorder %s31, 1
      %p48 = por %p46, %p47
      %p49 = scmp.ne.s32.totalorder %s41, %s44
      %p50 = scmp.eq.s32.totalorder %s31, 0
      %p51 = por %p49, %p50
      %p52 = scmp.ne.s32.totalorder %s41, %s44
      %p53 = scmp.eq.s32.totalorder %s36, 1
      %p54 = por %p52, %p53
      %p55 = scmp.ne.s32.totalorder %s44, %s45
      %p56 = scmp.eq.s32.totalorder %s36, 0
      %p57 = por %p55, %p56
      %p58 = scmp.ne.s32.totalorder %s44, %s45
      %p59 = scmp.eq.s32.totalorder %s37, 1
      %p60 = por %p58, %p59
      %p62 = scmp.ne.s32.totalorder %s45, %s61
      %p63 = scmp.eq.s32.totalorder %s37, 0
      %p64 = por %p62, %p63
      %s66 = sadd.s32 %s65, 1
      %p69 = scmp.eq.s32.totalorder %s31, 1
      %p70 = scmp.ne.s32.totalorder %s65, %s67
      %p71 = scmp.eq.s32.totalorder %s31, 0
      %p72 = por %p70, %p71
      %p73 = scmp.ne.s32.totalorder %s65, %s67
      %p74 = scmp.eq.s32.totalorder %s36, 1
      %p75 = por %p73, %p74
      %p76 = scmp.ne.s32.totalorder %s67, %s68
      %p77 = scmp.eq.s32.totalorder %s36, 0
      %p78 = por %p76, %p77
      %p79 = scmp.ne.s32.totalorder %s67, %s68
      %p80 = scmp.eq.s32.totalorder %s37, 1
      %p81 = por %p79, %p80
      %p83 = scmp.ne.s32.totalorder %s68, %s82
      %p84 = scmp.eq.s32.totalorder %s37, 0
      %p85 = por %p83, %p84
      %s87 = sadd.s32 %s86, 1
      %p90 = scmp.eq.s32.totalorder %s31, 1
      %p91 = scmp.ne.s32.totalorder %s86, %s88
      %p92 = scmp.eq.s32.totalorder %s31, 0
      %p93 = por %p91, %p92
      %p94 = scmp.ne.s32.totalorder %s86, %s88
      %p95 = scmp.eq.s32.totalorder %s36, 1
      %p96 = por %p94, %p95
      %p97 = scmp.ne.s32.totalorder %s88, %s89
      %p98 = scmp.eq.s32.totalorder %s36, 0
      %p99 = por %p97, %p98
      %p100 = scmp.ne.s32.totalorder %s88, %s89
      %p101 = scmp.eq.s32.totalorder %s37, 1
      %p102 = por %p100, %p101
      %p104 = scmp.ne.s32.totalorder %s89, %s103
      %p105 = scmp.eq.s32.totalorder %s37, 0
      %p106 = por %p104, %p105
      %s108 = sadd.s32 %s107, 1
      %p111 = scmp.eq.s32.totalorder %s31, 1
      %p112 = scmp.ne.s32.totalorder %s107, %s109
      %p113 = scmp.eq.s32.totalorder %s31, 0
      %p114 = por %p112, %p113
      %p115 = scmp.ne.s32.totalorder %s107, %s109
      %p116 = scmp.eq.s32.totalorder %s36, 1
      %p117 = por %p115, %p116
      %p118 = scmp.ne.s32.totalorder %s109, %s110
      %p119 = scmp.eq.s32.totalorder %s36, 0
      %p120 = por %p118, %p119
      %p121 = scmp.ne.s32.totalorder %s109, %s110
      %p122 = scmp.eq.s32.totalorder %s37, 1
      %p123 = por %p121, %p122
      %p125 = scmp.ne.s32.totalorder %s110, %s124
      %p126 = scmp.eq.s32.totalorder %s37, 0
      %p127 = por %p125, %p126
      %s129 = sadd.s32 %s128, 1
      %p132 = scmp.eq.s32.totalorder %s31, 1
      %p133 = scmp.ne.s32.totalorder %s128, %s130
      %p134 = scmp.eq.s32.totalorder %s31, 0
      %p135 = por %p133, %p134
      %p136 = scmp.ne.s32.totalorder %s128, %s130
      %p137 = scmp.eq.s32.totalorder %s36, 1
      %p138 = por %p136, %p137
      %p139 = scmp.ne.s32.totalorder %s130, %s131
      %p140 = scmp.eq.s32.totalorder %s36, 0
      %p141 = por %p139, %p140
      %p142 = scmp.ne.s32.totalorder %s130, %s131
      %p143 = scmp.eq.s32.totalorder %s37, 1
      %p144 = por %p142, %p143
      %p146 = scmp.ne.s32.totalorder %s131, %s145
      %p147 = scmp.eq.s32.totalorder %s37, 0
      %p148 = por %p146, %p147
      %s150 = sadd.s32 %s149, 1
      %p153 = scmp.eq.s32.totalorder %s31, 1
      %p154 = scmp.ne.s32.totalorder %s149, %s151
      %p155 = scmp.eq.s32.totalorder %s31, 0
      %p156 = por %p154, %p155
      %p157 = scmp.ne.s32.totalorder %s149, %s151
      %p158 = scmp.eq.s32.totalorder %s36, 1
      %p159 = por %p157, %p158
      %p160 = scmp.ne.s32.totalorder %s151, %s152
      %p161 = scmp.eq.s32.totalorder %s36, 0
      %p162 = por %p160, %p161
      %p163 = scmp.ne.s32.totalorder %s151, %s152
      %p164 = scmp.eq.s32.totalorder %s37, 1
      %p165 = por %p163, %p164
      %p167 = scmp.ne.s32.totalorder %s152, %s166
      %p168 = scmp.eq.s32.totalorder %s37, 0
      %p169 = por %p167, %p168
      %s171 = sadd.s32 %s170, 1
      %p174 = scmp.eq.s32.totalorder %s31, 1
      %p175 = scmp.ne.s32.totalorder %s170, %s172
      %p176 = scmp.eq.s32.totalorder %s31, 0
      %p177 = por %p175, %p176
      %p178 = scmp.ne.s32.totalorder %s170, %s172
      %p179 = scmp.eq.s32.totalorder %s36, 1
      %p180 = por %p178, %p179
      %p181 = scmp.ne.s32.totalorder %s172, %s173
      %p182 = scmp.eq.s32.totalorder %s36, 0
      %p183 = por %p181, %p182
      %p184 = scmp.ne.s32.totalorder %s172, %s173
      %p185 = scmp.eq.s32.totalorder %s37, 1
      %p186 = por %p184, %p185
      %p188 = scmp.ne.s32.totalorder %s173, %s187
      %p189 = scmp.eq.s32.totalorder %s37, 0
      %p190 = por %p188, %p189
      %s192 = sadd.s32 %s191, 1
      %p195 = scmp.eq.s32.totalorder %s31, 1
      %p196 = scmp.ne.s32.totalorder %s191, %s193
      %p197 = scmp.eq.s32.totalorder %s31, 0
      %p198 = por %p196, %p197
      %p199 = scmp.ne.s32.totalorder %s191, %s193
      %p200 = scmp.eq.s32.totalorder %s36, 1
      %p201 = por %p199, %p200
      %p202 = scmp.ne.s32.totalorder %s193, %s194
      %p203 = scmp.eq.s32.totalorder %s36, 0
      %p204 = por %p202, %p203
      %p205 = scmp.ne.s32.totalorder %s193, %s194
      %p206 = scmp.eq.s32.totalorder %s37, 1
      %p207 = por %p205, %p206
      %p209 = scmp.ne.s32.totalorder %s194, %s208
      %p210 = scmp.eq.s32.totalorder %s37, 0
      %p211 = por %p209, %p210
      %s213 = sadd.s32 %s212, 1
      %p216 = scmp.eq.s32.totalorder %s31, 1
      %p217 = scmp.ne.s32.totalorder %s212, %s214
      %p218 = scmp.eq.s32.totalorder %s31, 0
      %p219 = por %p217, %p218
      %p220 = scmp.ne.s32.totalorder %s212, %s214
      %p221 = scmp.eq.s32.totalorder %s36, 1
      %p222 = por %p220, %p221
      %p223 = scmp.ne.s32.totalorder %s214, %s215
      %p224 = scmp.eq.s32.totalorder %s36, 0
      %p225 = por %p223, %p224
      %p226 = scmp.ne.s32.totalorder %s214, %s215
      %p227 = scmp.eq.s32.totalorder %s37, 1
      %p228 = por %p226, %p227
      %p230 = scmp.ne.s32.totalorder %s215, %s229
      %p231 = scmp.eq.s32.totalorder %s37, 0
      %p232 = por %p230, %p231
      %s234 = sadd.s32 %s233, 1
      %p237 = scmp.eq.s32.totalorder %s31, 1
      %p238 = scmp.ne.s32.totalorder %s233, %s235
      %p239 = scmp.eq.s32.totalorder %s31, 0
      %p240 = por %p238, %p239
      %p241 = scmp.ne.s32.totalorder %s233, %s235
      %p242 = scmp.eq.s32.totalorder %s36, 1
      %p243 = por %p241, %p242
      %p244 = scmp.ne.s32.totalorder %s235, %s236
      %p245 = scmp.eq.s32.totalorder %s36, 0
      %p246 = por %p244, %p245
      %p247 = scmp.ne.s32.totalorder %s235, %s236
      %p248 = scmp.eq.s32.totalorder %s37, 1
      %p249 = por %p247, %p248
      %p251 = scmp.ne.s32.totalorder %s236, %s250
      %p252 = scmp.eq.s32.totalorder %s37, 0
      %p253 = por %p251, %p252
      %s255 = sadd.s32 %s254, 1
      %p258 = scmp.eq.s32.totalorder %s31, 1
      %p259 = scmp.ne.s32.totalorder %s254, %s256
      %p260 = scmp.eq.s32.totalorder %s31, 0
      %p261 = por %p259, %p260
      %p262 = scmp.ne.s32.totalorder %s254, %s256
      %p263 = scmp.eq.s32.totalorder %s36, 1
      %p264 = por %p262, %p263
      %p265 = scmp.ne.s32.totalorder %s256, %s257
      %p266 = scmp.eq.s32.totalorder %s36, 0
      %p267 = por %p265, %p266
      %p268 = scmp.ne.s32.totalorder %s256, %s257
      %p269 = scmp.eq.s32.totalorder %s37, 1
      %p270 = por %p268, %p269
      %p272 = scmp.ne.s32.totalorder %s257, %s271
      %p273 = scmp.eq.s32.totalorder %s37, 0
      %p274 = por %p272, %p273
      %s276 = sadd.s32 %s275, 1
      %p279 = scmp.eq.s32.totalorder %s31, 1
      %p280 = scmp.ne.s32.totalorder %s275, %s277
      %p281 = scmp.eq.s32.totalorder %s31, 0
      %p282 = por %p280, %p281
      %p283 = scmp.ne.s32.totalorder %s275, %s277
      %p284 = scmp.eq.s32.totalorder %s36, 1
      %p285 = por %p283, %p284
      %p286 = scmp.ne.s32.totalorder %s277, %s278
      %p287 = scmp.eq.s32.totalorder %s36, 0
      %p288 = por %p286, %p287
      %p289 = scmp.ne.s32.totalorder %s277, %s278
      %p290 = scmp.eq.s32.totalorder %s37, 1
      %p291 = por %p289, %p290
      %p293 = scmp.ne.s32.totalorder %s278, %s292
      %p294 = scmp.eq.s32.totalorder %s37, 0
      %p295 = por %p293, %p294
      %s297 = sadd.s32 %s296, 1
      %p300 = scmp.eq.s32.totalorder %s31, 1
      %p301 = scmp.ne.s32.totalorder %s296, %s298
      %p302 = scmp.eq.s32.totalorder %s31, 0
      %p303 = por %p301, %p302
      %p304 = scmp.ne.s32.totalorder %s296, %s298
      %p305 = scmp.eq.s32.totalorder %s36, 1
      %p306 = por %p304, %p305
      %p307 = scmp.ne.s32.totalorder %s298, %s299
      %p308 = scmp.eq.s32.totalorder %s36, 0
      %p309 = por %p307, %p308
      %p310 = scmp.ne.s32.totalorder %s298, %s299
      %p311 = scmp.eq.s32.totalorder %s37, 1
      %p312 = por %p310, %p311
      %p314 = scmp.ne.s32.totalorder %s299, %s313
      %p315 = scmp.eq.s32.totalorder %s37, 0
      %p316 = por %p314, %p315
      %s317 = ssub.s32 %s31, %s38
      %p318 = scmp.eq.s32.totalorder %s317, 0
      %s320 = sadd.s32 %s319, 1
      %s321 = scalar_select %p318, %s319, %s320
      %p324 = pneg %p318
      %p325 = scmp.eq.s32.totalorder %s31, 1
      %p326 = por %p324, %p325
      %p327 = scmp.ne.s32.totalorder %s319, %s322
      %p328 = scmp.eq.s32.totalorder %s31, 0
      %p329 = por %p327, %p328
      %p330 = scmp.ne.s32.totalorder %s319, %s322
      %p331 = scmp.eq.s32.totalorder %s36, 1
      %p332 = por %p330, %p331
      %p333 = scmp.ne.s32.totalorder %s322, %s323
      %p334 = scmp.eq.s32.totalorder %s36, 0
      %p335 = por %p333, %p334
      %p336 = scmp.ne.s32.totalorder %s322, %s323
      %p337 = scmp.eq.s32.totalorder %s37, 1
      %p338 = por %p336, %p337
      %p340 = scmp.ne.s32.totalorder %s323, %s339
      %p341 = scmp.eq.s32.totalorder %s37, 0
      %p342 = por %p340, %p341
      %p343 = scmp.le.s32.totalorder 1, %s31
      %p344 = scmp.lt.s32.totalorder %s31, 3
      %p345 = pnand %p343, %p344
      %p346 = pneg %p345
      // Predicated region
      $region9: #{_lambda_.1} parent=5 // pred_check
        _
      $region10: #{_lambda_.1} parent=5 // pred_check_branch
        %348 = sbr.rel (%p345) target = $region12
      $region11: #{_lambda_.1} parent=5 // pred_region
        %s349 = ssub.s32 %s31, 1
        // Predicated region
        $region13: #{_lambda_.1} parent=11 // pred_check
          %p350 = pneg %p78
        $region14: #{_lambda_.1} parent=11 // pred_check_branch
          %352 = sbr.rel (%p350) target = $region16
        $region15: #{_lambda_.1} parent=11 // pred_region
          %s354 = ssub.s32 16, 16
          %355 = vsyncadd [#allocation6], %s354
          %s357 = sshll.u32 [#allocation5], 4
          %s358 = int_to_ptr.vmem [resolvable:$true] %s357
          %360 = dma.hbm_to_vmem [thread:$0]  %s1, 16, %s358, [#allocation6]
        $region16: #{_lambda_.1} parent=11 // pred_fallthru
          _
        // Predicated region
        $region17: #{_lambda_.1} parent=11 // pred_check
          %p361 = pneg %p99
        $region18: #{_lambda_.1} parent=11 // pred_check_branch
          %363 = sbr.rel (%p361) target = $region20
        $region19: #{_lambda_.1} parent=11 // pred_region
          %s365 = ssub.s32 16, 16
          %366 = vsyncadd [#allocation6], %s365
          %s368 = sshll.u32 [#allocation7], 4
          %s369 = int_to_ptr.vmem [resolvable:$true] %s368
          %371 = dma.hbm_to_vmem [thread:$0]  %s2, 16, %s369, [#allocation6]
        $region20: #{_lambda_.1} parent=11 // pred_fallthru
          _
        // Predicated region
        $region21: #{_lambda_.1} parent=11 // pred_check
          %p372 = pneg %p120
        $region22: #{_lambda_.1} parent=11 // pred_check_branch
          %374 = sbr.rel (%p372) target = $region24
        $region23: #{_lambda_.1} parent=11 // pred_region
          %s376 = ssub.s32 512, 512
          %377 = vsyncadd [#allocation9], %s376
          %s378 = sshll.u32 [#allocation8], 4
          %s379 = int_to_ptr.vmem [resolvable:$true] %s378
          %384 = dma.hbm_to_vmem [thread:$0]  %s3, 512, %s379, [#allocation9], 64, 64, 4
        $region24: #{_lambda_.1} parent=11 // pred_fallthru
          _
        // Predicated region
        $region25: #{_lambda_.1} parent=11 // pred_check
          %p385 = pneg %p141
        $region26: #{_lambda_.1} parent=11 // pred_check_branch
          %387 = sbr.rel (%p385) target = $region28
        $region27: #{_lambda_.1} parent=11 // pred_region
          %s389 = ssub.s32 1024, 1024
          %390 = vsyncadd [#allocation9], %s389
          %s391 = sshll.u32 [#allocation10], 4
          %s392 = int_to_ptr.vmem [resolvable:$true] %s391
          %397 = dma.hbm_to_vmem [thread:$0]  %s4, 1024, %s392, [#allocation9], 128, 128, 8
        $region28: #{_lambda_.1} parent=11 // pred_fallthru
          _
        // Predicated region
        $region29: #{_lambda_.1} parent=11 // pred_check
          %p398 = pneg %p162
        $region30: #{_lambda_.1} parent=11 // pred_check_branch
          %400 = sbr.rel (%p398) target = $region32
        $region31: #{_lambda_.1} parent=11 // pred_region
          %s402 = ssub.s32 64, 64
          %403 = vsyncadd [#allocation12], %s402
          %s405 = sshll.u32 [#allocation11], 4
          %s406 = int_to_ptr.vmem [resolvable:$true] %s405
          %408 = dma.hbm_to_vmem [thread:$0]  %s5, 64, %s406, [#allocation12]
        $region32: #{_lambda_.1} parent=11 // pred_fallthru
          _
        // Predicated region
        $region33: #{_lambda_.1} parent=11 // pred_check
          %p409 = pneg %p183
        $region34: #{_lambda_.1} parent=11 // pred_check_branch
          %411 = sbr.rel (%p409) target = $region36
        $region35: #{_lambda_.1} parent=11 // pred_region
          %s413 = ssub.s32 128, 128
          %414 = vsyncadd [#allocation12], %s413
          %s416 = sshll.u32 [#allocation13], 4
          %s417 = int_to_ptr.vmem [resolvable:$true] %s416
          %419 = dma.hbm_to_vmem [thread:$0]  %s6, 128, %s417, [#allocation12]
        $region36: #{_lambda_.1} parent=11 // pred_fallthru
          _
        // Predicated region
        $region37: #{_lambda_.1} parent=11 // pred_check
          %p420 = pneg %p204
        $region38: #{_lambda_.1} parent=11 // pred_check_branch
          %422 = sbr.rel (%p420) target = $region40
        $region39: #{_lambda_.1} parent=11 // pred_region
          %s424 = ssub.s32 16, 16
          %425 = vsyncadd [#allocation15], %s424
          %s427 = sshll.u32 [#allocation14], 4
          %s428 = int_to_ptr.vmem [resolvable:$true] %s427
          %430 = dma.hbm_to_vmem [thread:$0]  %s7, 16, %s428, [#allocation15]
        $region40: #{_lambda_.1} parent=11 // pred_fallthru
          _
        // Predicated region
        $region41: #{_lambda_.1} parent=11 // pred_check
          %p431 = pneg %p225
        $region42: #{_lambda_.1} parent=11 // pred_check_branch
          %433 = sbr.rel (%p431) target = $region44
        $region43: #{_lambda_.1} parent=11 // pred_region
          %s435 = ssub.s32 16, 16
          %436 = vsyncadd [#allocation15], %s435
          %s438 = sshll.u32 [#allocation16], 4
          %s439 = int_to_ptr.vmem [resolvable:$true] %s438
          %441 = dma.hbm_to_vmem [thread:$0]  %s8, 16, %s439, [#allocation15]
        $region44: #{_lambda_.1} parent=11 // pred_fallthru
          _
        // Predicated region
        $region45: #{_lambda_.1} parent=11 // pred_check
          %p442 = pneg %p246
        $region46: #{_lambda_.1} parent=11 // pred_check_branch
          %444 = sbr.rel (%p442) target = $region48
        $region47: #{_lambda_.1} parent=11 // pred_region
          %s446 = ssub.s32 4096, 4096
          %447 = vsyncadd [#allocation18], %s446
          %s448 = sshll.u32 [#allocation17], 4
          %s449 = int_to_ptr.vmem [resolvable:$true] %s448
          %454 = dma.hbm_to_vmem [thread:$0]  %s9, 4096, %s449, [#allocation18], 256, 256, 16
        $region48: #{_lambda_.1} parent=11 // pred_fallthru
          _
        // Predicated region
        $region49: #{_lambda_.1} parent=11 // pred_check
          %p455 = pneg %p267
        $region50: #{_lambda_.1} parent=11 // pred_check_branch
          %457 = sbr.rel (%p455) target = $region52
        $region51: #{_lambda_.1} parent=11 // pred_region
          %s459 = ssub.s32 64, 64
          %460 = vsyncadd [#allocation18], %s459
          %s462 = sshll.u32 [#allocation19], 4
          %s463 = int_to_ptr.vmem [resolvable:$true] %s462
          %465 = dma.hbm_to_vmem [thread:$0]  %s10, 64, %s463, [#allocation18]
        $region52: #{_lambda_.1} parent=11 // pred_fallthru
          _
        // Predicated region
        $region53: #{_lambda_.1} parent=11 // pred_check
          %p466 = pneg %p288
        $region54: #{_lambda_.1} parent=11 // pred_check_branch
          %468 = sbr.rel (%p466) target = $region56
        $region55: #{_lambda_.1} parent=11 // pred_region
          %s470 = ssub.s32 4096, 4096
          %471 = vsyncadd [#allocation21], %s470
          %s472 = sshll.u32 [#allocation20], 4
          %s473 = int_to_ptr.vmem [resolvable:$true] %s472
          %478 = dma.hbm_to_vmem [thread:$0]  %s11, 4096, %s473, [#allocation21], 64, 64, 4
        $region56: #{_lambda_.1} parent=11 // pred_fallthru
          _
        // Predicated region
        $region57: #{_lambda_.1} parent=11 // pred_check
          %p479 = pneg %p309
        $region58: #{_lambda_.1} parent=11 // pred_check_branch
          %481 = sbr.rel (%p479) target = $region60
        $region59: #{_lambda_.1} parent=11 // pred_region
          %s483 = ssub.s32 16, 16
          %484 = vsyncadd [#allocation21], %s483
          %s486 = sshll.u32 [#allocation22], 4
          %s487 = int_to_ptr.vmem [resolvable:$true] %s486
          %489 = dma.hbm_to_vmem [thread:$0]  %s12, 16, %s487, [#allocation21]
        $region60: #{_lambda_.1} parent=11 // pred_fallthru
          _
      $region12: #{_lambda_.1} parent=5 // pred_fallthru
        _
      %p490 = scmp.lt.s32.totalorder %s31, 2
      // Predicated region
      $region61: #{_lambda_.1} parent=5 // pred_check
        %p491 = pneg %p490
      $region62: #{_lambda_.1} parent=5 // pred_check_branch
        %493 = sbr.rel (%p491) target = $region64
      $region63: #{_lambda_.1} parent=5 // pred_region
        // Predicated region
        $region65: #{_lambda_.1} parent=63 // pred_check
          %p494 = pneg %p51
        $region66: #{_lambda_.1} parent=63 // pred_check_branch
          %496 = sbr.rel (%p494) target = $region68
        $region67: #{_lambda_.1} parent=63 // pred_region
          %s497 = sand.u32 %s41, 1
          %s498 = scalar_lea.sflag [#allocation3], %s497
          %s499 = sand.u32 %s41, 1
          %s500 = smul.addr %s499, 16
          %s501 = scalar_lea.vmem [#allocation2], %s500
          %s502 = smul.u32 2, %s31
          %s504 = ssub.s32 256, 256
          %505 = vsyncadd %s498, %s504
          %s506 = smul.addr %s502, 128
          %s507 = scalar_lea.hbm %s0, %s506
          %s508 = sshll.u32 %s501, 4
          %s509 = int_to_ptr.vmem [resolvable:$true] %s508
          %514 = dma.hbm_to_vmem [thread:$0]  %s507, 256, %s509, %s498, 128, 128, 8
        $region68: #{_lambda_.1} parent=63 // pred_fallthru
          _
      $region64: #{_lambda_.1} parent=5 // pred_fallthru
        _
      %p515 = scmp.le.s32.totalorder 1, %s31
      %p516 = scmp.lt.s32.totalorder %s31, 3
      %p517 = pnand %p515, %p516
      %p518 = pneg %p517
      // Predicated region
      $region69: #{_lambda_.1} parent=5 // pred_check
        _
      $region70: #{_lambda_.1} parent=5 // pred_check_branch
        %520 = sbr.rel (%p517) target = $region72
      $region71: #{_lambda_.1} parent=5 // pred_region
        %s521 = ssub.s32 %s31, 1
        %s522 = sand.u32 %s44, 1
        %s523 = scalar_lea.sflag [#allocation3], %s522
        %s524 = sand.u32 %s44, 1
        %s525 = smul.addr %s524, 16
        %s526 = scalar_lea.vmem [#allocation2], %s525
        // Predicated region
        $region73: #{_lambda_.1} parent=71 // pred_check
          %p527 = pneg %p57
        $region74: #{_lambda_.1} parent=71 // pred_check_branch
          %529 = sbr.rel (%p527) target = $region76
        $region75: #{_lambda_.1} parent=71 // pred_region
          %530 = dma.done %s523, 256
        $region76: #{_lambda_.1} parent=71 // pred_fallthru
          _
        // Predicated region
        $region77: #{_lambda_.1} parent=71 // pred_check
          %p531 = pneg %p78
        $region78: #{_lambda_.1} parent=71 // pred_check_branch
          %533 = sbr.rel (%p531) target = $region80
        $region79: #{_lambda_.1} parent=71 // pred_region
          %534 = dma.done [#allocation6], 16
        $region80: #{_lambda_.1} parent=71 // pred_fallthru
          _
        // Predicated region
        $region81: #{_lambda_.1} parent=71 // pred_check
          %p535 = pneg %p99
        $region82: #{_lambda_.1} parent=71 // pred_check_branch
          %537 = sbr.rel (%p535) target = $region84
        $region83: #{_lambda_.1} parent=71 // pred_region
          %538 = dma.done [#allocation6], 16
        $region84: #{_lambda_.1} parent=71 // pred_fallthru
          _
        // Predicated region
        $region85: #{_lambda_.1} parent=71 // pred_check
          %p539 = pneg %p120
        $region86: #{_lambda_.1} parent=71 // pred_check_branch
          %541 = sbr.rel (%p539) target = $region88
        $region87: #{_lambda_.1} parent=71 // pred_region
          %542 = dma.done [#allocation9], 512
        $region88: #{_lambda_.1} parent=71 // pred_fallthru
          _
        // Predicated region
        $region89: #{_lambda_.1} parent=71 // pred_check
          %p543 = pneg %p141
        $region90: #{_lambda_.1} parent=71 // pred_check_branch
          %545 = sbr.rel (%p543) target = $region92
        $region91: #{_lambda_.1} parent=71 // pred_region
          %546 = dma.done [#allocation9], 1024
        $region92: #{_lambda_.1} parent=71 // pred_fallthru
          _
        // Predicated region
        $region93: #{_lambda_.1} parent=71 // pred_check
          %p547 = pneg %p162
        $region94: #{_lambda_.1} parent=71 // pred_check_branch
          %549 = sbr.rel (%p547) target = $region96
        $region95: #{_lambda_.1} parent=71 // pred_region
          %550 = dma.done [#allocation12], 64
        $region96: #{_lambda_.1} parent=71 // pred_fallthru
          _
        // Predicated region
        $region97: #{_lambda_.1} parent=71 // pred_check
          %p551 = pneg %p183
        $region98: #{_lambda_.1} parent=71 // pred_check_branch
          %553 = sbr.rel (%p551) target = $region100
        $region99: #{_lambda_.1} parent=71 // pred_region
          %554 = dma.done [#allocation12], 128
        $region100: #{_lambda_.1} parent=71 // pred_fallthru
          _
        // Predicated region
        $region101: #{_lambda_.1} parent=71 // pred_check
          %p555 = pneg %p204
        $region102: #{_lambda_.1} parent=71 // pred_check_branch
          %557 = sbr.rel (%p555) target = $region104
        $region103: #{_lambda_.1} parent=71 // pred_region
          %558 = dma.done [#allocation15], 16
        $region104: #{_lambda_.1} parent=71 // pred_fallthru
          _
        // Predicated region
        $region105: #{_lambda_.1} parent=71 // pred_check
          %p559 = pneg %p225
        $region106: #{_lambda_.1} parent=71 // pred_check_branch
          %561 = sbr.rel (%p559) target = $region108
        $region107: #{_lambda_.1} parent=71 // pred_region
          %562 = dma.done [#allocation15], 16
        $region108: #{_lambda_.1} parent=71 // pred_fallthru
          _
        // Predicated region
        $region109: #{_lambda_.1} parent=71 // pred_check
          %p563 = pneg %p246
        $region110: #{_lambda_.1} parent=71 // pred_check_branch
          %565 = sbr.rel (%p563) target = $region112
        $region111: #{_lambda_.1} parent=71 // pred_region
          %566 = dma.done [#allocation18], 4096
        $region112: #{_lambda_.1} parent=71 // pred_fallthru
          _
        // Predicated region
        $region113: #{_lambda_.1} parent=71 // pred_check
          %p567 = pneg %p267
        $region114: #{_lambda_.1} parent=71 // pred_check_branch
          %569 = sbr.rel (%p567) target = $region116
        $region115: #{_lambda_.1} parent=71 // pred_region
          %570 = dma.done [#allocation18], 64
        $region116: #{_lambda_.1} parent=71 // pred_fallthru
          _
        // Predicated region
        $region117: #{_lambda_.1} parent=71 // pred_check
          %p571 = pneg %p288
        $region118: #{_lambda_.1} parent=71 // pred_check_branch
          %573 = sbr.rel (%p571) target = $region120
        $region119: #{_lambda_.1} parent=71 // pred_region
          %574 = dma.done [#allocation21], 4096
        $region120: #{_lambda_.1} parent=71 // pred_fallthru
          _
        // Predicated region
        $region121: #{_lambda_.1} parent=71 // pred_check
          %p575 = pneg %p309
        $region122: #{_lambda_.1} parent=71 // pred_check_branch
          %577 = sbr.rel (%p575) target = $region124
        $region123: #{_lambda_.1} parent=71 // pred_region
          %578 = dma.done [#allocation21], 16
        $region124: #{_lambda_.1} parent=71 // pred_fallthru
          _
        %s579 = sand.u32 %s44, 1
        %s580 = scalar_lea.sflag [#allocation3], %s579
        %s581 = sand.u32 %s44, 1
        %s582 = smul.addr %s581, 16
        %s583 = scalar_lea.vmem [#allocation2], %s582
        %p584 = pneg %p57
        %p585 = pneg %p54
        %p586 = pneg %p78
        %p587 = pneg %p75
        %p588 = pneg %p99
        %p589 = pneg %p96
        %p590 = pneg %p120
        %p591 = pneg %p117
        %p592 = pneg %p141
        %p593 = pneg %p138
        %p594 = pneg %p162
        %p595 = pneg %p159
        %p596 = pneg %p183
        %p597 = pneg %p180
        %p598 = pneg %p204
        %p599 = pneg %p201
        %p600 = pneg %p225
        %p601 = pneg %p222
        %p602 = pneg %p246
        %p603 = pneg %p243
        %p604 = pneg %p267
        %p605 = pneg %p264
        %p606 = pneg %p288
        %p607 = pneg %p285
        %p608 = pneg %p309
        %p609 = pneg %p306
        %p610 = pneg %p335
        %p611 = pneg %p332
        %s612 = sand.u32 %s322, 1
        %s613 = scalar_lea.sflag [#allocation4], %s612
        %s614 = sand.u32 %s322, 1
        %s615 = smul.addr %s614, 16
        %s616 = scalar_lea.vmem [#allocation23], %s615
        %s617 = smul.u32 2, %s36
        %s618 = smul.u32 2, %s36
        %v620 = vld [vmem:[%s526] sm:$0xff]
        %v621 = vld [vmem:[%s526 + $0x8] sm:$0xff]
        %v622 = vld [vmem:[#allocation5] sm:$0x1]
        %v623 = vld [vmem:[#allocation7] sm:$0x1]
        %624 = vadd.xlane.f32.xlu0 %v620
        %v625 = vpop.xlane.xlu0 %624
        %626 = vadd.xlane.f32.xlu0 %v621
        %v627 = vpop.xlane.xlu0 %626
        %v628 = vrcp.pop 128.0
        %v629 = vmul.f32 %v625, %v628
        %v630 = vmul.f32 %v627, %v628
        %v631 = vsub.f32 %v620, %v629
        %v632 = vsub.f32 %v621, %v630
        %v633 = vmul.f32 %v631, %v631
        %v634 = vmul.f32 %v632, %v632
        %635 = vadd.xlane.f32.xlu0 %v633
        %v636 = vpop.xlane.xlu0 %635
        %637 = vadd.xlane.f32.xlu0 %v634
        %v638 = vpop.xlane.xlu0 %637
        %v639 = vmul.f32 %v636, %v628
        %v640 = vmul.f32 %v638, %v628
        %v641 = vadd.f32 %v639, 1e-05
        %v642 = vadd.f32 %v640, 1e-05
        %v643 = vrsqrt.pop %v641
        %v644 = vrsqrt.pop %v642
        %v645 = vmul.f32 %v631, %v643
        %v646 = vmul.f32 %v632, %v644
        %v648 = vlaneseq
        %v649 = vshrl.u32 %v648, 7
        %v650 = vsub.s32 0, %v649
        %v651 = vrot.slane %v622, %v650
        %v653 = vmul.f32 %v645, %v651
        %v654 = vmul.f32 %v646, %v651
        %v656 = vlaneseq
        %v657 = vshrl.u32 %v656, 7
        %v658 = vsub.s32 0, %v657
        %v659 = vrot.slane %v623, %v658
        %v661 = vadd.f32 %v653, %v659
        %v662 = vadd.f32 %v654, %v659
        %v663 = vcombine.high %v661, 0.0
        %v665 = vunpack.c.l.s4 1983009808
        %v666 = vunpack.c.0.s8 %v665
        %v667 = vlaneseq
        %v668 = vshrl.u32 %v667, 7
        %v669 = vsub.s32 %v666, %v668
        %v670 = vrot.slane %v661, %v669
        %v672 = vunpack.c.l.s4 1983009808
        %v673 = vunpack.c.0.s8 %v672
        %v674 = vlaneseq
        %v675 = vshrl.u32 %v674, 7
        %v676 = vsub.s32 %v673, %v675
        %v677 = vrot.slane %v663, %v676
        %v678 = vcombine.high %v662, 0.0
        %v680 = vunpack.c.l.s4 1983009808
        %v681 = vunpack.c.0.s8 %v680
        %v682 = vlaneseq
        %v683 = vshrl.u32 %v682, 7
        %v684 = vsub.s32 %v681, %v683
        %v685 = vrot.slane %v662, %v684
        %v687 = vunpack.c.l.s4 1983009808
        %v688 = vunpack.c.0.s8 %v687
        %v689 = vlaneseq
        %v690 = vshrl.u32 %v689, 7
        %v691 = vsub.s32 %v688, %v690
        %v692 = vrot.slane %v678, %v691
        %v693 = vcombine.low %v670, %v685
        %v694 = vcombine.high %v670, %v685
        %v696 = vunpack.c.l.s4 1934713408
        %v697 = vunpack.c.0.s8 %v696
        %v698 = vlaneseq
        %v699 = vshrl.u32 %v698, 7
        %v700 = vsub.s32 %v697, %v699
        %v701 = vrot.slane %v693, %v700
        %v703 = vunpack.c.l.s4 1934713408
        %v704 = vunpack.c.0.s8 %v703
        %v705 = vlaneseq
        %v706 = vshrl.u32 %v705, 7
        %v707 = vsub.s32 %v704, %v706
        %v708 = vrot.slane %v694, %v707
        %v709 = vcombine.low %v677, %v692
        %v710 = vcombine.high %v677, %v692
        %v712 = vunpack.c.l.s4 1934713408
        %v713 = vunpack.c.0.s8 %v712
        %v714 = vlaneseq
        %v715 = vshrl.u32 %v714, 7
        %v716 = vsub.s32 %v713, %v715
        %v717 = vrot.slane %v709, %v716
        %v719 = vunpack.c.l.s4 1934713408
        %v720 = vunpack.c.0.s8 %v719
        %v721 = vlaneseq
        %v722 = vshrl.u32 %v721, 7
        %v723 = vsub.s32 %v720, %v722
        %v724 = vrot.slane %v710, %v723
        %v725 = vcombine.high %v701, 0.0
        %v726 = vcombine.high %v708, 0.0
        %v727 = vcombine.high %v717, 0.0
        %v728 = vcombine.high %v724, 0.0
        %v729 = vcombine.low %v701, %v708
        %v731 = vunpack.c.l.s4 1983009808
        %v732 = vunpack.c.0.s8 %v731
        %v733 = vlaneseq
        %v734 = vshrl.u32 %v733, 7
        %v735 = vsub.s32 %v732, %v734
        %v736 = vrot.slane %v729, %v735
        %v737 = vcombine.low %v725, %v726
        %v739 = vunpack.c.l.s4 1983009808
        %v740 = vunpack.c.0.s8 %v739
        %v741 = vlaneseq
        %v742 = vshrl.u32 %v741, 7
        %v743 = vsub.s32 %v740, %v742
        %v744 = vrot.slane %v737, %v743
        %v745 = vcombine.low %v717, %v724
        %v747 = vunpack.c.l.s4 1983009808
        %v748 = vunpack.c.0.s8 %v747
        %v749 = vlaneseq
        %v750 = vshrl.u32 %v749, 7
        %v751 = vsub.s32 %v748, %v750
        %v752 = vrot.slane %v745, %v751
        %v753 = vcombine.low %v727, %v728
        %v755 = vunpack.c.l.s4 1983009808
        %v756 = vunpack.c.0.s8 %v755
        %v757 = vlaneseq
        %v758 = vshrl.u32 %v757, 7
        %v759 = vsub.s32 %v756, %v758
        %v760 = vrot.slane %v753, %v759
        %v761 = vcombine.low %v736, %v744
        %v763 = vunpack.c.l.s4 1934713408
        %v764 = vunpack.c.0.s8 %v763
        %v765 = vlaneseq
        %v766 = vshrl.u32 %v765, 7
        %v767 = vsub.s32 %v764, %v766
        %v768 = vrot.slane %v761, %v767
        %v769 = vcombine.low %v752, %v760
        %v771 = vunpack.c.l.s4 1934713408
        %v772 = vunpack.c.0.s8 %v771
        %v773 = vlaneseq
        %v774 = vshrl.u32 %v773, 7
        %v775 = vsub.s32 %v772, %v774
        %v776 = vrot.slane %v769, %v775
        %v777 = vcombine.low %v768, %v776
        %v778 = vcombine.high %v768, %v776
        %v779 = vpack.c.bf16 %v777, %v777
        %v780 = vpack.c.bf16 %v778, %v778
        %v781 = vld [vmem:[#allocation8] sm:$0xf]
        %v782 = vld [vmem:[#allocation8 + $0x4] sm:$0xf]
        %v783 = vld [vmem:[#allocation8 + $0x8] sm:$0xf]
        %v784 = vld [vmem:[#allocation8 + $0xc] sm:$0xf]
        %v785 = vld [vmem:[#allocation8 + $0x10] sm:$0xf]
        %v786 = vld [vmem:[#allocation8 + $0x14] sm:$0xf]
        %v787 = vld [vmem:[#allocation8 + $0x18] sm:$0xf]
        %v788 = vld [vmem:[#allocation8 + $0x1c] sm:$0xf]
        %v789 = vld [vmem:[#allocation10] sm:$0xff]
        %v790 = vld [vmem:[#allocation10 + $0x8] sm:$0xff]
        %v791 = vld [vmem:[#allocation10 + $0x10] sm:$0xff]
        %v792 = vld [vmem:[#allocation10 + $0x18] sm:$0xff]
        %v793 = vld [vmem:[#allocation10 + $0x20] sm:$0xff]
        %v794 = vld [vmem:[#allocation10 + $0x28] sm:$0xff]
        %v795 = vld [vmem:[#allocation10 + $0x30] sm:$0xff]
        %v796 = vld [vmem:[#allocation10 + $0x38] sm:$0xff]
        %798 = vset.pattern.permute.xlu0 0
        %799 = vperm.xlu0 %798, %v789
        %v800 = vpop.permute.xlu0 %799
        %803 = vset.pattern.permute.xlu0 0
        %804 = vperm.xlu0 %803, %v790
        %v805 = vpop.permute.xlu0 %804
        %808 = vset.pattern.permute.xlu0 0
        %809 = vperm.xlu0 %808, %v791
        %v810 = vpop.permute.xlu0 %809
        %813 = vset.pattern.permute.xlu0 0
        %814 = vperm.xlu0 %813, %v792
        %v815 = vpop.permute.xlu0 %814
        %818 = vset.pattern.permute.xlu0 0
        %819 = vperm.xlu0 %818, %v793
        %v820 = vpop.permute.xlu0 %819
        %823 = vset.pattern.permute.xlu0 0
        %824 = vperm.xlu0 %823, %v794
        %v825 = vpop.permute.xlu0 %824
        %828 = vset.pattern.permute.xlu0 0
        %829 = vperm.xlu0 %828, %v795
        %v830 = vpop.permute.xlu0 %829
        %833 = vset.pattern.permute.xlu0 0
        %834 = vperm.xlu0 %833, %v796
        %v835 = vpop.permute.xlu0 %834
        %v845 = vunpack.c.l.b16 %v781
        %v846 = vunpack.c.l.b16 %v782
        %v847 = vunpack.c.l.b16 %v783
        %v848 = vunpack.c.l.b16 %v784
        %v849 = vunpack.c.l.b16 %v785
        %v850 = vunpack.c.l.b16 %v786
        %v851 = vunpack.c.l.b16 %v787
        %v852 = vunpack.c.l.b16 %v788
        %v853 = vpack.c.b16 %v846, %v845
        %v854 = vpack.c.b16 %v848, %v847
        %v855 = vpack.c.b16 %v850, %v849
        %v856 = vpack.c.b16 %v852, %v851
        %vm857 = vcmask 64512
        %v859 = vsel %vm857, %v853, 0
        %v862 = vsel %vm857, %v854, 0
        %v865 = vsel %vm857, %v855, 0
        %v868 = vsel %vm857, %v856, 0
        %vm870 = vcmask 1043456
        %v872 = vsel %vm870, %v779, 0
        %v875 = vsel %vm870, %v780, 0
        %877 = vmatprep.subr.bf16.mxu0 %v875
        %878 = vmatpush1.bf16.msra.mxu0 %v872
        %879 = vmatprep.subr.bf16.mxu0 0
        %880 = vmatpush1.bf16.msra.mxu0 0
        %881 = vmatprep.subr.bf16.mxu0 0
        %882 = vmatpush1.bf16.msra.mxu0 0
        %883 = vmatprep.subr.bf16.mxu0 0
        %884 = vmatpush1.bf16.msra.mxu0 0
        %885 = vmatprep.subr.bf16.mxu0 0
        %886 = vmatpush1.bf16.msra.mxu0 0
        %887 = vmatprep.subr.bf16.mxu0 0
        %888 = vmatpush1.bf16.msra.mxu0 0
        %889 = vmatprep.subr.bf16.mxu0 0
        %890 = vmatpush1.bf16.msra.mxu0 0
        %891 = vmatprep.subr.bf16.mxu0 0
        %892 = vmatpush1.bf16.msra.mxu0 0
        %893 = vmatprep.subr.bf16.mxu0 0
        %894 = vmatpush1.bf16.msra.mxu0 0
        %895 = vmatprep.subr.bf16.mxu0 0
        %896 = vmatpush1.bf16.msra.mxu0 0
        %897 = vmatprep.subr.bf16.mxu0 0
        %898 = vmatpush1.bf16.msra.mxu0 0
        %899 = vmatprep.subr.bf16.mxu0 0
        %900 = vmatpush1.bf16.msra.mxu0 0
        %901 = vmatprep.subr.bf16.mxu0 0
        %902 = vmatpush1.bf16.msra.mxu0 0
        %903 = vmatprep.subr.bf16.mxu0 0
        %904 = vmatpush1.bf16.msra.mxu0 0
        %905 = vmatprep.subr.bf16.mxu0 0
        %906 = vmatpush1.bf16.msra.mxu0 0
        %907 = vmatprep.subr.bf16.mxu0 0
        %908 = vmatpush1.bf16.msra.mxu0 0
        %909 = vmatprep.mubr.bf16.mxu0 0
        %910 = vmatmul.mubr.bf16.gmra.mrb[0].mxu0 %v859
        %v911 = vpop.f32.mrb[0].mxu0
        %v912 = vadd.f32 %v800, %v911
        %v913 = vpop.f32.mrb[0].mxu0
        %v914 = vadd.f32 %v800, %v913
        %v915 = vpop.f32.mrb[0].mxu0
        %v916 = vadd.f32 %v805, %v915
        %v917 = vpop.f32.mrb[0].mxu0
        %v918 = vadd.f32 %v805, %v917
        %919 = vmatprep.mubr.bf16.mxu0 0
        %920 = vmatmul.mubr.bf16.gmra.mrb[0].mxu0 %v862
        %v921 = vpop.f32.mrb[0].mxu0
        %v922 = vadd.f32 %v810, %v921
        %v923 = vpop.f32.mrb[0].mxu0
        %v924 = vadd.f32 %v810, %v923
        %v925 = vpop.f32.mrb[0].mxu0
        %v926 = vadd.f32 %v815, %v925
        %v927 = vpop.f32.mrb[0].mxu0
        %v928 = vadd.f32 %v815, %v927
        %929 = vmatprep.mubr.bf16.mxu0 0
        %930 = vmatmul.mubr.bf16.gmra.mrb[0].mxu0 %v865
        %v931 = vpop.f32.mrb[0].mxu0
        %v932 = vadd.f32 %v820, %v931
        %v933 = vpop.f32.mrb[0].mxu0
        %v934 = vadd.f32 %v820, %v933
        %v935 = vpop.f32.mrb[0].mxu0
        %v936 = vadd.f32 %v825, %v935
        %v937 = vpop.f32.mrb[0].mxu0
        %v938 = vadd.f32 %v825, %v937
        %939 = vmatprep.mubr.bf16.mxu0 0
        %940 = vmatmul.mubr.bf16.gmra.mrb[0].mxu0 %v868
        %v941 = vpop.f32.mrb[0].mxu0
        %v942 = vadd.f32 %v830, %v941
        %v943 = vpop.f32.mrb[0].mxu0
        %v944 = vadd.f32 %v830, %v943
        %v945 = vpop.f32.mrb[0].mxu0
        %v946 = vadd.f32 %v835, %v945
        %v947 = vpop.f32.mrb[0].mxu0
        %v948 = vadd.f32 %v835, %v947
        %949 = vdwg.mxu0
        %v950 = vmul.f32 %v912, 0.5
        %v951 = vmul.f32 %v914, 0.5
        %v952 = vmul.f32 %v916, 0.5
        %v953 = vmul.f32 %v918, 0.5
        %v954 = vmul.f32 %v922, 0.5
        %v955 = vmul.f32 %v924, 0.5
        %v956 = vmul.f32 %v926, 0.5
        %v957 = vmul.f32 %v928, 0.5
        %v958 = vmul.f32 %v932, 0.5
        %v959 = vmul.f32 %v934, 0.5
        %v960 = vmul.f32 %v936, 0.5
        %v961 = vmul.f32 %v938, 0.5
        %v962 = vmul.f32 %v942, 0.5
        %v963 = vmul.f32 %v944, 0.5
        %v964 = vmul.f32 %v946, 0.5
        %v965 = vmul.f32 %v948, 0.5
        %v966 = vmul.f32 %v912, 0.70710677
        %v967 = vmul.f32 %v914, 0.70710677
        %v968 = vmul.f32 %v916, 0.70710677
        %v969 = vmul.f32 %v918, 0.70710677
        %v970 = vmul.f32 %v922, 0.70710677
        %v971 = vmul.f32 %v924, 0.70710677
        %v972 = vmul.f32 %v926, 0.70710677
        %v973 = vmul.f32 %v928, 0.70710677
        %v974 = vmul.f32 %v932, 0.70710677
        %v975 = vmul.f32 %v934, 0.70710677
        %v976 = vmul.f32 %v936, 0.70710677
        %v977 = vmul.f32 %v938, 0.70710677
        %v978 = vmul.f32 %v942, 0.70710677
        %v979 = vmul.f32 %v944, 0.70710677
        %v980 = vmul.f32 %v946, 0.70710677
        %v981 = vmul.f32 %v948, 0.70710677
        %v982 = verf.f32.pop %v966
        %v983 = verf.f32.pop %v967
        %v984 = verf.f32.pop %v968
        %v985 = verf.f32.pop %v969
        %v986 = verf.f32.pop %v970
        %v987 = verf.f32.pop %v971
        %v988 = verf.f32.pop %v972
        %v989 = verf.f32.pop %v973
        %v990 = verf.f32.pop %v974
        %v991 = verf.f32.pop %v975
        %v992 = verf.f32.pop %v976
        %v993 = verf.f32.pop %v977
        %v994 = verf.f32.pop %v978
        %v995 = verf.f32.pop %v979
        %v996 = verf.f32.pop %v980
        %v997 = verf.f32.pop %v981
        %v998 = vadd.f32 %v982, 1.0
        %v999 = vadd.f32 %v983, 1.0
        %v1000 = vadd.f32 %v984, 1.0
        %v1001 = vadd.f32 %v985, 1.0
        %v1002 = vadd.f32 %v986, 1.0
        %v1003 = vadd.f32 %v987, 1.0
        %v1004 = vadd.f32 %v988, 1.0
        %v1005 = vadd.f32 %v989, 1.0
        %v1006 = vadd.f32 %v990, 1.0
        %v1007 = vadd.f32 %v991, 1.0
        %v1008 = vadd.f32 %v992, 1.0
        %v1009 = vadd.f32 %v993, 1.0
        %v1010 = vadd.f32 %v994, 1.0
        %v1011 = vadd.f32 %v995, 1.0
        %v1012 = vadd.f32 %v996, 1.0
        %v1013 = vadd.f32 %v997, 1.0
        %v1014 = vmul.f32 %v950, %v998
        %v1015 = vmul.f32 %v951, %v999
        %v1016 = vmul.f32 %v952, %v1000
        %v1017 = vmul.f32 %v953, %v1001
        %v1018 = vmul.f32 %v954, %v1002
        %v1019 = vmul.f32 %v955, %v1003
        %v1020 = vmul.f32 %v956, %v1004
        %v1021 = vmul.f32 %v957, %v1005
        %v1022 = vmul.f32 %v958, %v1006
        %v1023 = vmul.f32 %v959, %v1007
        %v1024 = vmul.f32 %v960, %v1008
        %v1025 = vmul.f32 %v961, %v1009
        %v1026 = vmul.f32 %v962, %v1010
        %v1027 = vmul.f32 %v963, %v1011
        %v1028 = vmul.f32 %v964, %v1012
        %v1029 = vmul.f32 %v965, %v1013
        %v1030 = vpack.c.bf16 %v1016, %v1014
        %v1031 = vpack.c.bf16 %v1017, %v1015
        %v1032 = vpack.c.bf16 %v1020, %v1018
        %v1033 = vpack.c.bf16 %v1021, %v1019
        %v1034 = vpack.c.bf16 %v1024, %v1022
        %v1035 = vpack.c.bf16 %v1025, %v1023
        %v1036 = vpack.c.bf16 %v1028, %v1026
        %v1037 = vpack.c.bf16 %v1029, %v1027
        %v1038 = vld [vmem:[#allocation11] sm:$0xf]
        %v1039 = vld [vmem:[#allocation13] sm:$0xff]
        %1041 = vset.pattern.permute.xlu0 0
        %1042 = vperm.xlu0 %1041, %v1039
        %v1043 = vpop.permute.xlu0 %1042
        %vm1045 = vcmask 523264
        %v1047 = vsel %vm1045, %v1038, 0
        %1049 = vmatprep.subr.bf16.mxu0 %v1031
        %1050 = vmatpush1.bf16.msra.mxu0 %v1030
        %1051 = vmatprep.subr.bf16.mxu0 %v1033
        %1052 = vmatpush1.bf16.msra.mxu0 %v1032
        %1053 = vmatprep.subr.bf16.mxu0 %v1035
        %1054 = vmatpush1.bf16.msra.mxu0 %v1034
        %1055 = vmatprep.subr.bf16.mxu0 %v1037
        %1056 = vmatpush1.bf16.msra.mxu0 %v1036
        %1057 = vmatprep.subr.bf16.mxu0 0
        %1058 = vmatpush1.bf16.msra.mxu0 0
        %1059 = vmatprep.subr.bf16.mxu0 0
        %1060 = vmatpush1.bf16.msra.mxu0 0
        %1061 = vmatprep.subr.bf16.mxu0 0
        %1062 = vmatpush1.bf16.msra.mxu0 0
        %1063 = vmatprep.subr.bf16.mxu0 0
        %1064 = vmatpush1.bf16.msra.mxu0 0
        %1065 = vmatprep.subr.bf16.mxu0 0
        %1066 = vmatpush1.bf16.msra.mxu0 0
        %1067 = vmatprep.subr.bf16.mxu0 0
        %1068 = vmatpush1.bf16.msra.mxu0 0
        %1069 = vmatprep.subr.bf16.mxu0 0
        %1070 = vmatpush1.bf16.msra.mxu0 0
        %1071 = vmatprep.subr.bf16.mxu0 0
        %1072 = vmatpush1.bf16.msra.mxu0 0
        %1073 = vmatprep.subr.bf16.mxu0 0
        %1074 = vmatpush1.bf16.msra.mxu0 0
        %1075 = vmatprep.subr.bf16.mxu0 0
        %1076 = vmatpush1.bf16.msra.mxu0 0
        %1077 = vmatprep.subr.bf16.mxu0 0
        %1078 = vmatpush1.bf16.msra.mxu0 0
        %1079 = vmatprep.subr.bf16.mxu0 0
        %1080 = vmatpush1.bf16.msra.mxu0 0
        %1081 = vmatprep.mubr.bf16.mxu0 0
        %1082 = vmatmul.mubr.bf16.gmra.mrb[0].mxu0 %v1047
        %v1083 = vpop.f32.mrb[0].mxu0
        %v1084 = vadd.f32 %v1043, %v1083
        %v1085 = vpop.f32.mrb[0].mxu0
        %v1086 = vadd.f32 %v1043, %v1085
        %v1087 = vpop.f32.mrb[0].mxu0
        %v1088 = vpop.f32.mrb[0].mxu0
        %1089 = vdwg.mxu0
        %v1090 = vcombine.high %v1084, 0.0
        %v1092 = vunpack.c.l.s4 1983009808
        %v1093 = vunpack.c.0.s8 %v1092
        %v1094 = vlaneseq
        %v1095 = vshrl.u32 %v1094, 7
        %v1096 = vsub.s32 %v1093, %v1095
        %v1097 = vrot.slane %v1084, %v1096
        %v1099 = vunpack.c.l.s4 1983009808
        %v1100 = vunpack.c.0.s8 %v1099
        %v1101 = vlaneseq
        %v1102 = vshrl.u32 %v1101, 7
        %v1103 = vsub.s32 %v1100, %v1102
        %v1104 = vrot.slane %v1090, %v1103
        %v1105 = vcombine.high %v1086, 0.0
        %v1107 = vunpack.c.l.s4 1983009808
        %v1108 = vunpack.c.0.s8 %v1107
        %v1109 = vlaneseq
        %v1110 = vshrl.u32 %v1109, 7
        %v1111 = vsub.s32 %v1108, %v1110
        %v1112 = vrot.slane %v1086, %v1111
        %v1114 = vunpack.c.l.s4 1983009808
        %v1115 = vunpack.c.0.s8 %v1114
        %v1116 = vlaneseq
        %v1117 = vshrl.u32 %v1116, 7
        %v1118 = vsub.s32 %v1115, %v1117
        %v1119 = vrot.slane %v1105, %v1118
        %v1120 = vcombine.low %v1097, %v1112
        %v1121 = vcombine.high %v1097, %v1112
        %v1123 = vunpack.c.l.s4 1934713408
        %v1124 = vunpack.c.0.s8 %v1123
        %v1125 = vlaneseq
        %v1126 = vshrl.u32 %v1125, 7
        %v1127 = vsub.s32 %v1124, %v1126
        %v1128 = vrot.slane %v1120, %v1127
        %v1130 = vunpack.c.l.s4 1934713408
        %v1131 = vunpack.c.0.s8 %v1130
        %v1132 = vlaneseq
        %v1133 = vshrl.u32 %v1132, 7
        %v1134 = vsub.s32 %v1131, %v1133
        %v1135 = vrot.slane %v1121, %v1134
        %v1136 = vcombine.low %v1104, %v1119
        %v1137 = vcombine.high %v1104, %v1119
        %v1139 = vunpack.c.l.s4 1934713408
        %v1140 = vunpack.c.0.s8 %v1139
        %v1141 = vlaneseq
        %v1142 = vshrl.u32 %v1141, 7
        %v1143 = vsub.s32 %v1140, %v1142
        %v1144 = vrot.slane %v1136, %v1143
        %v1146 = vunpack.c.l.s4 1934713408
        %v1147 = vunpack.c.0.s8 %v1146
        %v1148 = vlaneseq
        %v1149 = vshrl.u32 %v1148, 7
        %v1150 = vsub.s32 %v1147, %v1149
        %v1151 = vrot.slane %v1137, %v1150
        %v1152 = vcombine.high %v1128, 0.0
        %v1153 = vcombine.high %v1135, 0.0
        %v1154 = vcombine.high %v1144, 0.0
        %v1155 = vcombine.high %v1151, 0.0
        %v1156 = vcombine.low %v1128, %v1135
        %v1158 = vunpack.c.l.s4 1983009808
        %v1159 = vunpack.c.0.s8 %v1158
        %v1160 = vlaneseq
        %v1161 = vshrl.u32 %v1160, 7
        %v1162 = vsub.s32 %v1159, %v1161
        %v1163 = vrot.slane %v1156, %v1162
        %v1164 = vcombine.low %v1152, %v1153
        %v1166 = vunpack.c.l.s4 1983009808
        %v1167 = vunpack.c.0.s8 %v1166
        %v1168 = vlaneseq
        %v1169 = vshrl.u32 %v1168, 7
        %v1170 = vsub.s32 %v1167, %v1169
        %v1171 = vrot.slane %v1164, %v1170
        %v1172 = vcombine.low %v1144, %v1151
        %v1174 = vunpack.c.l.s4 1983009808
        %v1175 = vunpack.c.0.s8 %v1174
        %v1176 = vlaneseq
        %v1177 = vshrl.u32 %v1176, 7
        %v1178 = vsub.s32 %v1175, %v1177
        %v1179 = vrot.slane %v1172, %v1178
        %v1180 = vcombine.low %v1154, %v1155
        %v1182 = vunpack.c.l.s4 1983009808
        %v1183 = vunpack.c.0.s8 %v1182
        %v1184 = vlaneseq
        %v1185 = vshrl.u32 %v1184, 7
        %v1186 = vsub.s32 %v1183, %v1185
        %v1187 = vrot.slane %v1180, %v1186
        %v1188 = vcombine.low %v1163, %v1171
        %v1190 = vunpack.c.l.s4 1934713408
        %v1191 = vunpack.c.0.s8 %v1190
        %v1192 = vlaneseq
        %v1193 = vshrl.u32 %v1192, 7
        %v1194 = vsub.s32 %v1191, %v1193
        %v1195 = vrot.slane %v1188, %v1194
        %v1196 = vcombine.low %v1179, %v1187
        %v1198 = vunpack.c.l.s4 1934713408
        %v1199 = vunpack.c.0.s8 %v1198
        %v1200 = vlaneseq
        %v1201 = vshrl.u32 %v1200, 7
        %v1202 = vsub.s32 %v1199, %v1201
        %v1203 = vrot.slane %v1196, %v1202
        %v1204 = vcombine.low %v1195, %v1203
        %v1205 = vcombine.high %v1195, %v1203
        %v1206 = vadd.f32 %v620, %v1204
        %v1207 = vadd.f32 %v621, %v1205
        %v1208 = vld [vmem:[#allocation14] sm:$0x1]
        %v1209 = vld [vmem:[#allocation16] sm:$0x1]
        %1210 = vadd.xlane.f32.xlu0 %v1206
        %v1211 = vpop.xlane.xlu0 %1210
        %1212 = vadd.xlane.f32.xlu0 %v1207
        %v1213 = vpop.xlane.xlu0 %1212
        %v1214 = vmul.f32 %v1211, %v628
        %v1215 = vmul.f32 %v1213, %v628
        %v1216 = vsub.f32 %v1206, %v1214
        %v1217 = vsub.f32 %v1207, %v1215
        %v1218 = vmul.f32 %v1216, %v1216
        %v1219 = vmul.f32 %v1217, %v1217
        %1220 = vadd.xlane.f32.xlu0 %v1218
        %v1221 = vpop.xlane.xlu0 %1220
        %1222 = vadd.xlane.f32.xlu0 %v1219
        %v1223 = vpop.xlane.xlu0 %1222
        %v1224 = vmul.f32 %v1221, %v628
        %v1225 = vmul.f32 %v1223, %v628
        %v1226 = vadd.f32 %v1224, 1e-05
        %v1227 = vadd.f32 %v1225, 1e-05
        %v1228 = vrsqrt.pop %v1226
        %v1229 = vrsqrt.pop %v1227
        %v1230 = vmul.f32 %v1216, %v1228
        %v1231 = vmul.f32 %v1217, %v1229
        %v1233 = vlaneseq
        %v1234 = vshrl.u32 %v1233, 7
        %v1235 = vsub.s32 0, %v1234
        %v1236 = vrot.slane %v1208, %v1235
        %v1238 = vmul.f32 %v1230, %v1236
        %v1239 = vmul.f32 %v1231, %v1236
        %v1241 = vlaneseq
        %v1242 = vshrl.u32 %v1241, 7
        %v1243 = vsub.s32 0, %v1242
        %v1244 = vrot.slane %v1209, %v1243
        %v1246 = vadd.f32 %v1238, %v1244
        %v1247 = vadd.f32 %v1239, %v1244
        %v1248 = vpack.c.bf16 %v1247, %v1246
        %v1249 = vld [vmem:[#allocation17] sm:$0xff]
        %v1250 = vld [vmem:[#allocation17 + $0x8] sm:$0xff]
        %v1251 = vld [vmem:[#allocation17 + $0x10] sm:$0xff]
        %v1252 = vld [vmem:[#allocation17 + $0x18] sm:$0xff]
        %v1253 = vld [vmem:[#allocation17 + $0x20] sm:$0xff]
        %v1254 = vld [vmem:[#allocation17 + $0x28] sm:$0xff]
        %v1255 = vld [vmem:[#allocation17 + $0x30] sm:$0xff]
        %v1256 = vld [vmem:[#allocation17 + $0x38] sm:$0xff]
        %v1257 = vld [vmem:[#allocation17 + $0x40] sm:$0xff]
        %v1258 = vld [vmem:[#allocation17 + $0x48] sm:$0xff]
        %v1259 = vld [vmem:[#allocation17 + $0x50] sm:$0xff]
        %v1260 = vld [vmem:[#allocation17 + $0x58] sm:$0xff]
        %v1261 = vld [vmem:[#allocation17 + $0x60] sm:$0xff]
        %v1262 = vld [vmem:[#allocation17 + $0x68] sm:$0xff]
        %v1263 = vld [vmem:[#allocation17 + $0x70] sm:$0xff]
        %v1264 = vld [vmem:[#allocation17 + $0x78] sm:$0xff]
        %v1265 = vld [vmem:[#allocation17 + $0x80] sm:$0xff]
        %v1266 = vld [vmem:[#allocation17 + $0x88] sm:$0xff]
        %v1267 = vld [vmem:[#allocation17 + $0x90] sm:$0xff]
        %v1268 = vld [vmem:[#allocation17 + $0x98] sm:$0xff]
        %v1269 = vld [vmem:[#allocation17 + $0xa0] sm:$0xff]
        %v1270 = vld [vmem:[#allocation17 + $0xa8] sm:$0xff]
        %v1271 = vld [vmem:[#allocation17 + $0xb0] sm:$0xff]
        %v1272 = vld [vmem:[#allocation17 + $0xb8] sm:$0xff]
        %v1273 = vld [vmem:[#allocation17 + $0xc0] sm:$0xff]
        %v1274 = vld [vmem:[#allocation17 + $0xc8] sm:$0xff]
        %v1275 = vld [vmem:[#allocation17 + $0xd0] sm:$0xff]
        %v1276 = vld [vmem:[#allocation17 + $0xd8] sm:$0xff]
        %v1277 = vld [vmem:[#allocation17 + $0xe0] sm:$0xff]
        %v1278 = vld [vmem:[#allocation17 + $0xe8] sm:$0xff]
        %v1279 = vld [vmem:[#allocation17 + $0xf0] sm:$0xff]
        %v1280 = vld [vmem:[#allocation17 + $0xf8] sm:$0xff]
        %v1281 = vld [vmem:[#allocation19] sm:$0xf]
        %v1283 = vlaneseq
        %v1284 = vshrl.u32 %v1283, 7
        %v1285 = vsub.s32 0, %v1284
        %v1286 = vrot.slane %v1281, %v1285
        %v1287 = vlaneseq
        %v1288 = vshrl.u32 %v1287, 7
        %v1289 = vsub.s32 1, %v1288
        %v1290 = vrot.slane %v1281, %v1289
        %v1291 = vlaneseq
        %v1292 = vshrl.u32 %v1291, 7
        %v1293 = vsub.s32 2, %v1292
        %v1294 = vrot.slane %v1281, %v1293
        %v1295 = vlaneseq
        %v1296 = vshrl.u32 %v1295, 7
        %v1297 = vsub.s32 3, %v1296
        %v1298 = vrot.slane %v1281, %v1297
        %v1335 = vunpack.c.l.b16 %v1249
        %v1336 = vunpack.c.h.b16 %v1249
        %v1337 = vunpack.c.l.b16 %v1250
        %v1338 = vunpack.c.h.b16 %v1250
        %v1339 = vunpack.c.l.b16 %v1251
        %v1340 = vunpack.c.h.b16 %v1251
        %v1341 = vunpack.c.l.b16 %v1252
        %v1342 = vunpack.c.h.b16 %v1252
        %v1343 = vunpack.c.l.b16 %v1253
        %v1344 = vunpack.c.h.b16 %v1253
        %v1345 = vunpack.c.l.b16 %v1254
        %v1346 = vunpack.c.h.b16 %v1254
        %v1347 = vunpack.c.l.b16 %v1255
        %v1348 = vunpack.c.h.b16 %v1255
        %v1349 = vunpack.c.l.b16 %v1256
        %v1350 = vunpack.c.h.b16 %v1256
        %v1351 = vunpack.c.l.b16 %v1257
        %v1352 = vunpack.c.h.b16 %v1257
        %v1353 = vunpack.c.l.b16 %v1258
        %v1354 = vunpack.c.h.b16 %v1258
        %v1355 = vunpack.c.l.b16 %v1259
        %v1356 = vunpack.c.h.b16 %v1259
        %v1357 = vunpack.c.l.b16 %v1260
        %v1358 = vunpack.c.h.b16 %v1260
        %v1359 = vunpack.c.l.b16 %v1261
        %v1360 = vunpack.c.h.b16 %v1261
        %v1361 = vunpack.c.l.b16 %v1262
        %v1362 = vunpack.c.h.b16 %v1262
        %v1363 = vunpack.c.l.b16 %v1263
        %v1364 = vunpack.c.h.b16 %v1263
        %v1365 = vunpack.c.l.b16 %v1264
        %v1366 = vunpack.c.h.b16 %v1264
        %v1367 = vunpack.c.l.b16 %v1265
        %v1368 = vunpack.c.h.b16 %v1265
        %v1369 = vunpack.c.l.b16 %v1266
        %v1370 = vunpack.c.h.b16 %v1266
        %v1371 = vunpack.c.l.b16 %v1267
        %v1372 = vunpack.c.h.b16 %v1267
        %v1373 = vunpack.c.l.b16 %v1268
        %v1374 = vunpack.c.h.b16 %v1268
        %v1375 = vunpack.c.l.b16 %v1269
        %v1376 = vunpack.c.h.b16 %v1269
        %v1377 = vunpack.c.l.b16 %v1270
        %v1378 = vunpack.c.h.b16 %v1270
        %v1379 = vunpack.c.l.b16 %v1271
        %v1380 = vunpack.c.h.b16 %v1271
        %v1381 = vunpack.c.l.b16 %v1272
        %v1382 = vunpack.c.h.b16 %v1272
        %v1383 = vunpack.c.l.b16 %v1273
        %v1384 = vunpack.c.h.b16 %v1273
        %v1385 = vunpack.c.l.b16 %v1274
        %v1386 = vunpack.c.h.b16 %v1274
        %v1387 = vunpack.c.l.b16 %v1275
        %v1388 = vunpack.c.h.b16 %v1275
        %v1389 = vunpack.c.l.b16 %v1276
        %v1390 = vunpack.c.h.b16 %v1276
        %v1391 = vunpack.c.l.b16 %v1277
        %v1392 = vunpack.c.h.b16 %v1277
        %v1393 = vunpack.c.l.b16 %v1278
        %v1394 = vunpack.c.h.b16 %v1278
        %v1395 = vunpack.c.l.b16 %v1279
        %v1396 = vunpack.c.h.b16 %v1279
        %v1397 = vunpack.c.l.b16 %v1280
        %v1398 = vunpack.c.h.b16 %v1280
        %v1399 = vpack.c.b16 %v1339, %v1335
        %v1400 = vpack.c.b16 %v1340, %v1336
        %v1401 = vpack.c.b16 %v1341, %v1337
        %v1402 = vpack.c.b16 %v1342, %v1338
        %v1403 = vpack.c.b16 %v1347, %v1343
        %v1404 = vpack.c.b16 %v1348, %v1344
        %v1405 = vpack.c.b16 %v1349, %v1345
        %v1406 = vpack.c.b16 %v1350, %v1346
        %v1407 = vpack.c.b16 %v1355, %v1351
        %v1408 = vpack.c.b16 %v1356, %v1352
        %v1409 = vpack.c.b16 %v1357, %v1353
        %v1410 = vpack.c.b16 %v1358, %v1354
        %v1411 = vpack.c.b16 %v1363, %v1359
        %v1412 = vpack.c.b16 %v1364, %v1360
        %v1413 = vpack.c.b16 %v1365, %v1361
        %v1414 = vpack.c.b16 %v1366, %v1362
        %v1415 = vpack.c.b16 %v1371, %v1367
        %v1416 = vpack.c.b16 %v1372, %v1368
        %v1417 = vpack.c.b16 %v1373, %v1369
        %v1418 = vpack.c.b16 %v1374, %v1370
        %v1419 = vpack.c.b16 %v1379, %v1375
        %v1420 = vpack.c.b16 %v1380, %v1376
        %v1421 = vpack.c.b16 %v1381, %v1377
        %v1422 = vpack.c.b16 %v1382, %v1378
        %v1423 = vpack.c.b16 %v1387, %v1383
        %v1424 = vpack.c.b16 %v1388, %v1384
        %v1425 = vpack.c.b16 %v1389, %v1385
        %v1426 = vpack.c.b16 %v1390, %v1386
        %v1427 = vpack.c.b16 %v1395, %v1391
        %v1428 = vpack.c.b16 %v1396, %v1392
        %v1429 = vpack.c.b16 %v1397, %v1393
        %v1430 = vpack.c.b16 %v1398, %v1394
        %1463 = vmatprep.subr.bf16.mxu0 %v1400
        %1464 = vmatpush1.bf16.msra.mxu0 %v1399
        %1465 = vmatprep.subr.bf16.mxu0 %v1404
        %1466 = vmatpush1.bf16.msra.mxu0 %v1403
        %1467 = vmatprep.subr.bf16.mxu0 %v1408
        %1468 = vmatpush1.bf16.msra.mxu0 %v1407
        %1469 = vmatprep.subr.bf16.mxu0 %v1412
        %1470 = vmatpush1.bf16.msra.mxu0 %v1411
        %1471 = vmatprep.subr.bf16.mxu0 %v1416
        %1472 = vmatpush1.bf16.msra.mxu0 %v1415
        %1473 = vmatprep.subr.bf16.mxu0 %v1420
        %1474 = vmatpush1.bf16.msra.mxu0 %v1419
        %1475 = vmatprep.subr.bf16.mxu0 %v1424
        %1476 = vmatpush1.bf16.msra.mxu0 %v1423
        %1477 = vmatprep.subr.bf16.mxu0 %v1428
        %1478 = vmatpush1.bf16.msra.mxu0 %v1427
        %1479 = vmatprep.subr.bf16.mxu0 0
        %1480 = vmatpush1.bf16.msra.mxu0 0
        %1481 = vmatprep.subr.bf16.mxu0 0
        %1482 = vmatpush1.bf16.msra.mxu0 0
        %1483 = vmatprep.subr.bf16.mxu0 0
        %1484 = vmatpush1.bf16.msra.mxu0 0
        %1485 = vmatprep.subr.bf16.mxu0 0
        %1486 = vmatpush1.bf16.msra.mxu0 0
        %1487 = vmatprep.subr.bf16.mxu0 0
        %1488 = vmatpush1.bf16.msra.mxu0 0
        %1489 = vmatprep.subr.bf16.mxu0 0
        %1490 = vmatpush1.bf16.msra.mxu0 0
        %1491 = vmatprep.subr.bf16.mxu0 0
        %1492 = vmatpush1.bf16.msra.mxu0 0
        %1493 = vmatprep.subr.bf16.mxu0 0
        %1494 = vmatpush1.bf16.msra.mxu0 0
        %1495 = vmatprep.mubr.bf16.mxu0 0
        %1496 = vmatmul.mubr.bf16.gmra.mrb[0].mxu0 %v1248
        %v1497 = vpop.f32.mrb[0].mxu0
        %v1498 = vadd.f32 %v1286, %v1497
        %v1499 = vpop.f32.mrb[0].mxu0
        %v1500 = vadd.f32 %v1290, %v1499
        %v1501 = vpop.f32.mrb[0].mxu0
        %v1502 = vadd.f32 %v1286, %v1501
        %v1503 = vpop.f32.mrb[0].mxu0
        %v1504 = vadd.f32 %v1290, %v1503
        %1505 = vdwg.mxu0
        %1506 = vmatprep.subr.bf16.mxu0 %v1402
        %1507 = vmatpush1.bf16.msra.mxu0 %v1401
        %1508 = vmatprep.subr.bf16.mxu0 %v1406
        %1509 = vmatpush1.bf16.msra.mxu0 %v1405
        %1510 = vmatprep.subr.bf16.mxu0 %v1410
        %1511 = vmatpush1.bf16.msra.mxu0 %v1409
        %1512 = vmatprep.subr.bf16.mxu0 %v1414
        %1513 = vmatpush1.bf16.msra.mxu0 %v1413
        %1514 = vmatprep.subr.bf16.mxu0 %v1418
        %1515 = vmatpush1.bf16.msra.mxu0 %v1417
        %1516 = vmatprep.subr.bf16.mxu0 %v1422
        %1517 = vmatpush1.bf16.msra.mxu0 %v1421
        %1518 = vmatprep.subr.bf16.mxu0 %v1426
        %1519 = vmatpush1.bf16.msra.mxu0 %v1425
        %1520 = vmatprep.subr.bf16.mxu0 %v1430
        %1521 = vmatpush1.bf16.msra.mxu0 %v1429
        %1522 = vmatprep.subr.bf16.mxu0 0
        %1523 = vmatpush1.bf16.msra.mxu0 0
        %1524 = vmatprep.subr.bf16.mxu0 0
        %1525 = vmatpush1.bf16.msra.mxu0 0
        %1526 = vmatprep.subr.bf16.mxu0 0
        %1527 = vmatpush1.bf16.msra.mxu0 0
        %1528 = vmatprep.subr.bf16.mxu0 0
        %1529 = vmatpush1.bf16.msra.mxu0 0
        %1530 = vmatprep.subr.bf16.mxu0 0
        %1531 = vmatpush1.bf16.msra.mxu0 0
        %1532 = vmatprep.subr.bf16.mxu0 0
        %1533 = vmatpush1.bf16.msra.mxu0 0
        %1534 = vmatprep.subr.bf16.mxu0 0
        %1535 = vmatpush1.bf16.msra.mxu0 0
        %1536 = vmatprep.subr.bf16.mxu0 0
        %1537 = vmatpush1.bf16.msra.mxu0 0
        %1538 = vmatprep.mubr.bf16.mxu0 0
        %1539 = vmatmul.mubr.bf16.gmra.mrb[0].mxu0 %v1248
        %v1540 = vpop.f32.mrb[0].mxu0
        %v1541 = vadd.f32 %v1294, %v1540
        %v1542 = vpop.f32.mrb[0].mxu0
        %v1543 = vadd.f32 %v1298, %v1542
        %v1544 = vpop.f32.mrb[0].mxu0
        %v1545 = vadd.f32 %v1294, %v1544
        %v1546 = vpop.f32.mrb[0].mxu0
        %v1547 = vadd.f32 %v1298, %v1546
        %1548 = vdwg.mxu0
        %v1549 = vmul.f32 %v1498, 0.5
        %v1550 = vmul.f32 %v1500, 0.5
        %v1551 = vmul.f32 %v1541, 0.5
        %v1552 = vmul.f32 %v1543, 0.5
        %v1553 = vmul.f32 %v1502, 0.5
        %v1554 = vmul.f32 %v1504, 0.5
        %v1555 = vmul.f32 %v1545, 0.5
        %v1556 = vmul.f32 %v1547, 0.5
        %v1557 = vmul.f32 %v1498, 0.70710677
        %v1558 = vmul.f32 %v1500, 0.70710677
        %v1559 = vmul.f32 %v1541, 0.70710677
        %v1560 = vmul.f32 %v1543, 0.70710677
        %v1561 = vmul.f32 %v1502, 0.70710677
        %v1562 = vmul.f32 %v1504, 0.70710677
        %v1563 = vmul.f32 %v1545, 0.70710677
        %v1564 = vmul.f32 %v1547, 0.70710677
        %v1565 = verf.f32.pop %v1557
        %v1566 = verf.f32.pop %v1558
        %v1567 = verf.f32.pop %v1559
        %v1568 = verf.f32.pop %v1560
        %v1569 = verf.f32.pop %v1561
        %v1570 = verf.f32.pop %v1562
        %v1571 = verf.f32.pop %v1563
        %v1572 = verf.f32.pop %v1564
        %v1573 = vadd.f32 %v1565, 1.0
        %v1574 = vadd.f32 %v1566, 1.0
        %v1575 = vadd.f32 %v1567, 1.0
        %v1576 = vadd.f32 %v1568, 1.0
        %v1577 = vadd.f32 %v1569, 1.0
        %v1578 = vadd.f32 %v1570, 1.0
        %v1579 = vadd.f32 %v1571, 1.0
        %v1580 = vadd.f32 %v1572, 1.0
        %v1581 = vmul.f32 %v1549, %v1573
        %v1582 = vmul.f32 %v1550, %v1574
        %v1583 = vmul.f32 %v1551, %v1575
        %v1584 = vmul.f32 %v1552, %v1576
        %v1585 = vmul.f32 %v1553, %v1577
        %v1586 = vmul.f32 %v1554, %v1578
        %v1587 = vmul.f32 %v1555, %v1579
        %v1588 = vmul.f32 %v1556, %v1580
        %v1589 = vpack.c.bf16 %v1585, %v1581
        %v1590 = vpack.c.bf16 %v1586, %v1582
        %v1591 = vpack.c.bf16 %v1587, %v1583
        %v1592 = vpack.c.bf16 %v1588, %v1584
        %v1593 = vld [vmem:[#allocation20] sm:$0xf]
        %v1594 = vld [vmem:[#allocation20 + $0x4] sm:$0xf]
        %v1595 = vld [vmem:[#allocation20 + $0x8] sm:$0xf]
        %v1596 = vld [vmem:[#allocation20 + $0xc] sm:$0xf]
        %v1597 = vld [vmem:[#allocation20 + $0x10] sm:$0xf]
        %v1598 = vld [vmem:[#allocation20 + $0x14] sm:$0xf]
        %v1599 = vld [vmem:[#allocation20 + $0x18] sm:$0xf]
        %v1600 = vld [vmem:[#allocation20 + $0x1c] sm:$0xf]
        %v1601 = vld [vmem:[#allocation20 + $0x20] sm:$0xf]
        %v1602 = vld [vmem:[#allocation20 + $0x24] sm:$0xf]
        %v1603 = vld [vmem:[#allocation20 + $0x28] sm:$0xf]
        %v1604 = vld [vmem:[#allocation20 + $0x2c] sm:$0xf]
        %v1605 = vld [vmem:[#allocation20 + $0x30] sm:$0xf]
        %v1606 = vld [vmem:[#allocation20 + $0x34] sm:$0xf]
        %v1607 = vld [vmem:[#allocation20 + $0x38] sm:$0xf]
        %v1608 = vld [vmem:[#allocation20 + $0x3c] sm:$0xf]
        %v1609 = vld [vmem:[#allocation20 + $0x40] sm:$0xf]
        %v1610 = vld [vmem:[#allocation20 + $0x44] sm:$0xf]
        %v1611 = vld [vmem:[#allocation20 + $0x48] sm:$0xf]
        %v1612 = vld [vmem:[#allocation20 + $0x4c] sm:$0xf]
        %v1613 = vld [vmem:[#allocation20 + $0x50] sm:$0xf]
        %v1614 = vld [vmem:[#allocation20 + $0x54] sm:$0xf]
        %v1615 = vld [vmem:[#allocation20 + $0x58] sm:$0xf]
        %v1616 = vld [vmem:[#allocation20 + $0x5c] sm:$0xf]
        %v1617 = vld [vmem:[#allocation20 + $0x60] sm:$0xf]
        %v1618 = vld [vmem:[#allocation20 + $0x64] sm:$0xf]
        %v1619 = vld [vmem:[#allocation20 + $0x68] sm:$0xf]
        %v1620 = vld [vmem:[#allocation20 + $0x6c] sm:$0xf]
        %v1621 = vld [vmem:[#allocation20 + $0x70] sm:$0xf]
        %v1622 = vld [vmem:[#allocation20 + $0x74] sm:$0xf]
        %v1623 = vld [vmem:[#allocation20 + $0x78] sm:$0xf]
        %v1624 = vld [vmem:[#allocation20 + $0x7c] sm:$0xf]
        %v1625 = vld [vmem:[#allocation20 + $0x80] sm:$0xf]
        %v1626 = vld [vmem:[#allocation20 + $0x84] sm:$0xf]
        %v1627 = vld [vmem:[#allocation20 + $0x88] sm:$0xf]
        %v1628 = vld [vmem:[#allocation20 + $0x8c] sm:$0xf]
        %v1629 = vld [vmem:[#allocation20 + $0x90] sm:$0xf]
        %v1630 = vld [vmem:[#allocation20 + $0x94] sm:$0xf]
        %v1631 = vld [vmem:[#allocation20 + $0x98] sm:$0xf]
        %v1632 = vld [vmem:[#allocation20 + $0x9c] sm:$0xf]
        %v1633 = vld [vmem:[#allocation20 + $0xa0] sm:$0xf]
        %v1634 = vld [vmem:[#allocation20 + $0xa4] sm:$0xf]
        %v1635 = vld [vmem:[#allocation20 + $0xa8] sm:$0xf]
        %v1636 = vld [vmem:[#allocation20 + $0xac] sm:$0xf]
        %v1637 = vld [vmem:[#allocation20 + $0xb0] sm:$0xf]
        %v1638 = vld [vmem:[#allocation20 + $0xb4] sm:$0xf]
        %v1639 = vld [vmem:[#allocation20 + $0xb8] sm:$0xf]
        %v1640 = vld [vmem:[#allocation20 + $0xbc] sm:$0xf]
        %v1641 = vld [vmem:[#allocation20 + $0xc0] sm:$0xf]
        %v1642 = vld [vmem:[#allocation20 + $0xc4] sm:$0xf]
        %v1643 = vld [vmem:[#allocation20 + $0xc8] sm:$0xf]
        %v1644 = vld [vmem:[#allocation20 + $0xcc] sm:$0xf]
        %v1645 = vld [vmem:[#allocation20 + $0xd0] sm:$0xf]
        %v1646 = vld [vmem:[#allocation20 + $0xd4] sm:$0xf]
        %v1647 = vld [vmem:[#allocation20 + $0xd8] sm:$0xf]
        %v1648 = vld [vmem:[#allocation20 + $0xdc] sm:$0xf]
        %v1649 = vld [vmem:[#allocation20 + $0xe0] sm:$0xf]
        %v1650 = vld [vmem:[#allocation20 + $0xe4] sm:$0xf]
        %v1651 = vld [vmem:[#allocation20 + $0xe8] sm:$0xf]
        %v1652 = vld [vmem:[#allocation20 + $0xec] sm:$0xf]
        %v1653 = vld [vmem:[#allocation20 + $0xf0] sm:$0xf]
        %v1654 = vld [vmem:[#allocation20 + $0xf4] sm:$0xf]
        %v1655 = vld [vmem:[#allocation20 + $0xf8] sm:$0xf]
        %v1656 = vld [vmem:[#allocation20 + $0xfc] sm:$0xf]
        %v1657 = vld [vmem:[#allocation22] sm:$0x1]
        %v1659 = vlaneseq
        %v1660 = vshrl.u32 %v1659, 7
        %v1661 = vsub.s32 0, %v1660
        %v1662 = vrot.slane %v1657, %v1661
        %v1728 = vunpack.c.l.b16 %v1593
        %v1729 = vunpack.c.l.b16 %v1594
        %v1730 = vunpack.c.l.b16 %v1595
        %v1731 = vunpack.c.l.b16 %v1596
        %v1732 = vunpack.c.l.b16 %v1597
        %v1733 = vunpack.c.l.b16 %v1598
        %v1734 = vunpack.c.l.b16 %v1599
        %v1735 = vunpack.c.l.b16 %v1600
        %v1736 = vunpack.c.l.b16 %v1601
        %v1737 = vunpack.c.l.b16 %v1602
        %v1738 = vunpack.c.l.b16 %v1603
        %v1739 = vunpack.c.l.b16 %v1604
        %v1740 = vunpack.c.l.b16 %v1605
        %v1741 = vunpack.c.l.b16 %v1606
        %v1742 = vunpack.c.l.b16 %v1607
        %v1743 = vunpack.c.l.b16 %v1608
        %v1744 = vunpack.c.l.b16 %v1609
        %v1745 = vunpack.c.l.b16 %v1610
        %v1746 = vunpack.c.l.b16 %v1611
        %v1747 = vunpack.c.l.b16 %v1612
        %v1748 = vunpack.c.l.b16 %v1613
        %v1749 = vunpack.c.l.b16 %v1614
        %v1750 = vunpack.c.l.b16 %v1615
        %v1751 = vunpack.c.l.b16 %v1616
        %v1752 = vunpack.c.l.b16 %v1617
        %v1753 = vunpack.c.l.b16 %v1618
        %v1754 = vunpack.c.l.b16 %v1619
        %v1755 = vunpack.c.l.b16 %v1620
        %v1756 = vunpack.c.l.b16 %v1621
        %v1757 = vunpack.c.l.b16 %v1622
        %v1758 = vunpack.c.l.b16 %v1623
        %v1759 = vunpack.c.l.b16 %v1624
        %v1760 = vunpack.c.l.b16 %v1625
        %v1761 = vunpack.c.l.b16 %v1626
        %v1762 = vunpack.c.l.b16 %v1627
        %v1763 = vunpack.c.l.b16 %v1628
        %v1764 = vunpack.c.l.b16 %v1629
        %v1765 = vunpack.c.l.b16 %v1630
        %v1766 = vunpack.c.l.b16 %v1631
        %v1767 = vunpack.c.l.b16 %v1632
        %v1768 = vunpack.c.l.b16 %v1633
        %v1769 = vunpack.c.l.b16 %v1634
        %v1770 = vunpack.c.l.b16 %v1635
        %v1771 = vunpack.c.l.b16 %v1636
        %v1772 = vunpack.c.l.b16 %v1637
        %v1773 = vunpack.c.l.b16 %v1638
        %v1774 = vunpack.c.l.b16 %v1639
        %v1775 = vunpack.c.l.b16 %v1640
        %v1776 = vunpack.c.l.b16 %v1641
        %v1777 = vunpack.c.l.b16 %v1642
        %v1778 = vunpack.c.l.b16 %v1643
        %v1779 = vunpack.c.l.b16 %v1644
        %v1780 = vunpack.c.l.b16 %v1645
        %v1781 = vunpack.c.l.b16 %v1646
        %v1782 = vunpack.c.l.b16 %v1647
        %v1783 = vunpack.c.l.b16 %v1648
        %v1784 = vunpack.c.l.b16 %v1649
        %v1785 = vunpack.c.l.b16 %v1650
        %v1786 = vunpack.c.l.b16 %v1651
        %v1787 = vunpack.c.l.b16 %v1652
        %v1788 = vunpack.c.l.b16 %v1653
        %v1789 = vunpack.c.l.b16 %v1654
        %v1790 = vunpack.c.l.b16 %v1655
        %v1791 = vunpack.c.l.b16 %v1656
        %v1792 = vpack.c.b16 %v1729, %v1728
        %v1793 = vpack.c.b16 %v1731, %v1730
        %v1794 = vpack.c.b16 %v1733, %v1732
        %v1795 = vpack.c.b16 %v1735, %v1734
        %v1796 = vpack.c.b16 %v1737, %v1736
        %v1797 = vpack.c.b16 %v1739, %v1738
        %v1798 = vpack.c.b16 %v1741, %v1740
        %v1799 = vpack.c.b16 %v1743, %v1742
        %v1800 = vpack.c.b16 %v1745, %v1744
        %v1801 = vpack.c.b16 %v1747, %v1746
        %v1802 = vpack.c.b16 %v1749, %v1748
        %v1803 = vpack.c.b16 %v1751, %v1750
        %v1804 = vpack.c.b16 %v1753, %v1752
        %v1805 = vpack.c.b16 %v1755, %v1754
        %v1806 = vpack.c.b16 %v1757, %v1756
        %v1807 = vpack.c.b16 %v1759, %v1758
        %v1808 = vpack.c.b16 %v1761, %v1760
        %v1809 = vpack.c.b16 %v1763, %v1762
        %v1810 = vpack.c.b16 %v1765, %v1764
        %v1811 = vpack.c.b16 %v1767, %v1766
        %v1812 = vpack.c.b16 %v1769, %v1768
        %v1813 = vpack.c.b16 %v1771, %v1770
        %v1814 = vpack.c.b16 %v1773, %v1772
        %v1815 = vpack.c.b16 %v1775, %v1774
        %v1816 = vpack.c.b16 %v1777, %v1776
        %v1817 = vpack.c.b16 %v1779, %v1778
        %v1818 = vpack.c.b16 %v1781, %v1780
        %v1819 = vpack.c.b16 %v1783, %v1782
        %v1820 = vpack.c.b16 %v1785, %v1784
        %v1821 = vpack.c.b16 %v1787, %v1786
        %v1822 = vpack.c.b16 %v1789, %v1788
        %v1823 = vpack.c.b16 %v1791, %v1790
        %1856 = vmatprep.subr.bf16.mxu0 0
        %1857 = vmatpush1.bf16.msra.mxu0 %v1792
        %1858 = vmatprep.subr.bf16.mxu0 0
        %1859 = vmatpush1.bf16.msra.mxu0 %v1793
        %1860 = vmatprep.subr.bf16.mxu0 0
        %1861 = vmatpush1.bf16.msra.mxu0 %v1794
        %1862 = vmatprep.subr.bf16.mxu0 0
        %1863 = vmatpush1.bf16.msra.mxu0 %v1795
        %1864 = vmatprep.subr.bf16.mxu0 0
        %1865 = vmatpush1.bf16.msra.mxu0 %v1796
        %1866 = vmatprep.subr.bf16.mxu0 0
        %1867 = vmatpush1.bf16.msra.mxu0 %v1797
        %1868 = vmatprep.subr.bf16.mxu0 0
        %1869 = vmatpush1.bf16.msra.mxu0 %v1798
        %1870 = vmatprep.subr.bf16.mxu0 0
        %1871 = vmatpush1.bf16.msra.mxu0 %v1799
        %1872 = vmatprep.subr.bf16.mxu0 0
        %1873 = vmatpush1.bf16.msra.mxu0 %v1800
        %1874 = vmatprep.subr.bf16.mxu0 0
        %1875 = vmatpush1.bf16.msra.mxu0 %v1801
        %1876 = vmatprep.subr.bf16.mxu0 0
        %1877 = vmatpush1.bf16.msra.mxu0 %v1802
        %1878 = vmatprep.subr.bf16.mxu0 0
        %1879 = vmatpush1.bf16.msra.mxu0 %v1803
        %1880 = vmatprep.subr.bf16.mxu0 0
        %1881 = vmatpush1.bf16.msra.mxu0 %v1804
        %1882 = vmatprep.subr.bf16.mxu0 0
        %1883 = vmatpush1.bf16.msra.mxu0 %v1805
        %1884 = vmatprep.subr.bf16.mxu0 0
        %1885 = vmatpush1.bf16.msra.mxu0 %v1806
        %1886 = vmatprep.subr.bf16.mxu0 0
        %1887 = vmatpush1.bf16.msra.mxu0 %v1807
        %1888 = vmatprep.mubr.bf16.mxu0 %v1590
        %1889 = vmatmul.mubr.bf16.gmra.mrb[0].mxu0 %v1589
        %v1890 = vpop.f32.mrb[0].mxu0
        %v1891 = vadd.f32 %v1662, %v1890
        %v1892 = vpop.f32.mrb[0].mxu0
        %v1893 = vpop.f32.mrb[0].mxu0
        %v1894 = vadd.f32 %v1662, %v1893
        %v1895 = vpop.f32.mrb[0].mxu0
        %1896 = vdwg.mxu0
        %1897 = vmatprep.subr.bf16.mxu0 0
        %1898 = vmatpush1.bf16.msra.mxu0 %v1808
        %1899 = vmatprep.subr.bf16.mxu0 0
        %1900 = vmatpush1.bf16.msra.mxu0 %v1809
        %1901 = vmatprep.subr.bf16.mxu0 0
        %1902 = vmatpush1.bf16.msra.mxu0 %v1810
        %1903 = vmatprep.subr.bf16.mxu0 0
        %1904 = vmatpush1.bf16.msra.mxu0 %v1811
        %1905 = vmatprep.subr.bf16.mxu0 0
        %1906 = vmatpush1.bf16.msra.mxu0 %v1812
        %1907 = vmatprep.subr.bf16.mxu0 0
        %1908 = vmatpush1.bf16.msra.mxu0 %v1813
        %1909 = vmatprep.subr.bf16.mxu0 0
        %1910 = vmatpush1.bf16.msra.mxu0 %v1814
        %1911 = vmatprep.subr.bf16.mxu0 0
        %1912 = vmatpush1.bf16.msra.mxu0 %v1815
        %1913 = vmatprep.subr.bf16.mxu0 0
        %1914 = vmatpush1.bf16.msra.mxu0 %v1816
        %1915 = vmatprep.subr.bf16.mxu0 0
        %1916 = vmatpush1.bf16.msra.mxu0 %v1817
        %1917 = vmatprep.subr.bf16.mxu0 0
        %1918 = vmatpush1.bf16.msra.mxu0 %v1818
        %1919 = vmatprep.subr.bf16.mxu0 0
        %1920 = vmatpush1.bf16.msra.mxu0 %v1819
        %1921 = vmatprep.subr.bf16.mxu0 0
        %1922 = vmatpush1.bf16.msra.mxu0 %v1820
        %1923 = vmatprep.subr.bf16.mxu0 0
        %1924 = vmatpush1.bf16.msra.mxu0 %v1821
        %1925 = vmatprep.subr.bf16.mxu0 0
        %1926 = vmatpush1.bf16.msra.mxu0 %v1822
        %1927 = vmatprep.subr.bf16.mxu0 0
        %1928 = vmatpush1.bf16.msra.mxu0 %v1823
        %1929 = vmatprep.mubr.bf16.mxu0 %v1592
        %1930 = vmatmul.mubr.bf16.gmra.mrb[0].mxu0 %v1591
        %v1931 = vpop.f32.mrb[0].mxu0
        %v1932 = vadd.f32 %v1891, %v1931
        %v1933 = vpop.f32.mrb[0].mxu0
        %v1934 = vpop.f32.mrb[0].mxu0
        %v1935 = vadd.f32 %v1894, %v1934
        %v1936 = vpop.f32.mrb[0].mxu0
        %1937 = vdwg.mxu0
        %v1938 = vadd.f32 %v1206, %v1932
        %v1939 = vadd.f32 %v1207, %v1935
        %1940 = vst [vmem:[%s616] sm:$0xff] %v1938
        %1941 = vst [vmem:[%s616 + $0x8] sm:$0xff] %v1939
        %s1942 = sand.u32 %s322, 1
        %s1943 = scalar_lea.sflag [#allocation4], %s1942
        %s1944 = sand.u32 %s322, 1
        %s1945 = smul.addr %s1944, 16
        %s1946 = scalar_lea.vmem [#allocation23], %s1945
        // Predicated region
        $region125: #{_lambda_.1} parent=71 // pred_check
          %p1947 = pneg %p332
        $region126: #{_lambda_.1} parent=71 // pred_check_branch
          %1949 = sbr.rel (%p1947) target = $region128
        $region127: #{_lambda_.1} parent=71 // pred_region
          %s1950 = smul.u32 2, %s36
          %s1952 = ssub.s32 256, 256
          %1953 = vsyncadd %s1943, %s1952
          %s1954 = smul.addr %s1950, 128
          %s1955 = scalar_lea.hbm %s13, %s1954
          %s1956 = sshll.u32 %s1946, 4
          %s1957 = int_to_ptr.vmem [resolvable:$true] %s1956
          %1962 = dma.vmem_to_hbm [thread:$0]  %s1957, 256, %s1955, %s1943, 128, 128, 8
        $region128: #{_lambda_.1} parent=71 // pred_fallthru
          _
      $region72: #{_lambda_.1} parent=5 // pred_fallthru
        _
      %p1963 = scmp.le.s32.totalorder 2, %s31
      // Predicated region
      $region129: #{_lambda_.1} parent=5 // pred_check
        %p1964 = pneg %p1963
      $region130: #{_lambda_.1} parent=5 // pred_check_branch
        %1966 = sbr.rel (%p1964) target = $region132
      $region131: #{_lambda_.1} parent=5 // pred_region
        %s1967 = ssub.s32 %s31, 2
        // Predicated region
        $region133: #{_lambda_.1} parent=131 // pred_check
          %p1968 = pneg %p338
        $region134: #{_lambda_.1} parent=131 // pred_check_branch
          %1970 = sbr.rel (%p1968) target = $region136
        $region135: #{_lambda_.1} parent=131 // pred_region
          %s1971 = sand.u32 %s323, 1
          %s1972 = scalar_lea.sflag [#allocation4], %s1971
          %s1973 = sand.u32 %s323, 1
          %s1974 = smul.addr %s1973, 16
          %s1975 = scalar_lea.vmem [#allocation23], %s1974
          %1976 = dma.done %s1972, 256
        $region136: #{_lambda_.1} parent=131 // pred_fallthru
          _
      $region132: #{_lambda_.1} parent=5 // pred_fallthru
        _
    $region6: #{_lambda_.1} parent=1 // loop_footer
      %s35 = sadd.s32 1, %s31
    $region7: #{_lambda_.1} parent=1 // loop_footer_branch
      %30 = sbr.rel target = $region3
    $region8: #{_lambda_.1} parent=1 // loop_exit
      _
    %1977 = vsyncpa [#allocation3], 1
    %s1978 = scalar_lea.sflag [#allocation3], 1
    %1979 = vsyncpa %s1978, 1
    %1980 = vsyncpa [#allocation6], 1
    %1981 = vsyncpa [#allocation9], 1
    %1982 = vsyncpa [#allocation12], 1
    %1983 = vsyncpa [#allocation15], 1
    %1984 = vsyncpa [#allocation18], 1
    %1985 = vsyncpa [#allocation21], 1
    %1986 = vsyncpa [#allocation4], 1
    %s1987 = scalar_lea.sflag [#allocation4], 1
    %1988 = vsyncpa %s1987, 1

</llo_original>
